<compile_context>
chip_gen: v7x
topology: tpu7x:2x2x1
jax: 0.10.0
libtpu: 0.0.40
codegen_flags: <defaults>
</compile_context>

<pallas_src>
import functools

import jax
import jax.numpy as jnp
from jax.experimental import pallas as pl
from jax.experimental.pallas import tpu as pltpu


# ---------------------------------------------------------------------------
# In-kernel helpers
# ---------------------------------------------------------------------------
def _store_padded(pad_ref, interior, ho, wo, c, pad_bottom_right):
    """Write `interior` (ho, wo, c) into a zero-bordered padded VMEM scratch.

    pad_bottom_right=True  -> scratch (ho+2, wo+2, c): 1-px border all around.
    pad_bottom_right=False -> scratch (ho+1, wo+1, c): border only top/left.
    Only thin border strips + the body rows are written (no full-buffer
    zeroing); borders are rewritten every grid step so the kernel is correct
    regardless of how the grid is partitioned across cores.
    """
    dt = interior.dtype
    zcol = jnp.zeros((ho, 1, c), dt)
    if pad_bottom_right:
        zrow = jnp.zeros((1, wo + 2, c), dt)
        pad_ref[0:1, :, :] = zrow
        pad_ref[ho + 1:ho + 2, :, :] = zrow
        pad_ref[1:ho + 1, :, :] = jnp.concatenate([zcol, interior, zcol], axis=1)
    else:
        zrow = jnp.zeros((1, wo + 1, c), dt)
        pad_ref[0:1, :, :] = zrow
        pad_ref[1:ho + 1, :, :] = jnp.concatenate([zcol, interior], axis=1)


def _conv_from_padded(pad_ref, w_ref, ho, wo, c, ktaps):
    """Single im2col matmul: concat the ktaps x ktaps contiguous tap slices of
    the padded bf16 scratch along the channel dim and do ONE MXU dot (the
    accumulation stays in the MXU instead of 9 dots + 8 f32 VPU adds)."""
    n_pix = ho * wo
    cols = []
    for kh in range(ktaps):
        for kw in range(ktaps):
            tap = pad_ref[kh:kh + ho, kw:kw + wo, :]        # (ho, wo, c) bf16
            cols.append(tap.reshape(n_pix, c))
    patch = jnp.concatenate(cols, axis=-1)                  # (n_pix, k*k*c)
    return jnp.dot(patch, w_ref[...], preferred_element_type=jnp.float32)


# ---------------------------------------------------------------------------
# Fused encoder-stage kernel:
#   Conv3x3(stride=2, pad=1) + folded-BN + LeakyReLU
#   -> EncoderResBlock: conv3x3 + folded-BN + ReLU -> conv3x3 + folded-BN
#      + residual -> ReLU
# One grid step == one batch element; intermediates never leave VMEM.
# The stride-2 conv is a 2x2 block conv on the space-to-depth input.
# ---------------------------------------------------------------------------
def _encoder_stage_kernel(x_ref, ws_ref, bs_ref, w1_ref, b1_ref, w2_ref, b2_ref,
                          out_ref, spad_ref, hpad_ref, o1pad_ref,
                          *, ho, wo, cin4, hc):
    n_pix = ho * wo
    bf16 = jnp.bfloat16

    # ---- Conv3x3 stride-2 (as a 2x2 block conv on s2d input) + BN + LeakyReLU
    _store_padded(spad_ref, x_ref[0], ho, wo, cin4, pad_bottom_right=False)
    acc = _conv_from_padded(spad_ref, ws_ref, ho, wo, cin4, ktaps=2)
    pre = acc + bs_ref[...]
    hmap = jnp.where(pre > 0, pre, 0.01 * pre)       # nn.LeakyReLU default slope

    # ---- EncoderResBlock conv1 + folded BN + ReLU ----
    _store_padded(hpad_ref, hmap.astype(bf16).reshape(ho, wo, hc),
                  ho, wo, hc, pad_bottom_right=True)
    acc1 = _conv_from_padded(hpad_ref, w1_ref, ho, wo, hc, ktaps=3)
    o1 = jnp.maximum(acc1 + b1_ref[...], 0.0)

    # ---- EncoderResBlock conv2 + folded BN + residual + ReLU ----
    _store_padded(o1pad_ref, o1.astype(bf16).reshape(ho, wo, hc),
                  ho, wo, hc, pad_bottom_right=True)
    acc2 = _conv_from_padded(o1pad_ref, w2_ref, ho, wo, hc, ktaps=3)
    # residual: re-read hmap from scratch instead of keeping it live in vregs
    res = hpad_ref[1:ho + 1, 1:wo + 1, :].reshape(n_pix, hc).astype(jnp.float32)
    out = jnp.maximum(acc2 + b2_ref[...] + res, 0.0)
    out_ref[0] = out.astype(out_ref.dtype)


def _space_to_depth(x):
    """(B, H, W, C) -> (B, H//2, W//2, 4C) with channel order (bh, bw, c)."""
    b, h, w, c = x.shape
    x = x.reshape(b, h // 2, 2, w // 2, 2, c)
    x = jnp.transpose(x, (0, 1, 3, 2, 4, 5))
    return x.reshape(b, h // 2, w // 2, 4 * c)


def _stage_vmem_limit(ho, wo, cin4, hc):
    n_pix = ho * wo
    blk_in = n_pix * cin4 * 2
    blk_out = n_pix * hc * 2
    weights = (4 * cin4 * hc + 18 * hc * hc) * 2 + 3 * hc * 4
    scratch = ((ho + 1) * (wo + 1) * cin4 + 2 * (ho + 2) * (wo + 2) * hc) * 2
    patch = n_pix * max(4 * cin4, 9 * hc) * 2
    est = 4 * (blk_in + blk_out) + weights + scratch + 8 * patch + (4 << 20)
    # explicit budget (v7x has 64 MiB physical); never below the 32 MiB default.
    return int(min(max(2 * est, 32 << 20), 128 << 20))


def encoder_stage(x_nhwc, ws2d, bconv, w1r, b1, w2r, b2):
    B, H, W, cin = x_nhwc.shape
    assert H % 2 == 0 and W % 2 == 0
    ho, wo = H // 2, W // 2
    cin4 = 4 * cin
    hc = ws2d.shape[-1]
    n_pix = ho * wo

    # single space-to-depth op per stage (replaces pad + 4 parity temporaries)
    xs = _space_to_depth(x_nhwc.astype(jnp.bfloat16))       # (B, ho, wo, 4cin)

    rep2 = lambda shape: pl.BlockSpec(shape, lambda n: (0, 0))

    out = pl.pallas_call(
        functools.partial(_encoder_stage_kernel, ho=ho, wo=wo, cin4=cin4, hc=hc),
        out_shape=jax.ShapeDtypeStruct((B, n_pix, hc), jnp.bfloat16),
        grid=(B,),
        in_specs=[pl.BlockSpec((1, ho, wo, cin4), lambda n: (n, 0, 0, 0)),
                  rep2(ws2d.shape), rep2(bconv.shape),
                  rep2(w1r.shape), rep2(b1.shape),
                  rep2(w2r.shape), rep2(b2.shape)],
        out_specs=pl.BlockSpec((1, n_pix, hc), lambda n: (n, 0, 0)),
        scratch_shapes=[pltpu.VMEM((ho + 1, wo + 1, cin4), jnp.bfloat16),
                        pltpu.VMEM((ho + 2, wo + 2, hc), jnp.bfloat16),
                        pltpu.VMEM((ho + 2, wo + 2, hc), jnp.bfloat16)],
        compiler_params=pltpu.CompilerParams(
            dimension_semantics=("parallel",),
            vmem_limit_bytes=_stage_vmem_limit(ho, wo, cin4, hc)),
    )(xs, ws2d, bconv, w1r, b1, w2r, b2)
    return out.reshape(B, ho, wo, hc)


# ---------------------------------------------------------------------------
# Fused fc_mu + fc_var + reparameterize kernel (single matmul, packed store)
# ---------------------------------------------------------------------------
def _fc_reparam_kernel(x_ref, w_ref, b_ref, eps_ref, out_ref, *, latent):
    x = x_ref[...].astype(jnp.bfloat16)
    res = jnp.dot(x, w_ref[...], preferred_element_type=jnp.float32) + b_ref[...]
    mu = res[:, :latent]
    logvar = res[:, latent:2 * latent]
    std = jnp.exp(0.5 * logvar)
    z = eps_ref[...] * std + mu
    out_ref[...] = jnp.concatenate([mu, logvar, z], axis=-1).astype(out_ref.dtype)


def _pick_row_tile(m):
    for t in (512, 256, 128, 64, 32, 16, 8):
        if m % t == 0:
            return t
    return m


def fc_mu_var_reparam(flat, w_cat, b_cat, eps, latent):
    m, c = flat.shape
    tm = _pick_row_tile(m)
    row = lambda i: (i, 0)
    rep = lambda i: (0, 0)
    packed = pl.pallas_call(
        functools.partial(_fc_reparam_kernel, latent=latent),
        out_shape=jax.ShapeDtypeStruct((m, 3 * latent), jnp.float32),
        grid=(m // tm,),
        in_specs=[pl.BlockSpec((tm, c), row),
                  pl.BlockSpec(w_cat.shape, rep),
                  pl.BlockSpec(b_cat.shape, rep),
                  pl.BlockSpec((tm, latent), row)],
        out_specs=pl.BlockSpec((tm, 3 * latent), row),
        compiler_params=pltpu.CompilerParams(
            dimension_semantics=("parallel",)),
    )(flat, w_cat, b_cat, eps)
    mu = packed[:, :latent]
    log_var = packed[:, latent:2 * latent]
    z = packed[:, 2 * latent:]
    return mu, log_var, z


# ---------------------------------------------------------------------------
# Host-side parameter helpers
# ---------------------------------------------------------------------------
def _fold_bn_into_conv(w, b, gamma, beta, mean, var, eps=1e-5):
    """Fold eval-mode BatchNorm into conv weight (..., cout) and bias (cout,)."""
    scale = gamma / jnp.sqrt(var + eps)
    w_f = w * scale
    if b is None:
        b = jnp.zeros_like(mean)
    b_f = (b - mean) * scale + beta
    return w_f, b_f.astype(jnp.float32)


def _bn_defaults(c):
    # gamma=1, beta=0, running_mean=0, running_var=1 (PyTorch defaults)
    return (jnp.ones((c,), jnp.float32), jnp.zeros((c,), jnp.float32),
            jnp.zeros((c,), jnp.float32), jnp.ones((c,), jnp.float32))


def _make_s2d_weight(w):
    """Re-index a (3,3,cin,cout) stride-2 conv weight into the (16*cin, cout)
    matrix used by the in-kernel 2x2 block conv on the space-to-depth input.
    Row order: (block-tap dh, dw) major, then within-block (bh, bw), then cin."""
    _, _, cin, cout = w.shape
    ws = jnp.zeros((2, 2, 2, 2, cin, cout), w.dtype)   # (dh, dw, bh, bw, ci, co)
    kmap = {(0, 1): 0, (1, 0): 1, (1, 1): 2}           # (block-tap, within) -> k
    for (dh, bh), kh in kmap.items():
        for (dw, bw), kw in kmap.items():
            ws = ws.at[dh, dw, bh, bw].set(w[kh, kw])
    return ws.reshape(16 * cin, cout)


# ---------------------------------------------------------------------------
# Encoder module (parameters initialized deterministically in-script)
# ---------------------------------------------------------------------------
class EncoderPallas:
    def __init__(self, num_classes, latent_dim, hidden_dims,
                 spec_time=64, spec_bins=64, in_channels=1, key=None):
        self.num_classes = num_classes
        self.latent_dim = latent_dim
        self.hidden_dims = list(hidden_dims)
        self.spec_time = spec_time
        self.spec_bins = spec_bins
        self.in_channels = in_channels

        key = jax.random.PRNGKey(0) if key is None else key
        keys = iter(jax.random.split(key, 128))

        def winit(shape, s=0.1):
            return s * jax.random.normal(next(keys), shape, jnp.float32)

        p = {}
        # nn.Linear(num_classes, spec_bins*spec_time)  -> stored (in, out)
        p["embed_class_w"] = winit((num_classes, spec_time * spec_bins))
        p["embed_class_b"] = winit((spec_time * spec_bins,), 0.01)
        # nn.Conv2d(in_ch, in_ch, kernel_size=1)  -> per-pixel linear (Cin, Cout)
        p["embed_data_w"] = winit((in_channels, in_channels))
        p["embed_data_b"] = winit((in_channels,), 0.01)

        stages = []
        cin = in_channels + 1
        for h in self.hidden_dims:
            cw, cb = _fold_bn_into_conv(winit((3, 3, cin, h)),
                                        winit((h,), 0.01), *_bn_defaults(h))
            w1, b1 = _fold_bn_into_conv(winit((3, 3, h, h)), None,
                                        *_bn_defaults(h))
            w2, b2 = _fold_bn_into_conv(winit((3, 3, h, h)), None,
                                        *_bn_defaults(h))
            stages.append(dict(
                conv_w=_make_s2d_weight(cw).astype(jnp.bfloat16),
                conv_b=cb.reshape(1, h),
                res_w1=w1.reshape(9 * h, h).astype(jnp.bfloat16),
                res_b1=b1.reshape(1, h),
                res_w2=w2.reshape(9 * h, h).astype(jnp.bfloat16),
                res_b2=b2.reshape(1, h)))
            cin = h
        p["stages"] = stages

        C = self.hidden_dims[-1]
        w_mu = winit((C, latent_dim))
        w_var = winit((C, latent_dim))
        b_mu = winit((1, latent_dim), 0.01)
        b_var = winit((1, latent_dim), 0.01)
        # fc_mu | fc_var fused into one matmul (concat along output dim)
        p["fc_w"] = jnp.concatenate([w_mu, w_var], axis=1).astype(jnp.bfloat16)
        p["fc_b"] = jnp.concatenate([b_mu, b_var], axis=1)
        self.params = p

    def __call__(self, batch_nchw, y, eps_key):
        p = self.params
        B = batch_nchw.shape[0]
        T, Fb = self.spec_time, self.spec_bins
        y = y.astype(jnp.int32)

        # --- one-hot (returned) + embed_class as a row gather (== one_hot @ W) ---
        y_oh = jax.nn.one_hot(y, self.num_classes, dtype=jnp.float32)
        ec = jnp.take(p["embed_class_w"], y, axis=0) + p["embed_class_b"]
        ec_nhwc = ec.reshape(B, T, Fb, 1)            # view(-1,T,F).unsqueeze(1)

        # --- embed_data: 1x1 conv == per-pixel channel mixing (tiny, plain XLA) ---
        x_nhwc = jnp.transpose(batch_nchw, (0, 2, 3, 1)).astype(jnp.float32)
        ed_nhwc = jnp.einsum("bhwc,cd->bhwd", x_nhwc,
                             p["embed_data_w"]) + p["embed_data_b"]

        # --- cat([embedded_input, embedded_class], dim=channel) ---
        x = jnp.concatenate([ed_nhwc, ec_nhwc], axis=-1)

        # --- fused encoder stages (one Pallas call per stage, bf16 activations) ---
        for st in p["stages"]:
            x = encoder_stage(x, st["conv_w"], st["conv_b"],
                              st["res_w1"], st["res_b1"],
                              st["res_w2"], st["res_b2"])

        # --- encode(): PyTorch reshape semantics on contiguous NCHW memory ---
        result = jnp.transpose(x, (0, 3, 1, 2))       # (B, C, h, w) NCHW
        bs, C, hh, ww = result.shape
        flat = result.reshape(-1, C)                  # result.reshape(-1, hidden_dims[-1])

        # --- fc_mu + fc_var + reparameterize (single fused Pallas call) ---
        eps = jax.random.normal(eps_key, (flat.shape[0], self.latent_dim),
                                jnp.float32)
        mu, log_var, z = fc_mu_var_reparam(flat, p["fc_w"], p["fc_b"], eps,
                                           self.latent_dim)
        mu = mu.reshape(bs, self.latent_dim, hh, ww)
        log_var = log_var.reshape(bs, self.latent_dim, hh, ww)
        z = z.reshape(bs, self.latent_dim, hh, ww)
        return [z, y_oh, mu, log_var]


# ----------------------------------------------------------------------------
if __name__ == "__main__":
    key = jax.random.PRNGKey(0)
    k_param, k_data, k_eps = jax.random.split(key, 3)

    B = 2
    num_classes = 4
    latent_dim = 8
    hidden_dims = [8, 16]
    spec_time = spec_bins = 16
    in_channels = 1

    enc = EncoderPallas(num_classes, latent_dim, hidden_dims,
                        spec_time=spec_time, spec_bins=spec_bins,
                        in_channels=in_channels, key=k_param)

    batch = jax.random.normal(k_data, (B, in_channels, spec_time, spec_bins),
                              jnp.float32)
    y = jnp.array([1, 3], dtype=jnp.int32)

    fwd = jax.jit(enc)
    z, y_oh, mu, log_var = fwd(batch, y, k_eps)
    jax.block_until_ready((z, y_oh, mu, log_var))

    h_out = spec_time // (2 ** len(hidden_dims))
    w_out = spec_bins // (2 ** len(hidden_dims))
    assert z.shape == (B, latent_dim, h_out, w_out)
    assert mu.shape == (B, latent_dim, h_out, w_out)
    assert log_var.shape == (B, latent_dim, h_out, w_out)
    assert y_oh.shape == (B, num_classes)
    print("KERNEL_OK")
</pallas_src>

<mosaic_0001>
module attributes {stable_mosaic.version = 11 : i64} {
  func.func @_encoder_stage_kernel(%arg0: i32, %arg1: memref<1x8x8x8xbf16, #tpu.memory_space<vmem>>, %arg2: memref<32x8xbf16, #tpu.memory_space<vmem>>, %arg3: memref<1x8xf32, #tpu.memory_space<vmem>>, %arg4: memref<72x8xbf16, #tpu.memory_space<vmem>>, %arg5: memref<1x8xf32, #tpu.memory_space<vmem>>, %arg6: memref<72x8xbf16, #tpu.memory_space<vmem>>, %arg7: memref<1x8xf32, #tpu.memory_space<vmem>>, %arg8: memref<1x64x8xbf16, #tpu.memory_space<vmem>>, %arg9: memref<9x9x8xbf16, #tpu.memory_space<vmem>>, %arg10: memref<10x10x8xbf16, #tpu.memory_space<vmem>>, %arg11: memref<10x10x8xbf16, #tpu.memory_space<vmem>>) attributes {dimension_semantics = [#tpu.dimension_semantics<parallel>], iteration_bounds = array<i64: 2>, scalar_prefetch = 0 : i64, scratch_operands = 3 : i64, tpu.core_type = #tpu.core_type<tc>, window_params = [{transform_indices = @transform_0, window_bounds = array<i64: 1, 8, 8, 8>}, {pipeline_mode = #tpu.pipeline_mode<synchronous>, transform_indices = @transform_1, window_bounds = array<i64: 32, 8>}, {pipeline_mode = #tpu.pipeline_mode<synchronous>, transform_indices = @transform_2, window_bounds = array<i64: 1, 8>}, {pipeline_mode = #tpu.pipeline_mode<synchronous>, transform_indices = @transform_3, window_bounds = array<i64: 72, 8>}, {pipeline_mode = #tpu.pipeline_mode<synchronous>, transform_indices = @transform_4, window_bounds = array<i64: 1, 8>}, {pipeline_mode = #tpu.pipeline_mode<synchronous>, transform_indices = @transform_5, window_bounds = array<i64: 72, 8>}, {pipeline_mode = #tpu.pipeline_mode<synchronous>, transform_indices = @transform_6, window_bounds = array<i64: 1, 8>}, {transform_indices = @transform_7, window_bounds = array<i64: 1, 64, 8>}]} {
    %c0 = arith.constant 0 : index
    %c0_0 = arith.constant 0 : index
    %c0_1 = arith.constant 0 : index
    %c0_2 = arith.constant 0 : index
    %0 = vector.load %arg1[%c0, %c0_0, %c0_1, %c0_2] : memref<1x8x8x8xbf16, #tpu.memory_space<vmem>>, vector<1x8x8x8xbf16>
    %1 = vector.shape_cast %0 : vector<1x8x8x8xbf16> to vector<8x8x8xbf16>
    %cst = arith.constant 0.000000e+00 : bf16
    %2 = vector.broadcast %cst : bf16 to vector<8x1x8xbf16>
    %cst_3 = arith.constant 0.000000e+00 : bf16
    %3 = vector.broadcast %cst_3 : bf16 to vector<1x9x8xbf16>
    %c0_4 = arith.constant 0 : index
    %c0_5 = arith.constant 0 : index
    %c0_6 = arith.constant 0 : index
    %4 = vector.load %arg9[%c0_4, %c0_5, %c0_6] : memref<9x9x8xbf16, #tpu.memory_space<vmem>>, vector<1x9x8xbf16>
    tpu.vector_store %arg9[%c0_4, %c0_5, %c0_6], %3 {strides = array<i32>} : memref<9x9x8xbf16, #tpu.memory_space<vmem>>, vector<1x9x8xbf16>,
    %5 = tpu.concatenate %2, %1 in 1 : vector<8x1x8xbf16>, vector<8x8x8xbf16> -> vector<8x9x8xbf16>
    %c1 = arith.constant 1 : index
    %c0_7 = arith.constant 0 : index
    %c0_8 = arith.constant 0 : index
    %6 = vector.load %arg9[%c1, %c0_7, %c0_8] : memref<9x9x8xbf16, #tpu.memory_space<vmem>>, vector<8x9x8xbf16>
    tpu.vector_store %arg9[%c1, %c0_7, %c0_8], %5 {strides = array<i32>} : memref<9x9x8xbf16, #tpu.memory_space<vmem>>, vector<8x9x8xbf16>,
    %c0_9 = arith.constant 0 : index
    %c0_10 = arith.constant 0 : index
    %c0_11 = arith.constant 0 : index
    %7 = vector.load %arg9[%c0_9, %c0_10, %c0_11] : memref<9x9x8xbf16, #tpu.memory_space<vmem>>, vector<8x8x8xbf16>
    %8 = vector.shape_cast %7 : vector<8x8x8xbf16> to vector<64x8xbf16>
    %c0_12 = arith.constant 0 : index
    %c1_13 = arith.constant 1 : index
    %c0_14 = arith.constant 0 : index
    %9 = vector.load %arg9[%c0_12, %c1_13, %c0_14] : memref<9x9x8xbf16, #tpu.memory_space<vmem>>, vector<8x8x8xbf16>
    %10 = vector.shape_cast %9 : vector<8x8x8xbf16> to vector<64x8xbf16>
    %c1_15 = arith.constant 1 : index
    %c0_16 = arith.constant 0 : index
    %c0_17 = arith.constant 0 : index
    %11 = vector.load %arg9[%c1_15, %c0_16, %c0_17] : memref<9x9x8xbf16, #tpu.memory_space<vmem>>, vector<8x8x8xbf16>
    %12 = vector.shape_cast %11 : vector<8x8x8xbf16> to vector<64x8xbf16>
    %c1_18 = arith.constant 1 : index
    %c1_19 = arith.constant 1 : index
    %c0_20 = arith.constant 0 : index
    %13 = vector.load %arg9[%c1_18, %c1_19, %c0_20] : memref<9x9x8xbf16, #tpu.memory_space<vmem>>, vector<8x8x8xbf16>
    %14 = vector.shape_cast %13 : vector<8x8x8xbf16> to vector<64x8xbf16>
    %15 = tpu.concatenate %8, %10, %12, %14 in 1 : vector<64x8xbf16>, vector<64x8xbf16>, vector<64x8xbf16>, vector<64x8xbf16> -> vector<64x32xbf16>
    %c0_21 = arith.constant 0 : index
    %c0_22 = arith.constant 0 : index
    %16 = vector.load %arg2[%c0_21, %c0_22] : memref<32x8xbf16, #tpu.memory_space<vmem>>, vector<32x8xbf16>
    %cst_23 = arith.constant dense<0.000000e+00> : vector<64x8xf32>
    %17 = tpu.matmul %15, %16, %cst_23 {dimension_numbers = #tpu.dot_dimension_numbers<[1], [0], [0], [1], [0, 0, 1, 1], [], []>} : vector<64x32xbf16>, vector<32x8xbf16>, vector<64x8xf32> -> vector<64x8xf32>
    %c0_24 = arith.constant 0 : index
    %c0_25 = arith.constant 0 : index
    %18 = vector.load %arg3[%c0_24, %c0_25] : memref<1x8xf32, #tpu.memory_space<vmem>>, vector<1x8xf32>
    %19 = vector.broadcast %18 : vector<1x8xf32> to vector<64x8xf32>
    %20 = arith.addf %17, %19 : vector<64x8xf32>
    %cst_26 = arith.constant 0.000000e+00 : f32
    %21 = vector.broadcast %cst_26 : f32 to vector<64x8xf32>
    %22 = arith.cmpf ogt, %20, %21 : vector<64x8xf32>
    %cst_27 = arith.constant 0.00999999977 : f32
    %23 = vector.broadcast %cst_27 : f32 to vector<64x8xf32>
    %24 = arith.mulf %23, %20 : vector<64x8xf32>
    %25 = arith.select %22, %20, %24 : vector<64x8xi1>, vector<64x8xf32>
    %26 = arith.truncf %25 : vector<64x8xf32> to vector<64x8xbf16>
    %27 = vector.shape_cast %26 : vector<64x8xbf16> to vector<8x8x8xbf16>
    %cst_28 = arith.constant 0.000000e+00 : bf16
    %28 = vector.broadcast %cst_28 : bf16 to vector<8x1x8xbf16>
    %cst_29 = arith.constant 0.000000e+00 : bf16
    %29 = vector.broadcast %cst_29 : bf16 to vector<1x10x8xbf16>
    %c0_30 = arith.constant 0 : index
    %c0_31 = arith.constant 0 : index
    %c0_32 = arith.constant 0 : index
    %30 = vector.load %arg10[%c0_30, %c0_31, %c0_32] : memref<10x10x8xbf16, #tpu.memory_space<vmem>>, vector<1x10x8xbf16>
    tpu.vector_store %arg10[%c0_30, %c0_31, %c0_32], %29 {strides = array<i32>} : memref<10x10x8xbf16, #tpu.memory_space<vmem>>, vector<1x10x8xbf16>,
    %c9 = arith.constant 9 : index
    %c0_33 = arith.constant 0 : index
    %c0_34 = arith.constant 0 : index
    %31 = vector.load %arg10[%c9, %c0_33, %c0_34] : memref<10x10x8xbf16, #tpu.memory_space<vmem>>, vector<1x10x8xbf16>
    tpu.vector_store %arg10[%c9, %c0_33, %c0_34], %29 {strides = array<i32>} : memref<10x10x8xbf16, #tpu.memory_space<vmem>>, vector<1x10x8xbf16>,
    %32 = tpu.concatenate %28, %27, %28 in 1 : vector<8x1x8xbf16>, vector<8x8x8xbf16>, vector<8x1x8xbf16> -> vector<8x10x8xbf16>
    %c1_35 = arith.constant 1 : index
    %c0_36 = arith.constant 0 : index
    %c0_37 = arith.constant 0 : index
    %33 = vector.load %arg10[%c1_35, %c0_36, %c0_37] : memref<10x10x8xbf16, #tpu.memory_space<vmem>>, vector<8x10x8xbf16>
    tpu.vector_store %arg10[%c1_35, %c0_36, %c0_37], %32 {strides = array<i32>} : memref<10x10x8xbf16, #tpu.memory_space<vmem>>, vector<8x10x8xbf16>,
    %c0_38 = arith.constant 0 : index
    %c0_39 = arith.constant 0 : index
    %c0_40 = arith.constant 0 : index
    %34 = vector.load %arg10[%c0_38, %c0_39, %c0_40] : memref<10x10x8xbf16, #tpu.memory_space<vmem>>, vector<8x8x8xbf16>
    %35 = vector.shape_cast %34 : vector<8x8x8xbf16> to vector<64x8xbf16>
    %c0_41 = arith.constant 0 : index
    %c1_42 = arith.constant 1 : index
    %c0_43 = arith.constant 0 : index
    %36 = vector.load %arg10[%c0_41, %c1_42, %c0_43] : memref<10x10x8xbf16, #tpu.memory_space<vmem>>, vector<8x8x8xbf16>
    %37 = vector.shape_cast %36 : vector<8x8x8xbf16> to vector<64x8xbf16>
    %c0_44 = arith.constant 0 : index
    %c2 = arith.constant 2 : index
    %c0_45 = arith.constant 0 : index
    %38 = vector.load %arg10[%c0_44, %c2, %c0_45] : memref<10x10x8xbf16, #tpu.memory_space<vmem>>, vector<8x8x8xbf16>
    %39 = vector.shape_cast %38 : vector<8x8x8xbf16> to vector<64x8xbf16>
    %c1_46 = arith.constant 1 : index
    %c0_47 = arith.constant 0 : index
    %c0_48 = arith.constant 0 : index
    %40 = vector.load %arg10[%c1_46, %c0_47, %c0_48] : memref<10x10x8xbf16, #tpu.memory_space<vmem>>, vector<8x8x8xbf16>
    %41 = vector.shape_cast %40 : vector<8x8x8xbf16> to vector<64x8xbf16>
    %c1_49 = arith.constant 1 : index
    %c1_50 = arith.constant 1 : index
    %c0_51 = arith.constant 0 : index
    %42 = vector.load %arg10[%c1_49, %c1_50, %c0_51] : memref<10x10x8xbf16, #tpu.memory_space<vmem>>, vector<8x8x8xbf16>
    %43 = vector.shape_cast %42 : vector<8x8x8xbf16> to vector<64x8xbf16>
    %c1_52 = arith.constant 1 : index
    %c2_53 = arith.constant 2 : index
    %c0_54 = arith.constant 0 : index
    %44 = vector.load %arg10[%c1_52, %c2_53, %c0_54] : memref<10x10x8xbf16, #tpu.memory_space<vmem>>, vector<8x8x8xbf16>
    %45 = vector.shape_cast %44 : vector<8x8x8xbf16> to vector<64x8xbf16>
    %c2_55 = arith.constant 2 : index
    %c0_56 = arith.constant 0 : index
    %c0_57 = arith.constant 0 : index
    %46 = vector.load %arg10[%c2_55, %c0_56, %c0_57] : memref<10x10x8xbf16, #tpu.memory_space<vmem>>, vector<8x8x8xbf16>
    %47 = vector.shape_cast %46 : vector<8x8x8xbf16> to vector<64x8xbf16>
    %c2_58 = arith.constant 2 : index
    %c1_59 = arith.constant 1 : index
    %c0_60 = arith.constant 0 : index
    %48 = vector.load %arg10[%c2_58, %c1_59, %c0_60] : memref<10x10x8xbf16, #tpu.memory_space<vmem>>, vector<8x8x8xbf16>
    %49 = vector.shape_cast %48 : vector<8x8x8xbf16> to vector<64x8xbf16>
    %c2_61 = arith.constant 2 : index
    %c2_62 = arith.constant 2 : index
    %c0_63 = arith.constant 0 : index
    %50 = vector.load %arg10[%c2_61, %c2_62, %c0_63] : memref<10x10x8xbf16, #tpu.memory_space<vmem>>, vector<8x8x8xbf16>
    %51 = vector.shape_cast %50 : vector<8x8x8xbf16> to vector<64x8xbf16>
    %52 = tpu.concatenate %35, %37, %39, %41, %43, %45, %47, %49, %51 in 1 : vector<64x8xbf16>, vector<64x8xbf16>, vector<64x8xbf16>, vector<64x8xbf16>, vector<64x8xbf16>, vector<64x8xbf16>, vector<64x8xbf16>, vector<64x8xbf16>, vector<64x8xbf16> -> vector<64x72xbf16>
    %c0_64 = arith.constant 0 : index
    %c0_65 = arith.constant 0 : index
    %53 = vector.load %arg4[%c0_64, %c0_65] : memref<72x8xbf16, #tpu.memory_space<vmem>>, vector<72x8xbf16>
    %cst_66 = arith.constant dense<0.000000e+00> : vector<64x8xf32>
    %54 = tpu.matmul %52, %53, %cst_66 {dimension_numbers = #tpu.dot_dimension_numbers<[1], [0], [0], [1], [0, 0, 1, 1], [], []>} : vector<64x72xbf16>, vector<72x8xbf16>, vector<64x8xf32> -> vector<64x8xf32>
    %c0_67 = arith.constant 0 : index
    %c0_68 = arith.constant 0 : index
    %55 = vector.load %arg5[%c0_67, %c0_68] : memref<1x8xf32, #tpu.memory_space<vmem>>, vector<1x8xf32>
    %56 = vector.broadcast %55 : vector<1x8xf32> to vector<64x8xf32>
    %57 = arith.addf %54, %56 : vector<64x8xf32>
    %cst_69 = arith.constant 0.000000e+00 : f32
    %58 = vector.broadcast %cst_69 : f32 to vector<64x8xf32>
    %59 = arith.maximumf %57, %58 : vector<64x8xf32>
    %60 = arith.truncf %59 : vector<64x8xf32> to vector<64x8xbf16>
    %61 = vector.shape_cast %60 : vector<64x8xbf16> to vector<8x8x8xbf16>
    %cst_70 = arith.constant 0.000000e+00 : bf16
    %62 = vector.broadcast %cst_70 : bf16 to vector<8x1x8xbf16>
    %cst_71 = arith.constant 0.000000e+00 : bf16
    %63 = vector.broadcast %cst_71 : bf16 to vector<1x10x8xbf16>
    %c0_72 = arith.constant 0 : index
    %c0_73 = arith.constant 0 : index
    %c0_74 = arith.constant 0 : index
    %64 = vector.load %arg11[%c0_72, %c0_73, %c0_74] : memref<10x10x8xbf16, #tpu.memory_space<vmem>>, vector<1x10x8xbf16>
    tpu.vector_store %arg11[%c0_72, %c0_73, %c0_74], %63 {strides = array<i32>} : memref<10x10x8xbf16, #tpu.memory_space<vmem>>, vector<1x10x8xbf16>,
    %c9_75 = arith.constant 9 : index
    %c0_76 = arith.constant 0 : index
    %c0_77 = arith.constant 0 : index
    %65 = vector.load %arg11[%c9_75, %c0_76, %c0_77] : memref<10x10x8xbf16, #tpu.memory_space<vmem>>, vector<1x10x8xbf16>
    tpu.vector_store %arg11[%c9_75, %c0_76, %c0_77], %63 {strides = array<i32>} : memref<10x10x8xbf16, #tpu.memory_space<vmem>>, vector<1x10x8xbf16>,
    %66 = tpu.concatenate %62, %61, %62 in 1 : vector<8x1x8xbf16>, vector<8x8x8xbf16>, vector<8x1x8xbf16> -> vector<8x10x8xbf16>
    %c1_78 = arith.constant 1 : index
    %c0_79 = arith.constant 0 : index
    %c0_80 = arith.constant 0 : index
    %67 = vector.load %arg11[%c1_78, %c0_79, %c0_80] : memref<10x10x8xbf16, #tpu.memory_space<vmem>>, vector<8x10x8xbf16>
    tpu.vector_store %arg11[%c1_78, %c0_79, %c0_80], %66 {strides = array<i32>} : memref<10x10x8xbf16, #tpu.memory_space<vmem>>, vector<8x10x8xbf16>,
    %c0_81 = arith.constant 0 : index
    %c0_82 = arith.constant 0 : index
    %c0_83 = arith.constant 0 : index
    %68 = vector.load %arg11[%c0_81, %c0_82, %c0_83] : memref<10x10x8xbf16, #tpu.memory_space<vmem>>, vector<8x8x8xbf16>
    %69 = vector.shape_cast %68 : vector<8x8x8xbf16> to vector<64x8xbf16>
    %c0_84 = arith.constant 0 : index
    %c1_85 = arith.constant 1 : index
    %c0_86 = arith.constant 0 : index
    %70 = vector.load %arg11[%c0_84, %c1_85, %c0_86] : memref<10x10x8xbf16, #tpu.memory_space<vmem>>, vector<8x8x8xbf16>
    %71 = vector.shape_cast %70 : vector<8x8x8xbf16> to vector<64x8xbf16>
    %c0_87 = arith.constant 0 : index
    %c2_88 = arith.constant 2 : index
    %c0_89 = arith.constant 0 : index
    %72 = vector.load %arg11[%c0_87, %c2_88, %c0_89] : memref<10x10x8xbf16, #tpu.memory_space<vmem>>, vector<8x8x8xbf16>
    %73 = vector.shape_cast %72 : vector<8x8x8xbf16> to vector<64x8xbf16>
    %c1_90 = arith.constant 1 : index
    %c0_91 = arith.constant 0 : index
    %c0_92 = arith.constant 0 : index
    %74 = vector.load %arg11[%c1_90, %c0_91, %c0_92] : memref<10x10x8xbf16, #tpu.memory_space<vmem>>, vector<8x8x8xbf16>
    %75 = vector.shape_cast %74 : vector<8x8x8xbf16> to vector<64x8xbf16>
    %c1_93 = arith.constant 1 : index
    %c1_94 = arith.constant 1 : index
    %c0_95 = arith.constant 0 : index
    %76 = vector.load %arg11[%c1_93, %c1_94, %c0_95] : memref<10x10x8xbf16, #tpu.memory_space<vmem>>, vector<8x8x8xbf16>
    %77 = vector.shape_cast %76 : vector<8x8x8xbf16> to vector<64x8xbf16>
    %c1_96 = arith.constant 1 : index
    %c2_97 = arith.constant 2 : index
    %c0_98 = arith.constant 0 : index
    %78 = vector.load %arg11[%c1_96, %c2_97, %c0_98] : memref<10x10x8xbf16, #tpu.memory_space<vmem>>, vector<8x8x8xbf16>
    %79 = vector.shape_cast %78 : vector<8x8x8xbf16> to vector<64x8xbf16>
    %c2_99 = arith.constant 2 : index
    %c0_100 = arith.constant 0 : index
    %c0_101 = arith.constant 0 : index
    %80 = vector.load %arg11[%c2_99, %c0_100, %c0_101] : memref<10x10x8xbf16, #tpu.memory_space<vmem>>, vector<8x8x8xbf16>
    %81 = vector.shape_cast %80 : vector<8x8x8xbf16> to vector<64x8xbf16>
    %c2_102 = arith.constant 2 : index
    %c1_103 = arith.constant 1 : index
    %c0_104 = arith.constant 0 : index
    %82 = vector.load %arg11[%c2_102, %c1_103, %c0_104] : memref<10x10x8xbf16, #tpu.memory_space<vmem>>, vector<8x8x8xbf16>
    %83 = vector.shape_cast %82 : vector<8x8x8xbf16> to vector<64x8xbf16>
    %c2_105 = arith.constant 2 : index
    %c2_106 = arith.constant 2 : index
    %c0_107 = arith.constant 0 : index
    %84 = vector.load %arg11[%c2_105, %c2_106, %c0_107] : memref<10x10x8xbf16, #tpu.memory_space<vmem>>, vector<8x8x8xbf16>
    %85 = vector.shape_cast %84 : vector<8x8x8xbf16> to vector<64x8xbf16>
    %86 = tpu.concatenate %69, %71, %73, %75, %77, %79, %81, %83, %85 in 1 : vector<64x8xbf16>, vector<64x8xbf16>, vector<64x8xbf16>, vector<64x8xbf16>, vector<64x8xbf16>, vector<64x8xbf16>, vector<64x8xbf16>, vector<64x8xbf16>, vector<64x8xbf16> -> vector<64x72xbf16>
    %c0_108 = arith.constant 0 : index
    %c0_109 = arith.constant 0 : index
    %87 = vector.load %arg6[%c0_108, %c0_109] : memref<72x8xbf16, #tpu.memory_space<vmem>>, vector<72x8xbf16>
    %cst_110 = arith.constant dense<0.000000e+00> : vector<64x8xf32>
    %88 = tpu.matmul %86, %87, %cst_110 {dimension_numbers = #tpu.dot_dimension_numbers<[1], [0], [0], [1], [0, 0, 1, 1], [], []>} : vector<64x72xbf16>, vector<72x8xbf16>, vector<64x8xf32> -> vector<64x8xf32>
    %c1_111 = arith.constant 1 : index
    %c1_112 = arith.constant 1 : index
    %c0_113 = arith.constant 0 : index
    %89 = vector.load %arg10[%c1_111, %c1_112, %c0_113] : memref<10x10x8xbf16, #tpu.memory_space<vmem>>, vector<8x8x8xbf16>
    %90 = vector.shape_cast %89 : vector<8x8x8xbf16> to vector<64x8xbf16>
    %91 = arith.extf %90 : vector<64x8xbf16> to vector<64x8xf32>
    %c0_114 = arith.constant 0 : index
    %c0_115 = arith.constant 0 : index
    %92 = vector.load %arg7[%c0_114, %c0_115] : memref<1x8xf32, #tpu.memory_space<vmem>>, vector<1x8xf32>
    %93 = vector.broadcast %92 : vector<1x8xf32> to vector<64x8xf32>
    %94 = arith.addf %88, %93 : vector<64x8xf32>
    %95 = arith.addf %94, %91 : vector<64x8xf32>
    %cst_116 = arith.constant 0.000000e+00 : f32
    %96 = vector.broadcast %cst_116 : f32 to vector<64x8xf32>
    %97 = arith.maximumf %95, %96 : vector<64x8xf32>
    %98 = arith.truncf %97 : vector<64x8xf32> to vector<64x8xbf16>
    %c0_117 = arith.constant 0 : index
    %c0_118 = arith.constant 0 : index
    %c0_119 = arith.constant 0 : index
    %99 = vector.load %arg8[%c0_117, %c0_118, %c0_119] : memref<1x64x8xbf16, #tpu.memory_space<vmem>>, vector<1x64x8xbf16>
    %100 = vector.shape_cast %99 : vector<1x64x8xbf16> to vector<64x8xbf16>
    %101 = vector.shape_cast %98 : vector<64x8xbf16> to vector<1x64x8xbf16>
    tpu.vector_store %arg8[%c0_117, %c0_118, %c0_119], %101 {strides = array<i32>} : memref<1x64x8xbf16, #tpu.memory_space<vmem>>, vector<1x64x8xbf16>,
    return
  }
  func.func @transform_0(%arg0: i32) -> (i32, i32, i32, i32) {
    %c0_i32 = arith.constant 0 : i32
    %c0_i32_0 = arith.constant 0 : i32
    %c0_i32_1 = arith.constant 0 : i32
    %c0_i32_2 = arith.constant 0 : i32
    return %arg0, %c0_i32, %c0_i32_0, %c0_i32_1 : i32, i32, i32, i32
  }
  func.func @transform_1(%arg0: i32) -> (i32, i32) {
    %c0_i32 = arith.constant 0 : i32
    %c0_i32_0 = arith.constant 0 : i32
    %c0_i32_1 = arith.constant 0 : i32
    return %c0_i32, %c0_i32_0 : i32, i32
  }
  func.func @transform_2(%arg0: i32) -> (i32, i32) {
    %c0_i32 = arith.constant 0 : i32
    %c0_i32_0 = arith.constant 0 : i32
    %c0_i32_1 = arith.constant 0 : i32
    return %c0_i32, %c0_i32_0 : i32, i32
  }
  func.func @transform_3(%arg0: i32) -> (i32, i32) {
    %c0_i32 = arith.constant 0 : i32
    %c0_i32_0 = arith.constant 0 : i32
    %c0_i32_1 = arith.constant 0 : i32
    return %c0_i32, %c0_i32_0 : i32, i32
  }
  func.func @transform_4(%arg0: i32) -> (i32, i32) {
    %c0_i32 = arith.constant 0 : i32
    %c0_i32_0 = arith.constant 0 : i32
    %c0_i32_1 = arith.constant 0 : i32
    return %c0_i32, %c0_i32_0 : i32, i32
  }
  func.func @transform_5(%arg0: i32) -> (i32, i32) {
    %c0_i32 = arith.constant 0 : i32
    %c0_i32_0 = arith.constant 0 : i32
    %c0_i32_1 = arith.constant 0 : i32
    return %c0_i32, %c0_i32_0 : i32, i32
  }
  func.func @transform_6(%arg0: i32) -> (i32, i32) {
    %c0_i32 = arith.constant 0 : i32
    %c0_i32_0 = arith.constant 0 : i32
    %c0_i32_1 = arith.constant 0 : i32
    return %c0_i32, %c0_i32_0 : i32, i32
  }
  func.func @transform_7(%arg0: i32) -> (i32, i32, i32) {
    %c0_i32 = arith.constant 0 : i32
    %c0_i32_0 = arith.constant 0 : i32
    %c0_i32_1 = arith.constant 0 : i32
    return %arg0, %c0_i32, %c0_i32_0 : i32, i32, i32
  }
}

module attributes {stable_mosaic.version = 11 : i64} {
  func.func @_encoder_stage_kernel(%arg0: i32, %arg1: memref<1x4x4x32xbf16, #tpu.memory_space<vmem>>, %arg2: memref<128x16xbf16, #tpu.memory_space<vmem>>, %arg3: memref<1x16xf32, #tpu.memory_space<vmem>>, %arg4: memref<144x16xbf16, #tpu.memory_space<vmem>>, %arg5: memref<1x16xf32, #tpu.memory_space<vmem>>, %arg6: memref<144x16xbf16, #tpu.memory_space<vmem>>, %arg7: memref<1x16xf32, #tpu.memory_space<vmem>>, %arg8: memref<1x16x16xbf16, #tpu.memory_space<vmem>>, %arg9: memref<5x5x32xbf16, #tpu.memory_space<vmem>>, %arg10: memref<6x6x16xbf16, #tpu.memory_space<vmem>>, %arg11: memref<6x6x16xbf16, #tpu.memory_space<vmem>>) attributes {dimension_semantics = [#tpu.dimension_semantics<parallel>], iteration_bounds = array<i64: 2>, scalar_prefetch = 0 : i64, scratch_operands = 3 : i64, tpu.core_type = #tpu.core_type<tc>, window_params = [{transform_indices = @transform_0, window_bounds = array<i64: 1, 4, 4, 32>}, {pipeline_mode = #tpu.pipeline_mode<synchronous>, transform_indices = @transform_1, window_bounds = array<i64: 128, 16>}, {pipeline_mode = #tpu.pipeline_mode<synchronous>, transform_indices = @transform_2, window_bounds = array<i64: 1, 16>}, {pipeline_mode = #tpu.pipeline_mode<synchronous>, transform_indices = @transform_3, window_bounds = array<i64: 144, 16>}, {pipeline_mode = #tpu.pipeline_mode<synchronous>, transform_indices = @transform_4, window_bounds = array<i64: 1, 16>}, {pipeline_mode = #tpu.pipeline_mode<synchronous>, transform_indices = @transform_5, window_bounds = array<i64: 144, 16>}, {pipeline_mode = #tpu.pipeline_mode<synchronous>, transform_indices = @transform_6, window_bounds = array<i64: 1, 16>}, {transform_indices = @transform_7, window_bounds = array<i64: 1, 16, 16>}]} {
    %c0 = arith.constant 0 : index
    %c0_0 = arith.constant 0 : index
    %c0_1 = arith.constant 0 : index
    %c0_2 = arith.constant 0 : index
    %0 = vector.load %arg1[%c0, %c0_0, %c0_1, %c0_2] : memref<1x4x4x32xbf16, #tpu.memory_space<vmem>>, vector<1x4x4x32xbf16>
    %1 = vector.shape_cast %0 : vector<1x4x4x32xbf16> to vector<4x4x32xbf16>
    %cst = arith.constant 0.000000e+00 : bf16
    %2 = vector.broadcast %cst : bf16 to vector<4x1x32xbf16>
    %cst_3 = arith.constant 0.000000e+00 : bf16
    %3 = vector.broadcast %cst_3 : bf16 to vector<1x5x32xbf16>
    %c0_4 = arith.constant 0 : index
    %c0_5 = arith.constant 0 : index
    %c0_6 = arith.constant 0 : index
    %4 = vector.load %arg9[%c0_4, %c0_5, %c0_6] : memref<5x5x32xbf16, #tpu.memory_space<vmem>>, vector<1x5x32xbf16>
    tpu.vector_store %arg9[%c0_4, %c0_5, %c0_6], %3 {strides = array<i32>} : memref<5x5x32xbf16, #tpu.memory_space<vmem>>, vector<1x5x32xbf16>,
    %5 = tpu.concatenate %2, %1 in 1 : vector<4x1x32xbf16>, vector<4x4x32xbf16> -> vector<4x5x32xbf16>
    %c1 = arith.constant 1 : index
    %c0_7 = arith.constant 0 : index
    %c0_8 = arith.constant 0 : index
    %6 = vector.load %arg9[%c1, %c0_7, %c0_8] : memref<5x5x32xbf16, #tpu.memory_space<vmem>>, vector<4x5x32xbf16>
    tpu.vector_store %arg9[%c1, %c0_7, %c0_8], %5 {strides = array<i32>} : memref<5x5x32xbf16, #tpu.memory_space<vmem>>, vector<4x5x32xbf16>,
    %c0_9 = arith.constant 0 : index
    %c0_10 = arith.constant 0 : index
    %c0_11 = arith.constant 0 : index
    %7 = vector.load %arg9[%c0_9, %c0_10, %c0_11] : memref<5x5x32xbf16, #tpu.memory_space<vmem>>, vector<4x4x32xbf16>
    %8 = vector.shape_cast %7 : vector<4x4x32xbf16> to vector<16x32xbf16>
    %c0_12 = arith.constant 0 : index
    %c1_13 = arith.constant 1 : index
    %c0_14 = arith.constant 0 : index
    %9 = vector.load %arg9[%c0_12, %c1_13, %c0_14] : memref<5x5x32xbf16, #tpu.memory_space<vmem>>, vector<4x4x32xbf16>
    %10 = vector.shape_cast %9 : vector<4x4x32xbf16> to vector<16x32xbf16>
    %c1_15 = arith.constant 1 : index
    %c0_16 = arith.constant 0 : index
    %c0_17 = arith.constant 0 : index
    %11 = vector.load %arg9[%c1_15, %c0_16, %c0_17] : memref<5x5x32xbf16, #tpu.memory_space<vmem>>, vector<4x4x32xbf16>
    %12 = vector.shape_cast %11 : vector<4x4x32xbf16> to vector<16x32xbf16>
    %c1_18 = arith.constant 1 : index
    %c1_19 = arith.constant 1 : index
    %c0_20 = arith.constant 0 : index
    %13 = vector.load %arg9[%c1_18, %c1_19, %c0_20] : memref<5x5x32xbf16, #tpu.memory_space<vmem>>, vector<4x4x32xbf16>
    %14 = vector.shape_cast %13 : vector<4x4x32xbf16> to vector<16x32xbf16>
    %15 = tpu.concatenate %8, %10, %12, %14 in 1 : vector<16x32xbf16>, vector<16x32xbf16>, vector<16x32xbf16>, vector<16x32xbf16> -> vector<16x128xbf16>
    %c0_21 = arith.constant 0 : index
    %c0_22 = arith.constant 0 : index
    %16 = vector.load %arg2[%c0_21, %c0_22] : memref<128x16xbf16, #tpu.memory_space<vmem>>, vector<128x16xbf16>
    %cst_23 = arith.constant dense<0.000000e+00> : vector<16x16xf32>
    %17 = tpu.matmul %15, %16, %cst_23 {dimension_numbers = #tpu.dot_dimension_numbers<[1], [0], [0], [1], [0, 0, 1, 1], [], []>} : vector<16x128xbf16>, vector<128x16xbf16>, vector<16x16xf32> -> vector<16x16xf32>
    %c0_24 = arith.constant 0 : index
    %c0_25 = arith.constant 0 : index
    %18 = vector.load %arg3[%c0_24, %c0_25] : memref<1x16xf32, #tpu.memory_space<vmem>>, vector<1x16xf32>
    %19 = vector.broadcast %18 : vector<1x16xf32> to vector<16x16xf32>
    %20 = arith.addf %17, %19 : vector<16x16xf32>
    %cst_26 = arith.constant 0.000000e+00 : f32
    %21 = vector.broadcast %cst_26 : f32 to vector<16x16xf32>
    %22 = arith.cmpf ogt, %20, %21 : vector<16x16xf32>
    %cst_27 = arith.constant 0.00999999977 : f32
    %23 = vector.broadcast %cst_27 : f32 to vector<16x16xf32>
    %24 = arith.mulf %23, %20 : vector<16x16xf32>
    %25 = arith.select %22, %20, %24 : vector<16x16xi1>, vector<16x16xf32>
    %26 = arith.truncf %25 : vector<16x16xf32> to vector<16x16xbf16>
    %27 = vector.shape_cast %26 : vector<16x16xbf16> to vector<4x4x16xbf16>
    %cst_28 = arith.constant 0.000000e+00 : bf16
    %28 = vector.broadcast %cst_28 : bf16 to vector<4x1x16xbf16>
    %cst_29 = arith.constant 0.000000e+00 : bf16
    %29 = vector.broadcast %cst_29 : bf16 to vector<1x6x16xbf16>
    %c0_30 = arith.constant 0 : index
    %c0_31 = arith.constant 0 : index
    %c0_32 = arith.constant 0 : index
    %30 = vector.load %arg10[%c0_30, %c0_31, %c0_32] : memref<6x6x16xbf16, #tpu.memory_space<vmem>>, vector<1x6x16xbf16>
    tpu.vector_store %arg10[%c0_30, %c0_31, %c0_32], %29 {strides = array<i32>} : memref<6x6x16xbf16, #tpu.memory_space<vmem>>, vector<1x6x16xbf16>,
    %c5 = arith.constant 5 : index
    %c0_33 = arith.constant 0 : index
    %c0_34 = arith.constant 0 : index
    %31 = vector.load %arg10[%c5, %c0_33, %c0_34] : memref<6x6x16xbf16, #tpu.memory_space<vmem>>, vector<1x6x16xbf16>
    tpu.vector_store %arg10[%c5, %c0_33, %c0_34], %29 {strides = array<i32>} : memref<6x6x16xbf16, #tpu.memory_space<vmem>>, vector<1x6x16xbf16>,
    %32 = tpu.concatenate %28, %27, %28 in 1 : vector<4x1x16xbf16>, vector<4x4x16xbf16>, vector<4x1x16xbf16> -> vector<4x6x16xbf16>
    %c1_35 = arith.constant 1 : index
    %c0_36 = arith.constant 0 : index
    %c0_37 = arith.constant 0 : index
    %33 = vector.load %arg10[%c1_35, %c0_36, %c0_37] : memref<6x6x16xbf16, #tpu.memory_space<vmem>>, vector<4x6x16xbf16>
    tpu.vector_store %arg10[%c1_35, %c0_36, %c0_37], %32 {strides = array<i32>} : memref<6x6x16xbf16, #tpu.memory_space<vmem>>, vector<4x6x16xbf16>,
    %c0_38 = arith.constant 0 : index
    %c0_39 = arith.constant 0 : index
    %c0_40 = arith.constant 0 : index
    %34 = vector.load %arg10[%c0_38, %c0_39, %c0_40] : memref<6x6x16xbf16, #tpu.memory_space<vmem>>, vector<4x4x16xbf16>
    %35 = vector.shape_cast %34 : vector<4x4x16xbf16> to vector<16x16xbf16>
    %c0_41 = arith.constant 0 : index
    %c1_42 = arith.constant 1 : index
    %c0_43 = arith.constant 0 : index
    %36 = vector.load %arg10[%c0_41, %c1_42, %c0_43] : memref<6x6x16xbf16, #tpu.memory_space<vmem>>, vector<4x4x16xbf16>
    %37 = vector.shape_cast %36 : vector<4x4x16xbf16> to vector<16x16xbf16>
    %c0_44 = arith.constant 0 : index
    %c2 = arith.constant 2 : index
    %c0_45 = arith.constant 0 : index
    %38 = vector.load %arg10[%c0_44, %c2, %c0_45] : memref<6x6x16xbf16, #tpu.memory_space<vmem>>, vector<4x4x16xbf16>
    %39 = vector.shape_cast %38 : vector<4x4x16xbf16> to vector<16x16xbf16>
    %c1_46 = arith.constant 1 : index
    %c0_47 = arith.constant 0 : index
    %c0_48 = arith.constant 0 : index
    %40 = vector.load %arg10[%c1_46, %c0_47, %c0_48] : memref<6x6x16xbf16, #tpu.memory_space<vmem>>, vector<4x4x16xbf16>
    %41 = vector.shape_cast %40 : vector<4x4x16xbf16> to vector<16x16xbf16>
    %c1_49 = arith.constant 1 : index
    %c1_50 = arith.constant 1 : index
    %c0_51 = arith.constant 0 : index
    %42 = vector.load %arg10[%c1_49, %c1_50, %c0_51] : memref<6x6x16xbf16, #tpu.memory_space<vmem>>, vector<4x4x16xbf16>
    %43 = vector.shape_cast %42 : vector<4x4x16xbf16> to vector<16x16xbf16>
    %c1_52 = arith.constant 1 : index
    %c2_53 = arith.constant 2 : index
    %c0_54 = arith.constant 0 : index
    %44 = vector.load %arg10[%c1_52, %c2_53, %c0_54] : memref<6x6x16xbf16, #tpu.memory_space<vmem>>, vector<4x4x16xbf16>
    %45 = vector.shape_cast %44 : vector<4x4x16xbf16> to vector<16x16xbf16>
    %c2_55 = arith.constant 2 : index
    %c0_56 = arith.constant 0 : index
    %c0_57 = arith.constant 0 : index
    %46 = vector.load %arg10[%c2_55, %c0_56, %c0_57] : memref<6x6x16xbf16, #tpu.memory_space<vmem>>, vector<4x4x16xbf16>
    %47 = vector.shape_cast %46 : vector<4x4x16xbf16> to vector<16x16xbf16>
    %c2_58 = arith.constant 2 : index
    %c1_59 = arith.constant 1 : index
    %c0_60 = arith.constant 0 : index
    %48 = vector.load %arg10[%c2_58, %c1_59, %c0_60] : memref<6x6x16xbf16, #tpu.memory_space<vmem>>, vector<4x4x16xbf16>
    %49 = vector.shape_cast %48 : vector<4x4x16xbf16> to vector<16x16xbf16>
    %c2_61 = arith.constant 2 : index
    %c2_62 = arith.constant 2 : index
    %c0_63 = arith.constant 0 : index
    %50 = vector.load %arg10[%c2_61, %c2_62, %c0_63] : memref<6x6x16xbf16, #tpu.memory_space<vmem>>, vector<4x4x16xbf16>
    %51 = vector.shape_cast %50 : vector<4x4x16xbf16> to vector<16x16xbf16>
    %52 = tpu.concatenate %35, %37, %39, %41, %43, %45, %47, %49, %51 in 1 : vector<16x16xbf16>, vector<16x16xbf16>, vector<16x16xbf16>, vector<16x16xbf16>, vector<16x16xbf16>, vector<16x16xbf16>, vector<16x16xbf16>, vector<16x16xbf16>, vector<16x16xbf16> -> vector<16x144xbf16>
    %c0_64 = arith.constant 0 : index
    %c0_65 = arith.constant 0 : index
    %53 = vector.load %arg4[%c0_64, %c0_65] : memref<144x16xbf16, #tpu.memory_space<vmem>>, vector<144x16xbf16>
    %cst_66 = arith.constant dense<0.000000e+00> : vector<16x16xf32>
    %54 = tpu.matmul %52, %53, %cst_66 {dimension_numbers = #tpu.dot_dimension_numbers<[1], [0], [0], [1], [0, 0, 1, 1], [], []>} : vector<16x144xbf16>, vector<144x16xbf16>, vector<16x16xf32> -> vector<16x16xf32>
    %c0_67 = arith.constant 0 : index
    %c0_68 = arith.constant 0 : index
    %55 = vector.load %arg5[%c0_67, %c0_68] : memref<1x16xf32, #tpu.memory_space<vmem>>, vector<1x16xf32>
    %56 = vector.broadcast %55 : vector<1x16xf32> to vector<16x16xf32>
    %57 = arith.addf %54, %56 : vector<16x16xf32>
    %cst_69 = arith.constant 0.000000e+00 : f32
    %58 = vector.broadcast %cst_69 : f32 to vector<16x16xf32>
    %59 = arith.maximumf %57, %58 : vector<16x16xf32>
    %60 = arith.truncf %59 : vector<16x16xf32> to vector<16x16xbf16>
    %61 = vector.shape_cast %60 : vector<16x16xbf16> to vector<4x4x16xbf16>
    %cst_70 = arith.constant 0.000000e+00 : bf16
    %62 = vector.broadcast %cst_70 : bf16 to vector<4x1x16xbf16>
    %cst_71 = arith.constant 0.000000e+00 : bf16
    %63 = vector.broadcast %cst_71 : bf16 to vector<1x6x16xbf16>
    %c0_72 = arith.constant 0 : index
    %c0_73 = arith.constant 0 : index
    %c0_74 = arith.constant 0 : index
    %64 = vector.load %arg11[%c0_72, %c0_73, %c0_74] : memref<6x6x16xbf16, #tpu.memory_space<vmem>>, vector<1x6x16xbf16>
    tpu.vector_store %arg11[%c0_72, %c0_73, %c0_74], %63 {strides = array<i32>} : memref<6x6x16xbf16, #tpu.memory_space<vmem>>, vector<1x6x16xbf16>,
    %c5_75 = arith.constant 5 : index
    %c0_76 = arith.constant 0 : index
    %c0_77 = arith.constant 0 : index
    %65 = vector.load %arg11[%c5_75, %c0_76, %c0_77] : memref<6x6x16xbf16, #tpu.memory_space<vmem>>, vector<1x6x16xbf16>
    tpu.vector_store %arg11[%c5_75, %c0_76, %c0_77], %63 {strides = array<i32>} : memref<6x6x16xbf16, #tpu.memory_space<vmem>>, vector<1x6x16xbf16>,
    %66 = tpu.concatenate %62, %61, %62 in 1 : vector<4x1x16xbf16>, vector<4x4x16xbf16>, vector<4x1x16xbf16> -> vector<4x6x16xbf16>
    %c1_78 = arith.constant 1 : index
    %c0_79 = arith.constant 0 : index
    %c0_80 = arith.constant 0 : index
    %67 = vector.load %arg11[%c1_78, %c0_79, %c0_80] : memref<6x6x16xbf16, #tpu.memory_space<vmem>>, vector<4x6x16xbf16>
    tpu.vector_store %arg11[%c1_78, %c0_79, %c0_80], %66 {strides = array<i32>} : memref<6x6x16xbf16, #tpu.memory_space<vmem>>, vector<4x6x16xbf16>,
    %c0_81 = arith.constant 0 : index
    %c0_82 = arith.constant 0 : index
    %c0_83 = arith.constant 0 : index
    %68 = vector.load %arg11[%c0_81, %c0_82, %c0_83] : memref<6x6x16xbf16, #tpu.memory_space<vmem>>, vector<4x4x16xbf16>
    %69 = vector.shape_cast %68 : vector<4x4x16xbf16> to vector<16x16xbf16>
    %c0_84 = arith.constant 0 : index
    %c1_85 = arith.constant 1 : index
    %c0_86 = arith.constant 0 : index
    %70 = vector.load %arg11[%c0_84, %c1_85, %c0_86] : memref<6x6x16xbf16, #tpu.memory_space<vmem>>, vector<4x4x16xbf16>
    %71 = vector.shape_cast %70 : vector<4x4x16xbf16> to vector<16x16xbf16>
    %c0_87 = arith.constant 0 : index
    %c2_88 = arith.constant 2 : index
    %c0_89 = arith.constant 0 : index
    %72 = vector.load %arg11[%c0_87, %c2_88, %c0_89] : memref<6x6x16xbf16, #tpu.memory_space<vmem>>, vector<4x4x16xbf16>
    %73 = vector.shape_cast %72 : vector<4x4x16xbf16> to vector<16x16xbf16>
    %c1_90 = arith.constant 1 : index
    %c0_91 = arith.constant 0 : index
    %c0_92 = arith.constant 0 : index
    %74 = vector.load %arg11[%c1_90, %c0_91, %c0_92] : memref<6x6x16xbf16, #tpu.memory_space<vmem>>, vector<4x4x16xbf16>
    %75 = vector.shape_cast %74 : vector<4x4x16xbf16> to vector<16x16xbf16>
    %c1_93 = arith.constant 1 : index
    %c1_94 = arith.constant 1 : index
    %c0_95 = arith.constant 0 : index
    %76 = vector.load %arg11[%c1_93, %c1_94, %c0_95] : memref<6x6x16xbf16, #tpu.memory_space<vmem>>, vector<4x4x16xbf16>
    %77 = vector.shape_cast %76 : vector<4x4x16xbf16> to vector<16x16xbf16>
    %c1_96 = arith.constant 1 : index
    %c2_97 = arith.constant 2 : index
    %c0_98 = arith.constant 0 : index
    %78 = vector.load %arg11[%c1_96, %c2_97, %c0_98] : memref<6x6x16xbf16, #tpu.memory_space<vmem>>, vector<4x4x16xbf16>
    %79 = vector.shape_cast %78 : vector<4x4x16xbf16> to vector<16x16xbf16>
    %c2_99 = arith.constant 2 : index
    %c0_100 = arith.constant 0 : index
    %c0_101 = arith.constant 0 : index
    %80 = vector.load %arg11[%c2_99, %c0_100, %c0_101] : memref<6x6x16xbf16, #tpu.memory_space<vmem>>, vector<4x4x16xbf16>
    %81 = vector.shape_cast %80 : vector<4x4x16xbf16> to vector<16x16xbf16>
    %c2_102 = arith.constant 2 : index
    %c1_103 = arith.constant 1 : index
    %c0_104 = arith.constant 0 : index
    %82 = vector.load %arg11[%c2_102, %c1_103, %c0_104] : memref<6x6x16xbf16, #tpu.memory_space<vmem>>, vector<4x4x16xbf16>
    %83 = vector.shape_cast %82 : vector<4x4x16xbf16> to vector<16x16xbf16>
    %c2_105 = arith.constant 2 : index
    %c2_106 = arith.constant 2 : index
    %c0_107 = arith.constant 0 : index
    %84 = vector.load %arg11[%c2_105, %c2_106, %c0_107] : memref<6x6x16xbf16, #tpu.memory_space<vmem>>, vector<4x4x16xbf16>
    %85 = vector.shape_cast %84 : vector<4x4x16xbf16> to vector<16x16xbf16>
    %86 = tpu.concatenate %69, %71, %73, %75, %77, %79, %81, %83, %85 in 1 : vector<16x16xbf16>, vector<16x16xbf16>, vector<16x16xbf16>, vector<16x16xbf16>, vector<16x16xbf16>, vector<16x16xbf16>, vector<16x16xbf16>, vector<16x16xbf16>, vector<16x16xbf16> -> vector<16x144xbf16>
    %c0_108 = arith.constant 0 : index
    %c0_109 = arith.constant 0 : index
    %87 = vector.load %arg6[%c0_108, %c0_109] : memref<144x16xbf16, #tpu.memory_space<vmem>>, vector<144x16xbf16>
    %cst_110 = arith.constant dense<0.000000e+00> : vector<16x16xf32>
    %88 = tpu.matmul %86, %87, %cst_110 {dimension_numbers = #tpu.dot_dimension_numbers<[1], [0], [0], [1], [0, 0, 1, 1], [], []>} : vector<16x144xbf16>, vector<144x16xbf16>, vector<16x16xf32> -> vector<16x16xf32>
    %c1_111 = arith.constant 1 : index
    %c1_112 = arith.constant 1 : index
    %c0_113 = arith.constant 0 : index
    %89 = vector.load %arg10[%c1_111, %c1_112, %c0_113] : memref<6x6x16xbf16, #tpu.memory_space<vmem>>, vector<4x4x16xbf16>
    %90 = vector.shape_cast %89 : vector<4x4x16xbf16> to vector<16x16xbf16>
    %91 = arith.extf %90 : vector<16x16xbf16> to vector<16x16xf32>
    %c0_114 = arith.constant 0 : index
    %c0_115 = arith.constant 0 : index
    %92 = vector.load %arg7[%c0_114, %c0_115] : memref<1x16xf32, #tpu.memory_space<vmem>>, vector<1x16xf32>
    %93 = vector.broadcast %92 : vector<1x16xf32> to vector<16x16xf32>
    %94 = arith.addf %88, %93 : vector<16x16xf32>
    %95 = arith.addf %94, %91 : vector<16x16xf32>
    %cst_116 = arith.constant 0.000000e+00 : f32
    %96 = vector.broadcast %cst_116 : f32 to vector<16x16xf32>
    %97 = arith.maximumf %95, %96 : vector<16x16xf32>
    %98 = arith.truncf %97 : vector<16x16xf32> to vector<16x16xbf16>
    %c0_117 = arith.constant 0 : index
    %c0_118 = arith.constant 0 : index
    %c0_119 = arith.constant 0 : index
    %99 = vector.load %arg8[%c0_117, %c0_118, %c0_119] : memref<1x16x16xbf16, #tpu.memory_space<vmem>>, vector<1x16x16xbf16>
    %100 = vector.shape_cast %99 : vector<1x16x16xbf16> to vector<16x16xbf16>
    %101 = vector.shape_cast %98 : vector<16x16xbf16> to vector<1x16x16xbf16>
    tpu.vector_store %arg8[%c0_117, %c0_118, %c0_119], %101 {strides = array<i32>} : memref<1x16x16xbf16, #tpu.memory_space<vmem>>, vector<1x16x16xbf16>,
    return
  }
  func.func @transform_0(%arg0: i32) -> (i32, i32, i32, i32) {
    %c0_i32 = arith.constant 0 : i32
    %c0_i32_0 = arith.constant 0 : i32
    %c0_i32_1 = arith.constant 0 : i32
    %c0_i32_2 = arith.constant 0 : i32
    return %arg0, %c0_i32, %c0_i32_0, %c0_i32_1 : i32, i32, i32, i32
  }
  func.func @transform_1(%arg0: i32) -> (i32, i32) {
    %c0_i32 = arith.constant 0 : i32
    %c0_i32_0 = arith.constant 0 : i32
    %c0_i32_1 = arith.constant 0 : i32
    return %c0_i32, %c0_i32_0 : i32, i32
  }
  func.func @transform_2(%arg0: i32) -> (i32, i32) {
    %c0_i32 = arith.constant 0 : i32
    %c0_i32_0 = arith.constant 0 : i32
    %c0_i32_1 = arith.constant 0 : i32
    return %c0_i32, %c0_i32_0 : i32, i32
  }
  func.func @transform_3(%arg0: i32) -> (i32, i32) {
    %c0_i32 = arith.constant 0 : i32
    %c0_i32_0 = arith.constant 0 : i32
    %c0_i32_1 = arith.constant 0 : i32
    return %c0_i32, %c0_i32_0 : i32, i32
  }
  func.func @transform_4(%arg0: i32) -> (i32, i32) {
    %c0_i32 = arith.constant 0 : i32
    %c0_i32_0 = arith.constant 0 : i32
    %c0_i32_1 = arith.constant 0 : i32
    return %c0_i32, %c0_i32_0 : i32, i32
  }
  func.func @transform_5(%arg0: i32) -> (i32, i32) {
    %c0_i32 = arith.constant 0 : i32
    %c0_i32_0 = arith.constant 0 : i32
    %c0_i32_1 = arith.constant 0 : i32
    return %c0_i32, %c0_i32_0 : i32, i32
  }
  func.func @transform_6(%arg0: i32) -> (i32, i32) {
    %c0_i32 = arith.constant 0 : i32
    %c0_i32_0 = arith.constant 0 : i32
    %c0_i32_1 = arith.constant 0 : i32
    return %c0_i32, %c0_i32_0 : i32, i32
  }
  func.func @transform_7(%arg0: i32) -> (i32, i32, i32) {
    %c0_i32 = arith.constant 0 : i32
    %c0_i32_0 = arith.constant 0 : i32
    %c0_i32_1 = arith.constant 0 : i32
    return %arg0, %c0_i32, %c0_i32_0 : i32, i32, i32
  }
}

module attributes {stable_mosaic.version = 11 : i64} {
  func.func @_fc_reparam_kernel(%arg0: i32, %arg1: memref<32x16xbf16, #tpu.memory_space<vmem>>, %arg2: memref<16x16xbf16, #tpu.memory_space<vmem>>, %arg3: memref<1x16xf32, #tpu.memory_space<vmem>>, %arg4: memref<32x8xf32, #tpu.memory_space<vmem>>, %arg5: memref<32x24xf32, #tpu.memory_space<vmem>>) attributes {dimension_semantics = [#tpu.dimension_semantics<parallel>], iteration_bounds = array<i64: 1>, scalar_prefetch = 0 : i64, scratch_operands = 0 : i64, tpu.core_type = #tpu.core_type<tc>, window_params = [{transform_indices = @transform_0, window_bounds = array<i64: 32, 16>}, {pipeline_mode = #tpu.pipeline_mode<synchronous>, transform_indices = @transform_1, window_bounds = array<i64: 16, 16>}, {pipeline_mode = #tpu.pipeline_mode<synchronous>, transform_indices = @transform_2, window_bounds = array<i64: 1, 16>}, {transform_indices = @transform_3, window_bounds = array<i64: 32, 8>}, {transform_indices = @transform_4, window_bounds = array<i64: 32, 24>}]} {
    %c0 = arith.constant 0 : index
    %c0_0 = arith.constant 0 : index
    %0 = vector.load %arg1[%c0, %c0_0] : memref<32x16xbf16, #tpu.memory_space<vmem>>, vector<32x16xbf16>
    %c0_1 = arith.constant 0 : index
    %c0_2 = arith.constant 0 : index
    %1 = vector.load %arg2[%c0_1, %c0_2] : memref<16x16xbf16, #tpu.memory_space<vmem>>, vector<16x16xbf16>
    %cst = arith.constant dense<0.000000e+00> : vector<32x16xf32>
    %2 = tpu.matmul %0, %1, %cst {dimension_numbers = #tpu.dot_dimension_numbers<[1], [0], [0], [1], [0, 0, 1, 1], [], []>} : vector<32x16xbf16>, vector<16x16xbf16>, vector<32x16xf32> -> vector<32x16xf32>
    %c0_3 = arith.constant 0 : index
    %c0_4 = arith.constant 0 : index
    %3 = vector.load %arg3[%c0_3, %c0_4] : memref<1x16xf32, #tpu.memory_space<vmem>>, vector<1x16xf32>
    %4 = vector.broadcast %3 : vector<1x16xf32> to vector<32x16xf32>
    %5 = arith.addf %2, %4 : vector<32x16xf32>
    %6 = vector.extract_strided_slice %5 {offsets = [0, 0], sizes = [32, 8], strides = [1, 1]} : vector<32x16xf32> to vector<32x8xf32>
    %7 = vector.extract_strided_slice %5 {offsets = [0, 8], sizes = [32, 8], strides = [1, 1]} : vector<32x16xf32> to vector<32x8xf32>
    %cst_5 = arith.constant 5.000000e-01 : f32
    %8 = vector.broadcast %cst_5 : f32 to vector<32x8xf32>
    %9 = arith.mulf %8, %7 : vector<32x8xf32>
    %10 = math.exp %9 : vector<32x8xf32>
    %c0_6 = arith.constant 0 : index
    %c0_7 = arith.constant 0 : index
    %11 = vector.load %arg4[%c0_6, %c0_7] : memref<32x8xf32, #tpu.memory_space<vmem>>, vector<32x8xf32>
    %12 = arith.mulf %11, %10 : vector<32x8xf32>
    %13 = arith.addf %12, %6 : vector<32x8xf32>
    %14 = tpu.concatenate %6, %7, %13 in 1 : vector<32x8xf32>, vector<32x8xf32>, vector<32x8xf32> -> vector<32x24xf32>
    %c0_8 = arith.constant 0 : index
    %c0_9 = arith.constant 0 : index
    %15 = vector.load %arg5[%c0_8, %c0_9] : memref<32x24xf32, #tpu.memory_space<vmem>>, vector<32x24xf32>
    tpu.vector_store %arg5[%c0_8, %c0_9], %14 {strides = array<i32>} : memref<32x24xf32, #tpu.memory_space<vmem>>, vector<32x24xf32>,
    return
  }
  func.func @transform_0(%arg0: i32) -> (i32, i32) {
    %c0_i32 = arith.constant 0 : i32
    %c0_i32_0 = arith.constant 0 : i32
    return %arg0, %c0_i32 : i32, i32
  }
  func.func @transform_1(%arg0: i32) -> (i32, i32) {
    %c0_i32 = arith.constant 0 : i32
    %c0_i32_0 = arith.constant 0 : i32
    %c0_i32_1 = arith.constant 0 : i32
    return %c0_i32, %c0_i32_0 : i32, i32
  }
  func.func @transform_2(%arg0: i32) -> (i32, i32) {
    %c0_i32 = arith.constant 0 : i32
    %c0_i32_0 = arith.constant 0 : i32
    %c0_i32_1 = arith.constant 0 : i32
    return %c0_i32, %c0_i32_0 : i32, i32
  }
  func.func @transform_3(%arg0: i32) -> (i32, i32) {
    %c0_i32 = arith.constant 0 : i32
    %c0_i32_0 = arith.constant 0 : i32
    return %arg0, %c0_i32 : i32, i32
  }
  func.func @transform_4(%arg0: i32) -> (i32, i32) {
    %c0_i32 = arith.constant 0 : i32
    %c0_i32_0 = arith.constant 0 : i32
    return %arg0, %c0_i32 : i32, i32
  }
}

</mosaic_0001>

<llo_original>
// kernel: _unnamed_function_.5
$region0: #{_unnamed_function_.5}
  #allocation0 [shape = 'u32[]', space=smem, size = 0x4, offset = 0x4, fixed_abs, tag = 'smem constant byte address 0x4 - core index']
  #allocation1 [shape = 'u32[144,128]{1,0:T(1,128)}', space=vmem, size = 0x12000, scoped, tag = 'internal scratch']
  %s0 = inlined_call_operand.vmem [shape: bf16[32,16], index: 0, kind: input, shape index: {}]
  %s1 = inlined_call_operand.vmem [shape: bf16[16,16], index: 1, kind: input, shape index: {}]
  %s2 = inlined_call_operand.vmem [shape: f32[1,16], index: 2, kind: input, shape index: {}]
  %s3 = inlined_call_operand.vmem [shape: f32[32,8], index: 3, kind: input, shape index: {}]
  %s4 = inlined_call_operand.vmem [shape: f32[32,24], index: 4, kind: output, shape index: {}]
  %s5 = sld [smem:[#allocation0]]
  $region26: #{_unnamed_function_.5} parent=0
    _
  %s7 = ssub.s32 1, %s5
  %s8 = scalar_select 0, %s7, %s5
  // Predicated region
  $region2: #{_unnamed_function_.5} parent=0 // pred_check
    _
  $region3: #{_unnamed_function_.5} parent=0 // pred_check_branch
    %10 = sbr.rel (0) target = $region5
  $region4: #{_unnamed_function_.5} parent=0 // pred_region
    _
  $region5: #{_unnamed_function_.5} parent=0 // pred_fallthru
    _
  // Predicated region
  $region6: #{_unnamed_function_.5} parent=0 // pred_check
    _
  $region7: #{_unnamed_function_.5} parent=0 // pred_check_branch
    %12 = sbr.rel (0) target = $region9
  $region8: #{_unnamed_function_.5} parent=0 // pred_region
    _
  $region9: #{_unnamed_function_.5} parent=0 // pred_fallthru
    _
  // Predicated region
  $region10: #{_unnamed_function_.5} parent=0 // pred_check
    _
  $region11: #{_unnamed_function_.5} parent=0 // pred_check_branch
    %14 = sbr.rel (0) target = $region13
  $region12: #{_unnamed_function_.5} parent=0 // pred_region
    _
  $region13: #{_unnamed_function_.5} parent=0 // pred_fallthru
    _
  // Predicated region
  $region14: #{_unnamed_function_.5} parent=0 // pred_check
    _
  $region15: #{_unnamed_function_.5} parent=0 // pred_check_branch
    %16 = sbr.rel (0) target = $region17
  $region16: #{_unnamed_function_.5} parent=0 // pred_region
    _
  $region17: #{_unnamed_function_.5} parent=0 // pred_fallthru
    _
  %v18 = vld [vmem:[%s0] sm:$0xf]
  %v19 = vld [vmem:[%s0 + $0x4] sm:$0xf]
  %v20 = vld [vmem:[%s0 + $0x8] sm:$0xf]
  %v21 = vld [vmem:[%s0 + $0xc] sm:$0xf]
  %v22 = vld [vmem:[%s1] sm:$0xf]
  %v23 = vld [vmem:[%s1 + $0x4] sm:$0xf]
  %v24 = vld [vmem:[%s2] sm:$0x1]
  %v26 = vlaneseq
  %v27 = vshrl.u32 %v26, 7
  %v28 = vsub.s32 0, %v27
  %v29 = vrot.slane %v24, %v28
  %v35 = vunpack.c.l.b16 %v18
  %v36 = vunpack.c.l.b16 %v19
  %v37 = vunpack.c.l.b16 %v20
  %v38 = vunpack.c.l.b16 %v21
  %v39 = vpack.c.b16 %v36, %v35
  %v40 = vpack.c.b16 %v38, %v37
  %v43 = vunpack.c.l.b16 %v22
  %v44 = vunpack.c.l.b16 %v23
  %v45 = vpack.c.b16 %v44, %v43
  %vm47 = vcmask 130048
  %v49 = vsel %vm47, %v39, 0
  %v52 = vsel %vm47, %v40, 0
  %54 = vmatprep.subr.bf16.mxu0 0
  %55 = vmatpush1.bf16.msra.mxu0 %v45
  %56 = vmatprep.subr.bf16.mxu0 0
  %57 = vmatpush1.bf16.msra.mxu0 0
  %58 = vmatprep.subr.bf16.mxu0 0
  %59 = vmatpush1.bf16.msra.mxu0 0
  %60 = vmatprep.subr.bf16.mxu0 0
  %61 = vmatpush1.bf16.msra.mxu0 0
  %62 = vmatprep.subr.bf16.mxu0 0
  %63 = vmatpush1.bf16.msra.mxu0 0
  %64 = vmatprep.subr.bf16.mxu0 0
  %65 = vmatpush1.bf16.msra.mxu0 0
  %66 = vmatprep.subr.bf16.mxu0 0
  %67 = vmatpush1.bf16.msra.mxu0 0
  %68 = vmatprep.subr.bf16.mxu0 0
  %69 = vmatpush1.bf16.msra.mxu0 0
  %70 = vmatprep.subr.bf16.mxu0 0
  %71 = vmatpush1.bf16.msra.mxu0 0
  %72 = vmatprep.subr.bf16.mxu0 0
  %73 = vmatpush1.bf16.msra.mxu0 0
  %74 = vmatprep.subr.bf16.mxu0 0
  %75 = vmatpush1.bf16.msra.mxu0 0
  %76 = vmatprep.subr.bf16.mxu0 0
  %77 = vmatpush1.bf16.msra.mxu0 0
  %78 = vmatprep.subr.bf16.mxu0 0
  %79 = vmatpush1.bf16.msra.mxu0 0
  %80 = vmatprep.subr.bf16.mxu0 0
  %81 = vmatpush1.bf16.msra.mxu0 0
  %82 = vmatprep.subr.bf16.mxu0 0
  %83 = vmatpush1.bf16.msra.mxu0 0
  %84 = vmatprep.subr.bf16.mxu0 0
  %85 = vmatpush1.bf16.msra.mxu0 0
  %86 = vmatprep.mubr.bf16.mxu0 0
  %87 = vmatmul.mubr.bf16.gmra.mrb[0].mxu0 %v49
  %v88 = vpop.f32.mrb[0].mxu0
  %v89 = vadd.f32 %v29, %v88
  %v90 = vpop.f32.mrb[0].mxu0
  %v91 = vpop.f32.mrb[0].mxu0
  %v92 = vadd.f32 %v29, %v91
  %v93 = vpop.f32.mrb[0].mxu0
  %94 = vmatprep.mubr.bf16.mxu0 0
  %95 = vmatmul.mubr.bf16.gmra.mrb[0].mxu0 %v52
  %v96 = vpop.f32.mrb[0].mxu0
  %v97 = vadd.f32 %v29, %v96
  %v98 = vpop.f32.mrb[0].mxu0
  %v99 = vpop.f32.mrb[0].mxu0
  %v100 = vadd.f32 %v29, %v99
  %v101 = vpop.f32.mrb[0].mxu0
  %102 = vdwg.mxu0
  %v103 = vmul.f32 %v89, 0.5
  %v104 = vmul.f32 %v92, 0.5
  %v105 = vmul.f32 %v97, 0.5
  %v106 = vmul.f32 %v100, 0.5
  %v107 = vmul.f32 %v103, 1.442695
  %v108 = vpow.pop %v107
  %v109 = vmul.f32 %v104, 1.442695
  %v110 = vpow.pop %v109
  %v111 = vmul.f32 %v105, 1.442695
  %v112 = vpow.pop %v111
  %v113 = vmul.f32 %v106, 1.442695
  %v114 = vpow.pop %v113
  %v115 = vld [vmem:[%s3] sm:$0xff]
  %v116 = vld [vmem:[%s3 + $0x8] sm:$0xff]
  %v117 = vld [vmem:[%s3 + $0x10] sm:$0xff]
  %v118 = vld [vmem:[%s3 + $0x18] sm:$0xff]
  %123 = vrot.lane.b32.xlu0 %v108, 120
  %v124 = vpop.permute.xlu0 %123
  %125 = vrot.lane.b32.xlu0 %v110, 120
  %v126 = vpop.permute.xlu0 %125
  %127 = vrot.lane.b32.xlu0 %v112, 120
  %v128 = vpop.permute.xlu0 %127
  %129 = vrot.lane.b32.xlu0 %v114, 120
  %v130 = vpop.permute.xlu0 %129
  %v135 = vmul.f32 %v115, %v124
  %v136 = vmul.f32 %v116, %v126
  %v137 = vmul.f32 %v117, %v128
  %v138 = vmul.f32 %v118, %v130
  %v139 = vadd.f32 %v135, %v89
  %v140 = vadd.f32 %v136, %v92
  %v141 = vadd.f32 %v137, %v97
  %v142 = vadd.f32 %v138, %v100
  %147 = vrot.lane.b32.xlu0 %v139, 16
  %v148 = vpop.permute.xlu0 %147
  %149 = vrot.lane.b32.xlu0 %v140, 16
  %v150 = vpop.permute.xlu0 %149
  %151 = vrot.lane.b32.xlu0 %v141, 16
  %v152 = vpop.permute.xlu0 %151
  %153 = vrot.lane.b32.xlu0 %v142, 16
  %v154 = vpop.permute.xlu0 %153
  %v159 = vsel %vm47, %v89, %v148
  %v160 = vsel %vm47, %v92, %v150
  %v161 = vsel %vm47, %v97, %v152
  %v162 = vsel %vm47, %v100, %v154
  %vm163 = vcmask 195584
  %164 = vst.msk [vmem:[%s4] sm:$0xff] %vm163, %v159
  %165 = vst.msk [vmem:[%s4 + $0x8] sm:$0xff] %vm163, %v160
  %166 = vst.msk [vmem:[%s4 + $0x10] sm:$0xff] %vm163, %v161
  %167 = vst.msk [vmem:[%s4 + $0x18] sm:$0xff] %vm163, %v162
  // Predicated region
  $region18: #{_unnamed_function_.5} parent=0 // pred_check
    _
  $region19: #{_unnamed_function_.5} parent=0 // pred_check_branch
    %169 = sbr.rel (0) target = $region21
  $region20: #{_unnamed_function_.5} parent=0 // pred_region
    _
  $region21: #{_unnamed_function_.5} parent=0 // pred_fallthru
    _
  // Predicated region
  $region22: #{_unnamed_function_.5} parent=0 // pred_check
    _
  $region23: #{_unnamed_function_.5} parent=0 // pred_check_branch
    %171 = sbr.rel (0) target = $region25
  $region24: #{_unnamed_function_.5} parent=0 // pred_region
    _
  $region25: #{_unnamed_function_.5} parent=0 // pred_fallthru
    _

// kernel: _unnamed_function_.4
$region0: #{_unnamed_function_.4}
  #allocation0 [shape = 'u32[]', space=smem, size = 0x4, offset = 0x4, fixed_abs, tag = 'smem constant byte address 0x4 - core index']
  #allocation1 [shape = 'u32[144,128]{1,0:T(1,128)}', space=vmem, size = 0x12000, scoped, tag = 'internal scratch']
  #allocation2 [shape = 'bf16[5,5,32]{2,1,0:T(8,128)(2,1)}', space=vmem, size = 0x2800, scoped, tag = 'scratch operand']
  #allocation3 [shape = 'bf16[6,6,16]{2,1,0:T(8,128)(2,1)}', space=vmem, size = 0x3000, scoped, tag = 'scratch operand']
  #allocation4 [shape = 'bf16[6,6,16]{2,1,0:T(8,128)(2,1)}', space=vmem, size = 0x3000, scoped, tag = 'scratch operand']
  %s0 = inlined_call_operand.vmem [shape: bf16[2,4,4,32], index: 0, kind: input, shape index: {}]
  %s1 = inlined_call_operand.vmem [shape: bf16[128,16], index: 1, kind: input, shape index: {}]
  %s2 = inlined_call_operand.vmem [shape: f32[1,16], index: 2, kind: input, shape index: {}]
  %s3 = inlined_call_operand.vmem [shape: bf16[144,16], index: 3, kind: input, shape index: {}]
  %s4 = inlined_call_operand.vmem [shape: f32[1,16], index: 4, kind: input, shape index: {}, may-alias: {4,6}]
  %s5 = inlined_call_operand.vmem [shape: bf16[144,16], index: 5, kind: input, shape index: {}]
  %s6 = inlined_call_operand.vmem [shape: f32[1,16], index: 6, kind: input, shape index: {}, may-alias: {4,6}]
  %s7 = inlined_call_operand.vmem [shape: bf16[2,16,16], index: 7, kind: output, shape index: {}]
  %s8 = sld [smem:[#allocation0]]
  $region61: #{_unnamed_function_.4} parent=0
    _
  %s10 = ssub.s32 1, %s8
  %s11 = scalar_select 0, %s10, %s8
  loop: start=0, step=1, limit=4
  $region2: #{_unnamed_function_.4} parent=0 // loop_pre_header
    _
  $region3: #{_unnamed_function_.4} parent=0 // loop_header
    %s13 = sphi 0, %s17
    %p14 = scmp.ge.s32.totalorder %s13, 4
    %s23 = sphi 0, %s25
    %s26 = sphi 0, %s23
    %s27 = sphi 0, %s26
    %s43 = sphi 0, %s27
    %s47 = sphi 0, %s47
    %s49 = sphi 0, %s47
    %s50 = sphi 0, %s49
    %s64 = sphi 0, %s50
    %s68 = sphi 0, %s68
    %s70 = sphi 0, %s68
    %s71 = sphi 0, %s70
    %s85 = sphi 0, %s71
    %s89 = sphi 0, %s89
    %s91 = sphi 0, %s89
    %s92 = sphi 0, %s91
    %s106 = sphi 0, %s92
    %s110 = sphi 0, %s110
    %s112 = sphi 0, %s110
    %s113 = sphi 0, %s112
    %s127 = sphi 0, %s113
    %s131 = sphi 0, %s131
    %s133 = sphi 0, %s131
    %s134 = sphi 0, %s133
    %s148 = sphi 0, %s134
    %s152 = sphi 0, %s152
    %s154 = sphi 0, %s152
    %s155 = sphi 0, %s154
    %s169 = sphi 0, %s155
    %s175 = sphi 0, %s177
    %s178 = sphi 0, %s175
    %s179 = sphi 0, %s178
    %s195 = sphi 0, %s179
  $region4: #{_unnamed_function_.4} parent=0 // loop_header_branch
    %16 = sbr.rel (%p14) target = $region8
  $region5: #{_unnamed_function_.4} parent=0 // loop_body
    %s18 = ssub.s32 %s13, 1
    %s19 = ssub.s32 %s13, 2
    %s20 = sadd.s32 %s13, 1
    %s21 = ssub.s32 %s13, %s20
    %p22 = scmp.eq.s32.totalorder %s21, 0
    %s24 = sadd.s32 %s23, 1
    %s25 = scalar_select %p22, %s23, %s24
    %p28 = pneg %p22
    %p29 = scmp.eq.s32.totalorder %s13, 1
    %p30 = por %p28, %p29
    %p31 = scmp.ne.s32.totalorder %s23, %s26
    %p32 = scmp.eq.s32.totalorder %s13, 0
    %p33 = por %p31, %p32
    %p34 = scmp.ne.s32.totalorder %s23, %s26
    %p35 = scmp.eq.s32.totalorder %s18, 1
    %p36 = por %p34, %p35
    %p37 = scmp.ne.s32.totalorder %s26, %s27
    %p38 = scmp.eq.s32.totalorder %s18, 0
    %p39 = por %p37, %p38
    %p40 = scmp.ne.s32.totalorder %s26, %s27
    %p41 = scmp.eq.s32.totalorder %s19, 1
    %p42 = por %p40, %p41
    %p44 = scmp.ne.s32.totalorder %s27, %s43
    %p45 = scmp.eq.s32.totalorder %s19, 0
    %p46 = por %p44, %p45
    %s48 = sadd.s32 %s47, 1
    %p51 = scmp.eq.s32.totalorder %s13, 1
    %p52 = scmp.ne.s32.totalorder %s47, %s49
    %p53 = scmp.eq.s32.totalorder %s13, 0
    %p54 = por %p52, %p53
    %p55 = scmp.ne.s32.totalorder %s47, %s49
    %p56 = scmp.eq.s32.totalorder %s18, 1
    %p57 = por %p55, %p56
    %p58 = scmp.ne.s32.totalorder %s49, %s50
    %p59 = scmp.eq.s32.totalorder %s18, 0
    %p60 = por %p58, %p59
    %p61 = scmp.ne.s32.totalorder %s49, %s50
    %p62 = scmp.eq.s32.totalorder %s19, 1
    %p63 = por %p61, %p62
    %p65 = scmp.ne.s32.totalorder %s50, %s64
    %p66 = scmp.eq.s32.totalorder %s19, 0
    %p67 = por %p65, %p66
    %s69 = sadd.s32 %s68, 1
    %p72 = scmp.eq.s32.totalorder %s13, 1
    %p73 = scmp.ne.s32.totalorder %s68, %s70
    %p74 = scmp.eq.s32.totalorder %s13, 0
    %p75 = por %p73, %p74
    %p76 = scmp.ne.s32.totalorder %s68, %s70
    %p77 = scmp.eq.s32.totalorder %s18, 1
    %p78 = por %p76, %p77
    %p79 = scmp.ne.s32.totalorder %s70, %s71
    %p80 = scmp.eq.s32.totalorder %s18, 0
    %p81 = por %p79, %p80
    %p82 = scmp.ne.s32.totalorder %s70, %s71
    %p83 = scmp.eq.s32.totalorder %s19, 1
    %p84 = por %p82, %p83
    %p86 = scmp.ne.s32.totalorder %s71, %s85
    %p87 = scmp.eq.s32.totalorder %s19, 0
    %p88 = por %p86, %p87
    %s90 = sadd.s32 %s89, 1
    %p93 = scmp.eq.s32.totalorder %s13, 1
    %p94 = scmp.ne.s32.totalorder %s89, %s91
    %p95 = scmp.eq.s32.totalorder %s13, 0
    %p96 = por %p94, %p95
    %p97 = scmp.ne.s32.totalorder %s89, %s91
    %p98 = scmp.eq.s32.totalorder %s18, 1
    %p99 = por %p97, %p98
    %p100 = scmp.ne.s32.totalorder %s91, %s92
    %p101 = scmp.eq.s32.totalorder %s18, 0
    %p102 = por %p100, %p101
    %p103 = scmp.ne.s32.totalorder %s91, %s92
    %p104 = scmp.eq.s32.totalorder %s19, 1
    %p105 = por %p103, %p104
    %p107 = scmp.ne.s32.totalorder %s92, %s106
    %p108 = scmp.eq.s32.totalorder %s19, 0
    %p109 = por %p107, %p108
    %s111 = sadd.s32 %s110, 1
    %p114 = scmp.eq.s32.totalorder %s13, 1
    %p115 = scmp.ne.s32.totalorder %s110, %s112
    %p116 = scmp.eq.s32.totalorder %s13, 0
    %p117 = por %p115, %p116
    %p118 = scmp.ne.s32.totalorder %s110, %s112
    %p119 = scmp.eq.s32.totalorder %s18, 1
    %p120 = por %p118, %p119
    %p121 = scmp.ne.s32.totalorder %s112, %s113
    %p122 = scmp.eq.s32.totalorder %s18, 0
    %p123 = por %p121, %p122
    %p124 = scmp.ne.s32.totalorder %s112, %s113
    %p125 = scmp.eq.s32.totalorder %s19, 1
    %p126 = por %p124, %p125
    %p128 = scmp.ne.s32.totalorder %s113, %s127
    %p129 = scmp.eq.s32.totalorder %s19, 0
    %p130 = por %p128, %p129
    %s132 = sadd.s32 %s131, 1
    %p135 = scmp.eq.s32.totalorder %s13, 1
    %p136 = scmp.ne.s32.totalorder %s131, %s133
    %p137 = scmp.eq.s32.totalorder %s13, 0
    %p138 = por %p136, %p137
    %p139 = scmp.ne.s32.totalorder %s131, %s133
    %p140 = scmp.eq.s32.totalorder %s18, 1
    %p141 = por %p139, %p140
    %p142 = scmp.ne.s32.totalorder %s133, %s134
    %p143 = scmp.eq.s32.totalorder %s18, 0
    %p144 = por %p142, %p143
    %p145 = scmp.ne.s32.totalorder %s133, %s134
    %p146 = scmp.eq.s32.totalorder %s19, 1
    %p147 = por %p145, %p146
    %p149 = scmp.ne.s32.totalorder %s134, %s148
    %p150 = scmp.eq.s32.totalorder %s19, 0
    %p151 = por %p149, %p150
    %s153 = sadd.s32 %s152, 1
    %p156 = scmp.eq.s32.totalorder %s13, 1
    %p157 = scmp.ne.s32.totalorder %s152, %s154
    %p158 = scmp.eq.s32.totalorder %s13, 0
    %p159 = por %p157, %p158
    %p160 = scmp.ne.s32.totalorder %s152, %s154
    %p161 = scmp.eq.s32.totalorder %s18, 1
    %p162 = por %p160, %p161
    %p163 = scmp.ne.s32.totalorder %s154, %s155
    %p164 = scmp.eq.s32.totalorder %s18, 0
    %p165 = por %p163, %p164
    %p166 = scmp.ne.s32.totalorder %s154, %s155
    %p167 = scmp.eq.s32.totalorder %s19, 1
    %p168 = por %p166, %p167
    %p170 = scmp.ne.s32.totalorder %s155, %s169
    %p171 = scmp.eq.s32.totalorder %s19, 0
    %p172 = por %p170, %p171
    %s173 = ssub.s32 %s13, %s20
    %p174 = scmp.eq.s32.totalorder %s173, 0
    %s176 = sadd.s32 %s175, 1
    %s177 = scalar_select %p174, %s175, %s176
    %p180 = pneg %p174
    %p181 = scmp.eq.s32.totalorder %s13, 1
    %p182 = por %p180, %p181
    %p183 = scmp.ne.s32.totalorder %s175, %s178
    %p184 = scmp.eq.s32.totalorder %s13, 0
    %p185 = por %p183, %p184
    %p186 = scmp.ne.s32.totalorder %s175, %s178
    %p187 = scmp.eq.s32.totalorder %s18, 1
    %p188 = por %p186, %p187
    %p189 = scmp.ne.s32.totalorder %s178, %s179
    %p190 = scmp.eq.s32.totalorder %s18, 0
    %p191 = por %p189, %p190
    %p192 = scmp.ne.s32.totalorder %s178, %s179
    %p193 = scmp.eq.s32.totalorder %s19, 1
    %p194 = por %p192, %p193
    %p196 = scmp.ne.s32.totalorder %s179, %s195
    %p197 = scmp.eq.s32.totalorder %s19, 0
    %p198 = por %p196, %p197
    %p199 = scmp.le.s32.totalorder 1, %s13
    %p200 = scmp.lt.s32.totalorder %s13, 3
    %p201 = pnand %p199, %p200
    %p202 = pneg %p201
    // Predicated region
    $region9: #{_unnamed_function_.4} parent=5 // pred_check
      _
    $region10: #{_unnamed_function_.4} parent=5 // pred_check_branch
      %204 = sbr.rel (%p201) target = $region12
    $region11: #{_unnamed_function_.4} parent=5 // pred_region
      %s205 = ssub.s32 %s13, 1
      // Predicated region
      $region13: #{_unnamed_function_.4} parent=11 // pred_check
        %p206 = pneg %p60
      $region14: #{_unnamed_function_.4} parent=11 // pred_check_branch
        %208 = sbr.rel (%p206) target = $region16
      $region15: #{_unnamed_function_.4} parent=11 // pred_region
        _
      $region16: #{_unnamed_function_.4} parent=11 // pred_fallthru
        _
      // Predicated region
      $region17: #{_unnamed_function_.4} parent=11 // pred_check
        %p209 = pneg %p81
      $region18: #{_unnamed_function_.4} parent=11 // pred_check_branch
        %211 = sbr.rel (%p209) target = $region20
      $region19: #{_unnamed_function_.4} parent=11 // pred_region
        _
      $region20: #{_unnamed_function_.4} parent=11 // pred_fallthru
        _
      // Predicated region
      $region21: #{_unnamed_function_.4} parent=11 // pred_check
        %p212 = pneg %p102
      $region22: #{_unnamed_function_.4} parent=11 // pred_check_branch
        %214 = sbr.rel (%p212) target = $region24
      $region23: #{_unnamed_function_.4} parent=11 // pred_region
        _
      $region24: #{_unnamed_function_.4} parent=11 // pred_fallthru
        _
      // Predicated region
      $region25: #{_unnamed_function_.4} parent=11 // pred_check
        %p215 = pneg %p123
      $region26: #{_unnamed_function_.4} parent=11 // pred_check_branch
        %217 = sbr.rel (%p215) target = $region28
      $region27: #{_unnamed_function_.4} parent=11 // pred_region
        _
      $region28: #{_unnamed_function_.4} parent=11 // pred_fallthru
        _
      // Predicated region
      $region29: #{_unnamed_function_.4} parent=11 // pred_check
        %p218 = pneg %p144
      $region30: #{_unnamed_function_.4} parent=11 // pred_check_branch
        %220 = sbr.rel (%p218) target = $region32
      $region31: #{_unnamed_function_.4} parent=11 // pred_region
        _
      $region32: #{_unnamed_function_.4} parent=11 // pred_fallthru
        _
      // Predicated region
      $region33: #{_unnamed_function_.4} parent=11 // pred_check
        %p221 = pneg %p165
      $region34: #{_unnamed_function_.4} parent=11 // pred_check_branch
        %223 = sbr.rel (%p221) target = $region36
      $region35: #{_unnamed_function_.4} parent=11 // pred_region
        _
      $region36: #{_unnamed_function_.4} parent=11 // pred_fallthru
        _
    $region12: #{_unnamed_function_.4} parent=5 // pred_fallthru
      _
    %p224 = scmp.lt.s32.totalorder %s13, 2
    // Predicated region
    $region37: #{_unnamed_function_.4} parent=5 // pred_check
      %p225 = pneg %p224
    $region38: #{_unnamed_function_.4} parent=5 // pred_check_branch
      %227 = sbr.rel (%p225) target = $region40
    $region39: #{_unnamed_function_.4} parent=5 // pred_region
      // Predicated region
      $region41: #{_unnamed_function_.4} parent=39 // pred_check
        %p228 = pneg %p33
      $region42: #{_unnamed_function_.4} parent=39 // pred_check_branch
        %230 = sbr.rel (%p228) target = $region44
      $region43: #{_unnamed_function_.4} parent=39 // pred_region
        %p231 = scmp.lt.s32.totalorder %s13, 1
        %s232 = scalar_select %p231, %s13, 1
        %s233 = smul.addr %s232, 4
        %s234 = smul.addr %s233, 2
        %s235 = scalar_lea.vmem %s0, %s234
      $region44: #{_unnamed_function_.4} parent=39 // pred_fallthru
        _
    $region40: #{_unnamed_function_.4} parent=5 // pred_fallthru
      _
    %p236 = scmp.le.s32.totalorder 1, %s13
    %p237 = scmp.lt.s32.totalorder %s13, 3
    %p238 = pnand %p236, %p237
    %p239 = pneg %p238
    // Predicated region
    $region45: #{_unnamed_function_.4} parent=5 // pred_check
      _
    $region46: #{_unnamed_function_.4} parent=5 // pred_check_branch
      %241 = sbr.rel (%p238) target = $region48
    $region47: #{_unnamed_function_.4} parent=5 // pred_region
      %s242 = ssub.s32 %s13, 1
      %p243 = scmp.lt.s32.totalorder %s18, 1
      %s244 = scalar_select %p243, %s18, 1
      %s245 = smul.addr %s244, 4
      %s246 = smul.addr %s245, 2
      %s247 = scalar_lea.vmem %s0, %s246
      %p248 = pneg %p39
      %p249 = pneg %p36
      %p250 = pneg %p60
      %p251 = pneg %p57
      %p252 = pneg %p81
      %p253 = pneg %p78
      %p254 = pneg %p102
      %p255 = pneg %p99
      %p256 = pneg %p123
      %p257 = pneg %p120
      %p258 = pneg %p144
      %p259 = pneg %p141
      %p260 = pneg %p165
      %p261 = pneg %p162
      %p262 = pneg %p191
      %p263 = pneg %p188
      %p264 = scmp.lt.s32.totalorder %s18, 1
      %s265 = scalar_select %p264, %s18, 1
      %s266 = smul.addr %s265, 2
      %s267 = smul.addr %s266, 4
      %s268 = scalar_lea.vmem %s7, %s267
      %p269 = scmp.lt.s32.totalorder %s18, 1
      %s270 = scalar_select %p269, %s18, 1
      %s271 = smul.addr %s270, 4
      %s272 = smul.addr %s271, 2
      %s273 = scalar_lea.vmem %s0, %s272
      %p274 = scmp.lt.s32.totalorder %s18, 1
      %s275 = scalar_select %p274, %s18, 1
      %s276 = smul.addr %s275, 2
      %s277 = smul.addr %s276, 4
      %s278 = scalar_lea.vmem %s7, %s277
      %v280 = vld [vmem:[%s273] sm:$0x3]
      %v281 = vld [vmem:[%s273 + $0x2] sm:$0x3]
      %v282 = vld [vmem:[%s273 + $0x4] sm:$0x3]
      %v283 = vld [vmem:[%s273 + $0x6] sm:$0x3]
      %vm284 = vcmask 256000
      %vm285 = vsmask.f32 2304
      %vm286 = vmand %vm284, %vm285
      %v287 = vld [vmem:[#allocation2] sm:$0x7]
      %v288 = vsel %vm286, 0, %v287
      %289 = vst [vmem:[#allocation2] sm:$0x7] %v288
      %v295 = vunpack.c.l.s4 1983009808
      %v296 = vunpack.c.0.s8 %v295
      %v297 = vlaneseq
      %v298 = vshrl.u32 %v297, 7
      %v299 = vsub.s32 %v296, %v298
      %v300 = vrot.slane %v280, %v299
      %v302 = vunpack.c.l.s4 1983009808
      %v303 = vunpack.c.0.s8 %v302
      %v304 = vlaneseq
      %v305 = vshrl.u32 %v304, 7
      %v306 = vsub.s32 %v303, %v305
      %v307 = vrot.slane %v281, %v306
      %v309 = vunpack.c.l.s4 1983009808
      %v310 = vunpack.c.0.s8 %v309
      %v311 = vlaneseq
      %v312 = vshrl.u32 %v311, 7
      %v313 = vsub.s32 %v310, %v312
      %v314 = vrot.slane %v282, %v313
      %v316 = vunpack.c.l.s4 1983009808
      %v317 = vunpack.c.0.s8 %v316
      %v318 = vlaneseq
      %v319 = vshrl.u32 %v318, 7
      %v320 = vsub.s32 %v317, %v319
      %v321 = vrot.slane %v283, %v320
      %v323 = vshrl.u32 %v300, 16
      %v325 = vrot.slane %v323, 7
      %v326 = vshll.u32 %v300, 16
      %v328 = vor.u32 %v325, %v326
      %v330 = vshrl.u32 %v307, 16
      %v332 = vrot.slane %v330, 7
      %v333 = vshll.u32 %v307, 16
      %v335 = vor.u32 %v332, %v333
      %v337 = vshrl.u32 %v314, 16
      %v339 = vrot.slane %v337, 7
      %v340 = vshll.u32 %v314, 16
      %v342 = vor.u32 %v339, %v340
      %v344 = vshrl.u32 %v321, 16
      %v346 = vrot.slane %v344, 7
      %v347 = vshll.u32 %v321, 16
      %v349 = vor.u32 %v346, %v347
      %vm354 = vcmask 1040384
      %vm355 = vsmask.f32 256
      %vm356 = vmand %vm354, %vm355
      %v357 = vsel %vm356, 0, %v328
      %v358 = vsel %vm356, 0, %v335
      %v359 = vsel %vm356, 0, %v342
      %v360 = vsel %vm356, 0, %v349
      %s361 = scalar_lea.vmem [#allocation2], 4
      %v362 = vld [vmem:[%s361] sm:$0x7]
      %v363 = vsel %vm286, %v357, %v362
      %364 = vst [vmem:[%s361] sm:$0x7] %v363
      %v365 = vld [vmem:[%s361 + $0x4] sm:$0x7]
      %v366 = vsel %vm286, %v358, %v365
      %367 = vst [vmem:[%s361 + $0x4] sm:$0x7] %v366
      %v368 = vld [vmem:[%s361 + $0x8] sm:$0x7]
      %v369 = vsel %vm286, %v359, %v368
      %370 = vst [vmem:[%s361 + $0x8] sm:$0x7] %v369
      %v371 = vld [vmem:[%s361 + $0xc] sm:$0x7]
      %v372 = vsel %vm286, %v360, %v371
      %373 = vst [vmem:[%s361 + $0xc] sm:$0x7] %v372
      %v374 = vld [vmem:[#allocation2] sm:$0x3]
      %v375 = vld [vmem:[#allocation2 + $0x4] sm:$0x3]
      %v376 = vld [vmem:[#allocation2 + $0x8] sm:$0x3]
      %v377 = vld [vmem:[#allocation2 + $0xc] sm:$0x3]
      %v378 = vld [vmem:[#allocation2] sm:$0x7]
      %v379 = vld [vmem:[#allocation2 + $0x4] sm:$0x7]
      %v380 = vld [vmem:[#allocation2 + $0x8] sm:$0x7]
      %v381 = vld [vmem:[#allocation2 + $0xc] sm:$0x7]
      %v387 = vunpack.c.l.s4 1983009808
      %v388 = vunpack.c.0.s8 %v387
      %v389 = vlaneseq
      %v390 = vshrl.u32 %v389, 7
      %v391 = vsub.s32 %v388, %v390
      %v392 = vrot.slane %v378, %v391
      %v393 = vcombine.high %v392, %v392
      %v395 = vunpack.c.l.s4 1983009808
      %v396 = vunpack.c.0.s8 %v395
      %v397 = vlaneseq
      %v398 = vshrl.u32 %v397, 7
      %v399 = vsub.s32 %v396, %v398
      %v400 = vrot.slane %v379, %v399
      %v401 = vcombine.high %v400, %v400
      %v403 = vunpack.c.l.s4 1983009808
      %v404 = vunpack.c.0.s8 %v403
      %v405 = vlaneseq
      %v406 = vshrl.u32 %v405, 7
      %v407 = vsub.s32 %v404, %v406
      %v408 = vrot.slane %v380, %v407
      %v409 = vcombine.high %v408, %v408
      %v411 = vunpack.c.l.s4 1983009808
      %v412 = vunpack.c.0.s8 %v411
      %v413 = vlaneseq
      %v414 = vshrl.u32 %v413, 7
      %v415 = vsub.s32 %v412, %v414
      %v416 = vrot.slane %v381, %v415
      %v417 = vcombine.high %v416, %v416
      %vm418 = vsmask.f32 1280
      %vm419 = vsmask.f32 3336
      %vm420 = vmor %vm418, %vm419
      %vm421 = vsmask.f32 5392
      %vm422 = vmor %vm420, %vm421
      %vm423 = vsmask.f32 7448
      %vm424 = vmor %vm422, %vm423
      %v426 = vshrl.u32 %v392, 16
      %v428 = vrot.slane %v426, 6
      %v429 = vshll.u32 %v392, 16
      %v431 = vrot.slane %v429, 7
      %v432 = vor.u32 %v428, %v431
      %v433 = vrot.slane %v432, 2
      %v435 = vshll.u32 %v393, 16
      %v437 = vrot.slane %v435, 7
      %v438 = vsel %vm424, %v433, %v437
      %v440 = vshrl.u32 %v400, 16
      %v442 = vrot.slane %v440, 6
      %v443 = vshll.u32 %v400, 16
      %v445 = vrot.slane %v443, 7
      %v446 = vor.u32 %v442, %v445
      %v447 = vrot.slane %v446, 2
      %v449 = vshll.u32 %v401, 16
      %v451 = vrot.slane %v449, 7
      %v452 = vsel %vm424, %v447, %v451
      %v454 = vshrl.u32 %v408, 16
      %v456 = vrot.slane %v454, 6
      %v457 = vshll.u32 %v408, 16
      %v459 = vrot.slane %v457, 7
      %v460 = vor.u32 %v456, %v459
      %v461 = vrot.slane %v460, 2
      %v463 = vshll.u32 %v409, 16
      %v465 = vrot.slane %v463, 7
      %v466 = vsel %vm424, %v461, %v465
      %v468 = vshrl.u32 %v416, 16
      %v470 = vrot.slane %v468, 6
      %v471 = vshll.u32 %v416, 16
      %v473 = vrot.slane %v471, 7
      %v474 = vor.u32 %v470, %v473
      %v475 = vrot.slane %v474, 2
      %v477 = vshll.u32 %v417, 16
      %v479 = vrot.slane %v477, 7
      %v480 = vsel %vm424, %v475, %v479
      %v481 = vld [vmem:[%s361] sm:$0x3]
      %v482 = vld [vmem:[%s361 + $0x4] sm:$0x3]
      %v483 = vld [vmem:[%s361 + $0x8] sm:$0x3]
      %v484 = vld [vmem:[%s361 + $0xc] sm:$0x3]
      %v485 = vld [vmem:[%s361] sm:$0x7]
      %v486 = vld [vmem:[%s361 + $0x4] sm:$0x7]
      %v487 = vld [vmem:[%s361 + $0x8] sm:$0x7]
      %v488 = vld [vmem:[%s361 + $0xc] sm:$0x7]
      %v494 = vunpack.c.l.s4 1983009808
      %v495 = vunpack.c.0.s8 %v494
      %v496 = vlaneseq
      %v497 = vshrl.u32 %v496, 7
      %v498 = vsub.s32 %v495, %v497
      %v499 = vrot.slane %v485, %v498
      %v500 = vcombine.high %v499, %v499
      %v502 = vunpack.c.l.s4 1983009808
      %v503 = vunpack.c.0.s8 %v502
      %v504 = vlaneseq
      %v505 = vshrl.u32 %v504, 7
      %v506 = vsub.s32 %v503, %v505
      %v507 = vrot.slane %v486, %v506
      %v508 = vcombine.high %v507, %v507
      %v510 = vunpack.c.l.s4 1983009808
      %v511 = vunpack.c.0.s8 %v510
      %v512 = vlaneseq
      %v513 = vshrl.u32 %v512, 7
      %v514 = vsub.s32 %v511, %v513
      %v515 = vrot.slane %v487, %v514
      %v516 = vcombine.high %v515, %v515
      %v518 = vunpack.c.l.s4 1983009808
      %v519 = vunpack.c.0.s8 %v518
      %v520 = vlaneseq
      %v521 = vshrl.u32 %v520, 7
      %v522 = vsub.s32 %v519, %v521
      %v523 = vrot.slane %v488, %v522
      %v524 = vcombine.high %v523, %v523
      %v526 = vshrl.u32 %v499, 16
      %v528 = vrot.slane %v526, 6
      %v529 = vshll.u32 %v499, 16
      %v531 = vrot.slane %v529, 7
      %v532 = vor.u32 %v528, %v531
      %v533 = vrot.slane %v532, 2
      %v535 = vshll.u32 %v500, 16
      %v537 = vrot.slane %v535, 7
      %v538 = vsel %vm424, %v533, %v537
      %v540 = vshrl.u32 %v507, 16
      %v542 = vrot.slane %v540, 6
      %v543 = vshll.u32 %v507, 16
      %v545 = vrot.slane %v543, 7
      %v546 = vor.u32 %v542, %v545
      %v547 = vrot.slane %v546, 2
      %v549 = vshll.u32 %v508, 16
      %v551 = vrot.slane %v549, 7
      %v552 = vsel %vm424, %v547, %v551
      %v554 = vshrl.u32 %v515, 16
      %v556 = vrot.slane %v554, 6
      %v557 = vshll.u32 %v515, 16
      %v559 = vrot.slane %v557, 7
      %v560 = vor.u32 %v556, %v559
      %v561 = vrot.slane %v560, 2
      %v563 = vshll.u32 %v516, 16
      %v565 = vrot.slane %v563, 7
      %v566 = vsel %vm424, %v561, %v565
      %v568 = vshrl.u32 %v523, 16
      %v570 = vrot.slane %v568, 6
      %v571 = vshll.u32 %v523, 16
      %v573 = vrot.slane %v571, 7
      %v574 = vor.u32 %v570, %v573
      %v575 = vrot.slane %v574, 2
      %v577 = vshll.u32 %v524, 16
      %v579 = vrot.slane %v577, 7
      %v580 = vsel %vm424, %v575, %v579
      %v585 = vcombine.low %v374, %v375
      %v586 = vcombine.low %v376, %v377
      %v588 = vunpack.c.l.s4 1983009808
      %v589 = vunpack.c.0.s8 %v588
      %v590 = vlaneseq
      %v591 = vshrl.u32 %v590, 7
      %v592 = vsub.s32 %v589, %v591
      %v593 = vrot.slane %v585, %v592
      %v595 = vunpack.c.l.s4 1983009808
      %v596 = vunpack.c.0.s8 %v595
      %v597 = vlaneseq
      %v598 = vshrl.u32 %v597, 7
      %v599 = vsub.s32 %v596, %v598
      %v600 = vrot.slane %v586, %v599
      %v601 = vcombine.low %v593, %v600
      %v602 = vcombine.low %v438, %v452
      %v603 = vcombine.low %v466, %v480
      %v605 = vunpack.c.l.s4 1983009808
      %v606 = vunpack.c.0.s8 %v605
      %v607 = vlaneseq
      %v608 = vshrl.u32 %v607, 7
      %v609 = vsub.s32 %v606, %v608
      %v610 = vrot.slane %v602, %v609
      %v612 = vunpack.c.l.s4 1983009808
      %v613 = vunpack.c.0.s8 %v612
      %v614 = vlaneseq
      %v615 = vshrl.u32 %v614, 7
      %v616 = vsub.s32 %v613, %v615
      %v617 = vrot.slane %v603, %v616
      %v618 = vcombine.low %v610, %v617
      %619 = vrot.lane.b32.xlu0 %v618, 32
      %v620 = vpop.permute.xlu0 %619
      %v625 = vcombine.low %v481, %v482
      %v626 = vcombine.low %v483, %v484
      %v628 = vunpack.c.l.s4 1983009808
      %v629 = vunpack.c.0.s8 %v628
      %v630 = vlaneseq
      %v631 = vshrl.u32 %v630, 7
      %v632 = vsub.s32 %v629, %v631
      %v633 = vrot.slane %v625, %v632
      %v635 = vunpack.c.l.s4 1983009808
      %v636 = vunpack.c.0.s8 %v635
      %v637 = vlaneseq
      %v638 = vshrl.u32 %v637, 7
      %v639 = vsub.s32 %v636, %v638
      %v640 = vrot.slane %v626, %v639
      %v641 = vcombine.low %v633, %v640
      %642 = vrot.lane.b32.xlu0 %v641, 64
      %v643 = vpop.permute.xlu0 %642
      %v644 = vcombine.low %v538, %v552
      %v645 = vcombine.low %v566, %v580
      %v647 = vunpack.c.l.s4 1983009808
      %v648 = vunpack.c.0.s8 %v647
      %v649 = vlaneseq
      %v650 = vshrl.u32 %v649, 7
      %v651 = vsub.s32 %v648, %v650
      %v652 = vrot.slane %v644, %v651
      %v654 = vunpack.c.l.s4 1983009808
      %v655 = vunpack.c.0.s8 %v654
      %v656 = vlaneseq
      %v657 = vshrl.u32 %v656, 7
      %v658 = vsub.s32 %v655, %v657
      %v659 = vrot.slane %v645, %v658
      %v660 = vcombine.low %v652, %v659
      %661 = vrot.lane.b32.xlu0 %v660, 96
      %v662 = vpop.permute.xlu0 %661
      %vm663 = vcmask 261120
      %v666 = vsel %vm663, %v601, %v620
      %vm667 = vcmask 523264
      %v669 = vsel %vm667, %v666, %v643
      %vm670 = vcmask 785408
      %v672 = vsel %vm670, %v669, %v662
      %v674 = vld [vmem:[%s1] sm:$0xf]
      %v675 = vld [vmem:[%s1 + $0x4] sm:$0xf]
      %v676 = vld [vmem:[%s1 + $0x8] sm:$0xf]
      %v677 = vld [vmem:[%s1 + $0xc] sm:$0xf]
      %v678 = vld [vmem:[%s1 + $0x10] sm:$0xf]
      %v679 = vld [vmem:[%s1 + $0x14] sm:$0xf]
      %v680 = vld [vmem:[%s1 + $0x18] sm:$0xf]
      %v681 = vld [vmem:[%s1 + $0x1c] sm:$0xf]
      %v682 = vld [vmem:[%s1 + $0x20] sm:$0xf]
      %v683 = vld [vmem:[%s1 + $0x24] sm:$0xf]
      %v684 = vld [vmem:[%s1 + $0x28] sm:$0xf]
      %v685 = vld [vmem:[%s1 + $0x2c] sm:$0xf]
      %v686 = vld [vmem:[%s1 + $0x30] sm:$0xf]
      %v687 = vld [vmem:[%s1 + $0x34] sm:$0xf]
      %v688 = vld [vmem:[%s1 + $0x38] sm:$0xf]
      %v689 = vld [vmem:[%s1 + $0x3c] sm:$0xf]
      %v690 = vld [vmem:[%s2] sm:$0x1]
      %v692 = vlaneseq
      %v693 = vshrl.u32 %v692, 7
      %v694 = vsub.s32 0, %v693
      %v695 = vrot.slane %v690, %v694
      %v713 = vunpack.c.l.b16 %v674
      %v714 = vunpack.c.l.b16 %v675
      %v715 = vunpack.c.l.b16 %v676
      %v716 = vunpack.c.l.b16 %v677
      %v717 = vunpack.c.l.b16 %v678
      %v718 = vunpack.c.l.b16 %v679
      %v719 = vunpack.c.l.b16 %v680
      %v720 = vunpack.c.l.b16 %v681
      %v721 = vunpack.c.l.b16 %v682
      %v722 = vunpack.c.l.b16 %v683
      %v723 = vunpack.c.l.b16 %v684
      %v724 = vunpack.c.l.b16 %v685
      %v725 = vunpack.c.l.b16 %v686
      %v726 = vunpack.c.l.b16 %v687
      %v727 = vunpack.c.l.b16 %v688
      %v728 = vunpack.c.l.b16 %v689
      %v729 = vpack.c.b16 %v714, %v713
      %v730 = vpack.c.b16 %v716, %v715
      %v731 = vpack.c.b16 %v718, %v717
      %v732 = vpack.c.b16 %v720, %v719
      %v733 = vpack.c.b16 %v722, %v721
      %v734 = vpack.c.b16 %v724, %v723
      %v735 = vpack.c.b16 %v726, %v725
      %v736 = vpack.c.b16 %v728, %v727
      %745 = vmatprep.subr.bf16.mxu0 0
      %746 = vmatpush1.bf16.msra.mxu0 %v729
      %747 = vmatprep.subr.bf16.mxu0 0
      %748 = vmatpush1.bf16.msra.mxu0 %v730
      %749 = vmatprep.subr.bf16.mxu0 0
      %750 = vmatpush1.bf16.msra.mxu0 %v731
      %751 = vmatprep.subr.bf16.mxu0 0
      %752 = vmatpush1.bf16.msra.mxu0 %v732
      %753 = vmatprep.subr.bf16.mxu0 0
      %754 = vmatpush1.bf16.msra.mxu0 %v733
      %755 = vmatprep.subr.bf16.mxu0 0
      %756 = vmatpush1.bf16.msra.mxu0 %v734
      %757 = vmatprep.subr.bf16.mxu0 0
      %758 = vmatpush1.bf16.msra.mxu0 %v735
      %759 = vmatprep.subr.bf16.mxu0 0
      %760 = vmatpush1.bf16.msra.mxu0 %v736
      %761 = vmatprep.subr.bf16.mxu0 0
      %762 = vmatpush1.bf16.msra.mxu0 0
      %763 = vmatprep.subr.bf16.mxu0 0
      %764 = vmatpush1.bf16.msra.mxu0 0
      %765 = vmatprep.subr.bf16.mxu0 0
      %766 = vmatpush1.bf16.msra.mxu0 0
      %767 = vmatprep.subr.bf16.mxu0 0
      %768 = vmatpush1.bf16.msra.mxu0 0
      %769 = vmatprep.subr.bf16.mxu0 0
      %770 = vmatpush1.bf16.msra.mxu0 0
      %771 = vmatprep.subr.bf16.mxu0 0
      %772 = vmatpush1.bf16.msra.mxu0 0
      %773 = vmatprep.subr.bf16.mxu0 0
      %774 = vmatpush1.bf16.msra.mxu0 0
      %775 = vmatprep.subr.bf16.mxu0 0
      %776 = vmatpush1.bf16.msra.mxu0 0
      %777 = vmatprep.mubr.bf16.mxu0 0
      %778 = vmatmul.mubr.bf16.gmra.mrb[0].mxu0 %v672
      %v779 = vpop.f32.mrb[0].mxu0
      %v780 = vadd.f32 %v695, %v779
      %v781 = vpop.f32.mrb[0].mxu0
      %v782 = vpop.f32.mrb[0].mxu0
      %v783 = vadd.f32 %v695, %v782
      %v784 = vpop.f32.mrb[0].mxu0
      %785 = vdwg.mxu0
      %vm786 = vcmp.gt.f32.partialorder %v780, 0.0
      %vm787 = vcmp.gt.f32.partialorder %v783, 0.0
      %v788 = vmul.f32 %v780, 0.01
      %v789 = vmul.f32 %v783, 0.01
      %v790 = vsel %vm786, %v780, %v788
      %v791 = vsel %vm787, %v783, %v789
      %v792 = vpack.c.bf16 %v791, %v790
      %v794 = vcombine.high %v792, %v792
      %v796 = vunpack.c.l.s4 1983009808
      %v797 = vunpack.c.0.s8 %v796
      %v798 = vlaneseq
      %v799 = vshrl.u32 %v798, 7
      %v800 = vsub.s32 %v797, %v799
      %v801 = vrot.slane %v792, %v800
      %v803 = vunpack.c.l.s4 1983009808
      %v804 = vunpack.c.0.s8 %v803
      %v805 = vlaneseq
      %v806 = vshrl.u32 %v805, 7
      %v807 = vsub.s32 %v804, %v806
      %v808 = vrot.slane %v794, %v807
      %v809 = vcombine.high %v801, %v801
      %v810 = vcombine.high %v808, %v808
      %vm811 = vcmask 124928
      %812 = vst.msk [vmem:[#allocation3] sm:$0x7] %vm811, 0
      %s813 = scalar_lea.vmem [#allocation3], 20
      %814 = vst.msk [vmem:[%s813] sm:$0x7] %vm811, 0
      %v816 = vunpack.c.l.s4 1983009808
      %v817 = vunpack.c.0.s8 %v816
      %v818 = vlaneseq
      %v819 = vshrl.u32 %v818, 7
      %v820 = vsub.s32 %v817, %v819
      %v821 = vrot.slane %v801, %v820
      %v823 = vunpack.c.l.s4 1983009808
      %v824 = vunpack.c.0.s8 %v823
      %v825 = vlaneseq
      %v826 = vshrl.u32 %v825, 7
      %v827 = vsub.s32 %v824, %v826
      %v828 = vrot.slane %v809, %v827
      %v830 = vunpack.c.l.s4 1983009808
      %v831 = vunpack.c.0.s8 %v830
      %v832 = vlaneseq
      %v833 = vshrl.u32 %v832, 7
      %v834 = vsub.s32 %v831, %v833
      %v835 = vrot.slane %v808, %v834
      %v837 = vunpack.c.l.s4 1983009808
      %v838 = vunpack.c.0.s8 %v837
      %v839 = vlaneseq
      %v840 = vshrl.u32 %v839, 7
      %v841 = vsub.s32 %v838, %v840
      %v842 = vrot.slane %v810, %v841
      %v844 = vshrl.u32 %v821, 16
      %v846 = vrot.slane %v844, 7
      %v847 = vshll.u32 %v821, 16
      %v849 = vor.u32 %v846, %v847
      %v851 = vshrl.u32 %v828, 16
      %v853 = vrot.slane %v851, 7
      %v854 = vshll.u32 %v828, 16
      %v856 = vor.u32 %v853, %v854
      %v858 = vshrl.u32 %v835, 16
      %v860 = vrot.slane %v858, 7
      %v861 = vshll.u32 %v835, 16
      %v863 = vor.u32 %v860, %v861
      %v865 = vshrl.u32 %v842, 16
      %v867 = vrot.slane %v865, 7
      %v868 = vshll.u32 %v842, 16
      %v870 = vor.u32 %v867, %v868
      %v875 = vsel %vm356, 0, %v849
      %v876 = vsel %vm356, 0, %v856
      %v877 = vsel %vm356, 0, %v863
      %v878 = vsel %vm356, 0, %v870
      %vm879 = vcmask 1042432
      %vm880 = vmand %vm879, %vm285
      %v881 = vsel %vm880, %v875, 0
      %v882 = vsel %vm880, %v876, 0
      %v883 = vsel %vm880, %v877, 0
      %v884 = vsel %vm880, %v878, 0
      %s885 = scalar_lea.vmem [#allocation3], 4
      %886 = vst.msk [vmem:[%s885] sm:$0x7] %vm811, %v881
      %887 = vst.msk [vmem:[%s885 + $0x4] sm:$0x7] %vm811, %v882
      %888 = vst.msk [vmem:[%s885 + $0x8] sm:$0x7] %vm811, %v883
      %889 = vst.msk [vmem:[%s885 + $0xc] sm:$0x7] %vm811, %v884
      %v890 = vld [vmem:[#allocation3] sm:$0x3]
      %v891 = vld [vmem:[#allocation3 + $0x4] sm:$0x3]
      %v892 = vld [vmem:[#allocation3 + $0x8] sm:$0x3]
      %v893 = vld [vmem:[#allocation3 + $0xc] sm:$0x3]
      %v894 = vld [vmem:[#allocation3] sm:$0x7]
      %v895 = vld [vmem:[#allocation3 + $0x4] sm:$0x7]
      %v896 = vld [vmem:[#allocation3 + $0x8] sm:$0x7]
      %v897 = vld [vmem:[#allocation3 + $0xc] sm:$0x7]
      %v903 = vunpack.c.l.s4 1983009808
      %v904 = vunpack.c.0.s8 %v903
      %v905 = vlaneseq
      %v906 = vshrl.u32 %v905, 7
      %v907 = vsub.s32 %v904, %v906
      %v908 = vrot.slane %v894, %v907
      %v909 = vcombine.high %v908, %v908
      %v911 = vunpack.c.l.s4 1983009808
      %v912 = vunpack.c.0.s8 %v911
      %v913 = vlaneseq
      %v914 = vshrl.u32 %v913, 7
      %v915 = vsub.s32 %v912, %v914
      %v916 = vrot.slane %v895, %v915
      %v917 = vcombine.high %v916, %v916
      %v919 = vunpack.c.l.s4 1983009808
      %v920 = vunpack.c.0.s8 %v919
      %v921 = vlaneseq
      %v922 = vshrl.u32 %v921, 7
      %v923 = vsub.s32 %v920, %v922
      %v924 = vrot.slane %v896, %v923
      %v925 = vcombine.high %v924, %v924
      %v927 = vunpack.c.l.s4 1983009808
      %v928 = vunpack.c.0.s8 %v927
      %v929 = vlaneseq
      %v930 = vshrl.u32 %v929, 7
      %v931 = vsub.s32 %v928, %v930
      %v932 = vrot.slane %v897, %v931
      %v933 = vcombine.high %v932, %v932
      %v935 = vshrl.u32 %v908, 16
      %v937 = vrot.slane %v935, 6
      %v938 = vshll.u32 %v908, 16
      %v940 = vrot.slane %v938, 7
      %v941 = vor.u32 %v937, %v940
      %v942 = vrot.slane %v941, 2
      %v944 = vshll.u32 %v909, 16
      %v946 = vrot.slane %v944, 7
      %v947 = vsel %vm424, %v942, %v946
      %v949 = vshrl.u32 %v916, 16
      %v951 = vrot.slane %v949, 6
      %v952 = vshll.u32 %v916, 16
      %v954 = vrot.slane %v952, 7
      %v955 = vor.u32 %v951, %v954
      %v956 = vrot.slane %v955, 2
      %v958 = vshll.u32 %v917, 16
      %v960 = vrot.slane %v958, 7
      %v961 = vsel %vm424, %v956, %v960
      %v963 = vshrl.u32 %v924, 16
      %v965 = vrot.slane %v963, 6
      %v966 = vshll.u32 %v924, 16
      %v968 = vrot.slane %v966, 7
      %v969 = vor.u32 %v965, %v968
      %v970 = vrot.slane %v969, 2
      %v972 = vshll.u32 %v925, 16
      %v974 = vrot.slane %v972, 7
      %v975 = vsel %vm424, %v970, %v974
      %v977 = vshrl.u32 %v932, 16
      %v979 = vrot.slane %v977, 6
      %v980 = vshll.u32 %v932, 16
      %v982 = vrot.slane %v980, 7
      %v983 = vor.u32 %v979, %v982
      %v984 = vrot.slane %v983, 2
      %v986 = vshll.u32 %v933, 16
      %v988 = vrot.slane %v986, 7
      %v989 = vsel %vm424, %v984, %v988
      %v990 = vld [vmem:[#allocation3] sm:$0x6]
      %v991 = vld [vmem:[#allocation3 + $0x4] sm:$0x6]
      %v992 = vld [vmem:[#allocation3 + $0x8] sm:$0x6]
      %v993 = vld [vmem:[#allocation3 + $0xc] sm:$0x6]
      %v999 = vunpack.c.l.s4 1983009808
      %v1000 = vunpack.c.0.s8 %v999
      %v1001 = vlaneseq
      %v1002 = vshrl.u32 %v1001, 7
      %v1003 = vsub.s32 %v1000, %v1002
      %v1004 = vrot.slane %v990, %v1003
      %v1005 = vcombine.high %v1004, %v1004
      %v1007 = vunpack.c.l.s4 1983009808
      %v1008 = vunpack.c.0.s8 %v1007
      %v1009 = vlaneseq
      %v1010 = vshrl.u32 %v1009, 7
      %v1011 = vsub.s32 %v1008, %v1010
      %v1012 = vrot.slane %v991, %v1011
      %v1013 = vcombine.high %v1012, %v1012
      %v1015 = vunpack.c.l.s4 1983009808
      %v1016 = vunpack.c.0.s8 %v1015
      %v1017 = vlaneseq
      %v1018 = vshrl.u32 %v1017, 7
      %v1019 = vsub.s32 %v1016, %v1018
      %v1020 = vrot.slane %v992, %v1019
      %v1021 = vcombine.high %v1020, %v1020
      %v1023 = vunpack.c.l.s4 1983009808
      %v1024 = vunpack.c.0.s8 %v1023
      %v1025 = vlaneseq
      %v1026 = vshrl.u32 %v1025, 7
      %v1027 = vsub.s32 %v1024, %v1026
      %v1028 = vrot.slane %v993, %v1027
      %v1029 = vcombine.high %v1028, %v1028
      %vm1030 = vcmask 1042434
      %vm1031 = vmor %vm354, %vm1030
      %vm1032 = vcmask 1044484
      %vm1033 = vmor %vm1031, %vm1032
      %vm1034 = vcmask 1046534
      %vm1035 = vmor %vm1033, %vm1034
      %v1036 = vrot.slane %v1004, 7
      %v1037 = vrot.slane %v1036, 2
      %v1038 = vrot.slane %v1005, 7
      %v1039 = vsel %vm1035, %v1037, %v1038
      %v1040 = vrot.slane %v1012, 7
      %v1041 = vrot.slane %v1040, 2
      %v1042 = vrot.slane %v1013, 7
      %v1043 = vsel %vm1035, %v1041, %v1042
      %v1044 = vrot.slane %v1020, 7
      %v1045 = vrot.slane %v1044, 2
      %v1046 = vrot.slane %v1021, 7
      %v1047 = vsel %vm1035, %v1045, %v1046
      %v1048 = vrot.slane %v1028, 7
      %v1049 = vrot.slane %v1048, 2
      %v1050 = vrot.slane %v1029, 7
      %v1051 = vsel %vm1035, %v1049, %v1050
      %v1052 = vld [vmem:[%s885] sm:$0x3]
      %v1053 = vld [vmem:[%s885 + $0x4] sm:$0x3]
      %v1054 = vld [vmem:[%s885 + $0x8] sm:$0x3]
      %v1055 = vld [vmem:[%s885 + $0xc] sm:$0x3]
      %v1056 = vld [vmem:[%s885] sm:$0x7]
      %v1057 = vld [vmem:[%s885 + $0x4] sm:$0x7]
      %v1058 = vld [vmem:[%s885 + $0x8] sm:$0x7]
      %v1059 = vld [vmem:[%s885 + $0xc] sm:$0x7]
      %v1065 = vunpack.c.l.s4 1983009808
      %v1066 = vunpack.c.0.s8 %v1065
      %v1067 = vlaneseq
      %v1068 = vshrl.u32 %v1067, 7
      %v1069 = vsub.s32 %v1066, %v1068
      %v1070 = vrot.slane %v1056, %v1069
      %v1071 = vcombine.high %v1070, %v1070
      %v1073 = vunpack.c.l.s4 1983009808
      %v1074 = vunpack.c.0.s8 %v1073
      %v1075 = vlaneseq
      %v1076 = vshrl.u32 %v1075, 7
      %v1077 = vsub.s32 %v1074, %v1076
      %v1078 = vrot.slane %v1057, %v1077
      %v1079 = vcombine.high %v1078, %v1078
      %v1081 = vunpack.c.l.s4 1983009808
      %v1082 = vunpack.c.0.s8 %v1081
      %v1083 = vlaneseq
      %v1084 = vshrl.u32 %v1083, 7
      %v1085 = vsub.s32 %v1082, %v1084
      %v1086 = vrot.slane %v1058, %v1085
      %v1087 = vcombine.high %v1086, %v1086
      %v1089 = vunpack.c.l.s4 1983009808
      %v1090 = vunpack.c.0.s8 %v1089
      %v1091 = vlaneseq
      %v1092 = vshrl.u32 %v1091, 7
      %v1093 = vsub.s32 %v1090, %v1092
      %v1094 = vrot.slane %v1059, %v1093
      %v1095 = vcombine.high %v1094, %v1094
      %v1097 = vshrl.u32 %v1070, 16
      %v1099 = vrot.slane %v1097, 6
      %v1100 = vshll.u32 %v1070, 16
      %v1102 = vrot.slane %v1100, 7
      %v1103 = vor.u32 %v1099, %v1102
      %v1104 = vrot.slane %v1103, 2
      %v1106 = vshll.u32 %v1071, 16
      %v1108 = vrot.slane %v1106, 7
      %v1109 = vsel %vm424, %v1104, %v1108
      %v1111 = vshrl.u32 %v1078, 16
      %v1113 = vrot.slane %v1111, 6
      %v1114 = vshll.u32 %v1078, 16
      %v1116 = vrot.slane %v1114, 7
      %v1117 = vor.u32 %v1113, %v1116
      %v1118 = vrot.slane %v1117, 2
      %v1120 = vshll.u32 %v1079, 16
      %v1122 = vrot.slane %v1120, 7
      %v1123 = vsel %vm424, %v1118, %v1122
      %v1125 = vshrl.u32 %v1086, 16
      %v1127 = vrot.slane %v1125, 6
      %v1128 = vshll.u32 %v1086, 16
      %v1130 = vrot.slane %v1128, 7
      %v1131 = vor.u32 %v1127, %v1130
      %v1132 = vrot.slane %v1131, 2
      %v1134 = vshll.u32 %v1087, 16
      %v1136 = vrot.slane %v1134, 7
      %v1137 = vsel %vm424, %v1132, %v1136
      %v1139 = vshrl.u32 %v1094, 16
      %v1141 = vrot.slane %v1139, 6
      %v1142 = vshll.u32 %v1094, 16
      %v1144 = vrot.slane %v1142, 7
      %v1145 = vor.u32 %v1141, %v1144
      %v1146 = vrot.slane %v1145, 2
      %v1148 = vshll.u32 %v1095, 16
      %v1150 = vrot.slane %v1148, 7
      %v1151 = vsel %vm424, %v1146, %v1150
      %v1152 = vld [vmem:[%s885] sm:$0x6]
      %v1153 = vld [vmem:[%s885 + $0x4] sm:$0x6]
      %v1154 = vld [vmem:[%s885 + $0x8] sm:$0x6]
      %v1155 = vld [vmem:[%s885 + $0xc] sm:$0x6]
      %v1161 = vunpack.c.l.s4 1983009808
      %v1162 = vunpack.c.0.s8 %v1161
      %v1163 = vlaneseq
      %v1164 = vshrl.u32 %v1163, 7
      %v1165 = vsub.s32 %v1162, %v1164
      %v1166 = vrot.slane %v1152, %v1165
      %v1167 = vcombine.high %v1166, %v1166
      %v1169 = vunpack.c.l.s4 1983009808
      %v1170 = vunpack.c.0.s8 %v1169
      %v1171 = vlaneseq
      %v1172 = vshrl.u32 %v1171, 7
      %v1173 = vsub.s32 %v1170, %v1172
      %v1174 = vrot.slane %v1153, %v1173
      %v1175 = vcombine.high %v1174, %v1174
      %v1177 = vunpack.c.l.s4 1983009808
      %v1178 = vunpack.c.0.s8 %v1177
      %v1179 = vlaneseq
      %v1180 = vshrl.u32 %v1179, 7
      %v1181 = vsub.s32 %v1178, %v1180
      %v1182 = vrot.slane %v1154, %v1181
      %v1183 = vcombine.high %v1182, %v1182
      %v1185 = vunpack.c.l.s4 1983009808
      %v1186 = vunpack.c.0.s8 %v1185
      %v1187 = vlaneseq
      %v1188 = vshrl.u32 %v1187, 7
      %v1189 = vsub.s32 %v1186, %v1188
      %v1190 = vrot.slane %v1155, %v1189
      %v1191 = vcombine.high %v1190, %v1190
      %v1192 = vrot.slane %v1166, 7
      %v1193 = vrot.slane %v1192, 2
      %v1194 = vrot.slane %v1167, 7
      %v1195 = vsel %vm1035, %v1193, %v1194
      %v1196 = vrot.slane %v1174, 7
      %v1197 = vrot.slane %v1196, 2
      %v1198 = vrot.slane %v1175, 7
      %v1199 = vsel %vm1035, %v1197, %v1198
      %v1200 = vrot.slane %v1182, 7
      %v1201 = vrot.slane %v1200, 2
      %v1202 = vrot.slane %v1183, 7
      %v1203 = vsel %vm1035, %v1201, %v1202
      %v1204 = vrot.slane %v1190, 7
      %v1205 = vrot.slane %v1204, 2
      %v1206 = vrot.slane %v1191, 7
      %v1207 = vsel %vm1035, %v1205, %v1206
      %s1208 = scalar_lea.vmem [#allocation3], 8
      %v1209 = vld [vmem:[%s1208] sm:$0x3]
      %v1210 = vld [vmem:[%s1208 + $0x4] sm:$0x3]
      %v1211 = vld [vmem:[%s1208 + $0x8] sm:$0x3]
      %v1212 = vld [vmem:[%s1208 + $0xc] sm:$0x3]
      %v1213 = vld [vmem:[%s1208] sm:$0x7]
      %v1214 = vld [vmem:[%s1208 + $0x4] sm:$0x7]
      %v1215 = vld [vmem:[%s1208 + $0x8] sm:$0x7]
      %v1216 = vld [vmem:[%s1208 + $0xc] sm:$0x7]
      %v1222 = vunpack.c.l.s4 1983009808
      %v1223 = vunpack.c.0.s8 %v1222
      %v1224 = vlaneseq
      %v1225 = vshrl.u32 %v1224, 7
      %v1226 = vsub.s32 %v1223, %v1225
      %v1227 = vrot.slane %v1213, %v1226
      %v1228 = vcombine.high %v1227, %v1227
      %v1230 = vunpack.c.l.s4 1983009808
      %v1231 = vunpack.c.0.s8 %v1230
      %v1232 = vlaneseq
      %v1233 = vshrl.u32 %v1232, 7
      %v1234 = vsub.s32 %v1231, %v1233
      %v1235 = vrot.slane %v1214, %v1234
      %v1236 = vcombine.high %v1235, %v1235
      %v1238 = vunpack.c.l.s4 1983009808
      %v1239 = vunpack.c.0.s8 %v1238
      %v1240 = vlaneseq
      %v1241 = vshrl.u32 %v1240, 7
      %v1242 = vsub.s32 %v1239, %v1241
      %v1243 = vrot.slane %v1215, %v1242
      %v1244 = vcombine.high %v1243, %v1243
      %v1246 = vunpack.c.l.s4 1983009808
      %v1247 = vunpack.c.0.s8 %v1246
      %v1248 = vlaneseq
      %v1249 = vshrl.u32 %v1248, 7
      %v1250 = vsub.s32 %v1247, %v1249
      %v1251 = vrot.slane %v1216, %v1250
      %v1252 = vcombine.high %v1251, %v1251
      %v1254 = vshrl.u32 %v1227, 16
      %v1256 = vrot.slane %v1254, 6
      %v1257 = vshll.u32 %v1227, 16
      %v1259 = vrot.slane %v1257, 7
      %v1260 = vor.u32 %v1256, %v1259
      %v1261 = vrot.slane %v1260, 2
      %v1263 = vshll.u32 %v1228, 16
      %v1265 = vrot.slane %v1263, 7
      %v1266 = vsel %vm424, %v1261, %v1265
      %v1268 = vshrl.u32 %v1235, 16
      %v1270 = vrot.slane %v1268, 6
      %v1271 = vshll.u32 %v1235, 16
      %v1273 = vrot.slane %v1271, 7
      %v1274 = vor.u32 %v1270, %v1273
      %v1275 = vrot.slane %v1274, 2
      %v1277 = vshll.u32 %v1236, 16
      %v1279 = vrot.slane %v1277, 7
      %v1280 = vsel %vm424, %v1275, %v1279
      %v1282 = vshrl.u32 %v1243, 16
      %v1284 = vrot.slane %v1282, 6
      %v1285 = vshll.u32 %v1243, 16
      %v1287 = vrot.slane %v1285, 7
      %v1288 = vor.u32 %v1284, %v1287
      %v1289 = vrot.slane %v1288, 2
      %v1291 = vshll.u32 %v1244, 16
      %v1293 = vrot.slane %v1291, 7
      %v1294 = vsel %vm424, %v1289, %v1293
      %v1296 = vshrl.u32 %v1251, 16
      %v1298 = vrot.slane %v1296, 6
      %v1299 = vshll.u32 %v1251, 16
      %v1301 = vrot.slane %v1299, 7
      %v1302 = vor.u32 %v1298, %v1301
      %v1303 = vrot.slane %v1302, 2
      %v1305 = vshll.u32 %v1252, 16
      %v1307 = vrot.slane %v1305, 7
      %v1308 = vsel %vm424, %v1303, %v1307
      %v1309 = vld [vmem:[%s1208] sm:$0x6]
      %v1310 = vld [vmem:[%s1208 + $0x4] sm:$0x6]
      %v1311 = vld [vmem:[%s1208 + $0x8] sm:$0x6]
      %v1312 = vld [vmem:[%s1208 + $0xc] sm:$0x6]
      %v1318 = vunpack.c.l.s4 1983009808
      %v1319 = vunpack.c.0.s8 %v1318
      %v1320 = vlaneseq
      %v1321 = vshrl.u32 %v1320, 7
      %v1322 = vsub.s32 %v1319, %v1321
      %v1323 = vrot.slane %v1309, %v1322
      %v1324 = vcombine.high %v1323, %v1323
      %v1326 = vunpack.c.l.s4 1983009808
      %v1327 = vunpack.c.0.s8 %v1326
      %v1328 = vlaneseq
      %v1329 = vshrl.u32 %v1328, 7
      %v1330 = vsub.s32 %v1327, %v1329
      %v1331 = vrot.slane %v1310, %v1330
      %v1332 = vcombine.high %v1331, %v1331
      %v1334 = vunpack.c.l.s4 1983009808
      %v1335 = vunpack.c.0.s8 %v1334
      %v1336 = vlaneseq
      %v1337 = vshrl.u32 %v1336, 7
      %v1338 = vsub.s32 %v1335, %v1337
      %v1339 = vrot.slane %v1311, %v1338
      %v1340 = vcombine.high %v1339, %v1339
      %v1342 = vunpack.c.l.s4 1983009808
      %v1343 = vunpack.c.0.s8 %v1342
      %v1344 = vlaneseq
      %v1345 = vshrl.u32 %v1344, 7
      %v1346 = vsub.s32 %v1343, %v1345
      %v1347 = vrot.slane %v1312, %v1346
      %v1348 = vcombine.high %v1347, %v1347
      %v1349 = vrot.slane %v1323, 7
      %v1350 = vrot.slane %v1349, 2
      %v1351 = vrot.slane %v1324, 7
      %v1352 = vsel %vm1035, %v1350, %v1351
      %v1353 = vrot.slane %v1331, 7
      %v1354 = vrot.slane %v1353, 2
      %v1355 = vrot.slane %v1332, 7
      %v1356 = vsel %vm1035, %v1354, %v1355
      %v1357 = vrot.slane %v1339, 7
      %v1358 = vrot.slane %v1357, 2
      %v1359 = vrot.slane %v1340, 7
      %v1360 = vsel %vm1035, %v1358, %v1359
      %v1361 = vrot.slane %v1347, 7
      %v1362 = vrot.slane %v1361, 2
      %v1363 = vrot.slane %v1348, 7
      %v1364 = vsel %vm1035, %v1362, %v1363
      %v1369 = vcombine.low %v890, %v891
      %v1370 = vcombine.low %v892, %v893
      %v1372 = vunpack.c.l.s4 1983009808
      %v1373 = vunpack.c.0.s8 %v1372
      %v1374 = vlaneseq
      %v1375 = vshrl.u32 %v1374, 7
      %v1376 = vsub.s32 %v1373, %v1375
      %v1377 = vrot.slane %v1369, %v1376
      %v1379 = vunpack.c.l.s4 1983009808
      %v1380 = vunpack.c.0.s8 %v1379
      %v1381 = vlaneseq
      %v1382 = vshrl.u32 %v1381, 7
      %v1383 = vsub.s32 %v1380, %v1382
      %v1384 = vrot.slane %v1370, %v1383
      %v1385 = vcombine.low %v1377, %v1384
      %v1386 = vcombine.low %v947, %v961
      %v1387 = vcombine.low %v975, %v989
      %v1389 = vunpack.c.l.s4 1983009808
      %v1390 = vunpack.c.0.s8 %v1389
      %v1391 = vlaneseq
      %v1392 = vshrl.u32 %v1391, 7
      %v1393 = vsub.s32 %v1390, %v1392
      %v1394 = vrot.slane %v1386, %v1393
      %v1396 = vunpack.c.l.s4 1983009808
      %v1397 = vunpack.c.0.s8 %v1396
      %v1398 = vlaneseq
      %v1399 = vshrl.u32 %v1398, 7
      %v1400 = vsub.s32 %v1397, %v1399
      %v1401 = vrot.slane %v1387, %v1400
      %v1402 = vcombine.low %v1394, %v1401
      %1403 = vrot.lane.b32.xlu0 %v1402, 16
      %v1404 = vpop.permute.xlu0 %1403
      %v1405 = vcombine.low %v1039, %v1043
      %v1406 = vcombine.low %v1047, %v1051
      %v1408 = vunpack.c.l.s4 1983009808
      %v1409 = vunpack.c.0.s8 %v1408
      %v1410 = vlaneseq
      %v1411 = vshrl.u32 %v1410, 7
      %v1412 = vsub.s32 %v1409, %v1411
      %v1413 = vrot.slane %v1405, %v1412
      %v1415 = vunpack.c.l.s4 1983009808
      %v1416 = vunpack.c.0.s8 %v1415
      %v1417 = vlaneseq
      %v1418 = vshrl.u32 %v1417, 7
      %v1419 = vsub.s32 %v1416, %v1418
      %v1420 = vrot.slane %v1406, %v1419
      %v1421 = vcombine.low %v1413, %v1420
      %1422 = vrot.lane.b32.xlu0 %v1421, 32
      %v1423 = vpop.permute.xlu0 %1422
      %v1428 = vcombine.low %v1052, %v1053
      %v1429 = vcombine.low %v1054, %v1055
      %v1431 = vunpack.c.l.s4 1983009808
      %v1432 = vunpack.c.0.s8 %v1431
      %v1433 = vlaneseq
      %v1434 = vshrl.u32 %v1433, 7
      %v1435 = vsub.s32 %v1432, %v1434
      %v1436 = vrot.slane %v1428, %v1435
      %v1438 = vunpack.c.l.s4 1983009808
      %v1439 = vunpack.c.0.s8 %v1438
      %v1440 = vlaneseq
      %v1441 = vshrl.u32 %v1440, 7
      %v1442 = vsub.s32 %v1439, %v1441
      %v1443 = vrot.slane %v1429, %v1442
      %v1444 = vcombine.low %v1436, %v1443
      %1445 = vrot.lane.b32.xlu0 %v1444, 48
      %v1446 = vpop.permute.xlu0 %1445
      %v1447 = vcombine.low %v1109, %v1123
      %v1448 = vcombine.low %v1137, %v1151
      %v1450 = vunpack.c.l.s4 1983009808
      %v1451 = vunpack.c.0.s8 %v1450
      %v1452 = vlaneseq
      %v1453 = vshrl.u32 %v1452, 7
      %v1454 = vsub.s32 %v1451, %v1453
      %v1455 = vrot.slane %v1447, %v1454
      %v1457 = vunpack.c.l.s4 1983009808
      %v1458 = vunpack.c.0.s8 %v1457
      %v1459 = vlaneseq
      %v1460 = vshrl.u32 %v1459, 7
      %v1461 = vsub.s32 %v1458, %v1460
      %v1462 = vrot.slane %v1448, %v1461
      %v1463 = vcombine.low %v1455, %v1462
      %1464 = vrot.lane.b32.xlu0 %v1463, 64
      %v1465 = vpop.permute.xlu0 %1464
      %v1466 = vcombine.low %v1195, %v1199
      %v1467 = vcombine.low %v1203, %v1207
      %v1469 = vunpack.c.l.s4 1983009808
      %v1470 = vunpack.c.0.s8 %v1469
      %v1471 = vlaneseq
      %v1472 = vshrl.u32 %v1471, 7
      %v1473 = vsub.s32 %v1470, %v1472
      %v1474 = vrot.slane %v1466, %v1473
      %v1476 = vunpack.c.l.s4 1983009808
      %v1477 = vunpack.c.0.s8 %v1476
      %v1478 = vlaneseq
      %v1479 = vshrl.u32 %v1478, 7
      %v1480 = vsub.s32 %v1477, %v1479
      %v1481 = vrot.slane %v1467, %v1480
      %v1482 = vcombine.low %v1474, %v1481
      %1483 = vrot.lane.b32.xlu0 %v1482, 80
      %v1484 = vpop.permute.xlu0 %1483
      %v1489 = vcombine.low %v1209, %v1210
      %v1490 = vcombine.low %v1211, %v1212
      %v1492 = vunpack.c.l.s4 1983009808
      %v1493 = vunpack.c.0.s8 %v1492
      %v1494 = vlaneseq
      %v1495 = vshrl.u32 %v1494, 7
      %v1496 = vsub.s32 %v1493, %v1495
      %v1497 = vrot.slane %v1489, %v1496
      %v1499 = vunpack.c.l.s4 1983009808
      %v1500 = vunpack.c.0.s8 %v1499
      %v1501 = vlaneseq
      %v1502 = vshrl.u32 %v1501, 7
      %v1503 = vsub.s32 %v1500, %v1502
      %v1504 = vrot.slane %v1490, %v1503
      %v1505 = vcombine.low %v1497, %v1504
      %1506 = vrot.lane.b32.xlu0 %v1505, 96
      %v1507 = vpop.permute.xlu0 %1506
      %v1508 = vcombine.low %v1266, %v1280
      %v1509 = vcombine.low %v1294, %v1308
      %v1511 = vunpack.c.l.s4 1983009808
      %v1512 = vunpack.c.0.s8 %v1511
      %v1513 = vlaneseq
      %v1514 = vshrl.u32 %v1513, 7
      %v1515 = vsub.s32 %v1512, %v1514
      %v1516 = vrot.slane %v1508, %v1515
      %v1518 = vunpack.c.l.s4 1983009808
      %v1519 = vunpack.c.0.s8 %v1518
      %v1520 = vlaneseq
      %v1521 = vshrl.u32 %v1520, 7
      %v1522 = vsub.s32 %v1519, %v1521
      %v1523 = vrot.slane %v1509, %v1522
      %v1524 = vcombine.low %v1516, %v1523
      %1525 = vrot.lane.b32.xlu0 %v1524, 112
      %v1526 = vpop.permute.xlu0 %1525
      %v1527 = vcombine.low %v1352, %v1356
      %v1528 = vcombine.low %v1360, %v1364
      %v1530 = vunpack.c.l.s4 1983009808
      %v1531 = vunpack.c.0.s8 %v1530
      %v1532 = vlaneseq
      %v1533 = vshrl.u32 %v1532, 7
      %v1534 = vsub.s32 %v1531, %v1533
      %v1535 = vrot.slane %v1527, %v1534
      %v1537 = vunpack.c.l.s4 1983009808
      %v1538 = vunpack.c.0.s8 %v1537
      %v1539 = vlaneseq
      %v1540 = vshrl.u32 %v1539, 7
      %v1541 = vsub.s32 %v1538, %v1540
      %v1542 = vrot.slane %v1528, %v1541
      %v1543 = vcombine.low %v1535, %v1542
      %vm1544 = vcmask 130048
      %v1547 = vsel %vm1544, %v1385, %v1404
      %v1549 = vsel %vm663, %v1547, %v1423
      %vm1550 = vcmask 392192
      %v1552 = vsel %vm1550, %v1549, %v1446
      %v1554 = vsel %vm667, %v1552, %v1465
      %vm1555 = vcmask 654336
      %v1557 = vsel %vm1555, %v1554, %v1484
      %v1559 = vsel %vm670, %v1557, %v1507
      %vm1560 = vcmask 916480
      %v1562 = vsel %vm1560, %v1559, %v1526
      %v1564 = vld [vmem:[%s3] sm:$0xf]
      %v1565 = vld [vmem:[%s3 + $0x4] sm:$0xf]
      %v1566 = vld [vmem:[%s3 + $0x8] sm:$0xf]
      %v1567 = vld [vmem:[%s3 + $0xc] sm:$0xf]
      %v1568 = vld [vmem:[%s3 + $0x10] sm:$0xf]
      %v1569 = vld [vmem:[%s3 + $0x14] sm:$0xf]
      %v1570 = vld [vmem:[%s3 + $0x18] sm:$0xf]
      %v1571 = vld [vmem:[%s3 + $0x1c] sm:$0xf]
      %v1572 = vld [vmem:[%s3 + $0x20] sm:$0xf]
      %v1573 = vld [vmem:[%s3 + $0x24] sm:$0xf]
      %v1574 = vld [vmem:[%s3 + $0x28] sm:$0xf]
      %v1575 = vld [vmem:[%s3 + $0x2c] sm:$0xf]
      %v1576 = vld [vmem:[%s3 + $0x30] sm:$0xf]
      %v1577 = vld [vmem:[%s3 + $0x34] sm:$0xf]
      %v1578 = vld [vmem:[%s3 + $0x38] sm:$0xf]
      %v1579 = vld [vmem:[%s3 + $0x3c] sm:$0xf]
      %v1580 = vld [vmem:[%s3 + $0x40] sm:$0xf]
      %v1581 = vld [vmem:[%s3 + $0x44] sm:$0xf]
      %v1582 = vld [vmem:[%s4] sm:$0x1]
      %v1584 = vlaneseq
      %v1585 = vshrl.u32 %v1584, 7
      %v1586 = vsub.s32 0, %v1585
      %v1587 = vrot.slane %v1582, %v1586
      %v1607 = vunpack.c.l.b16 %v1564
      %v1608 = vunpack.c.l.b16 %v1565
      %v1609 = vunpack.c.l.b16 %v1566
      %v1610 = vunpack.c.l.b16 %v1567
      %v1611 = vunpack.c.l.b16 %v1568
      %v1612 = vunpack.c.l.b16 %v1569
      %v1613 = vunpack.c.l.b16 %v1570
      %v1614 = vunpack.c.l.b16 %v1571
      %v1615 = vunpack.c.l.b16 %v1572
      %v1616 = vunpack.c.l.b16 %v1573
      %v1617 = vunpack.c.l.b16 %v1574
      %v1618 = vunpack.c.l.b16 %v1575
      %v1619 = vunpack.c.l.b16 %v1576
      %v1620 = vunpack.c.l.b16 %v1577
      %v1621 = vunpack.c.l.b16 %v1578
      %v1622 = vunpack.c.l.b16 %v1579
      %v1623 = vunpack.c.l.b16 %v1580
      %v1624 = vunpack.c.l.b16 %v1581
      %v1625 = vpack.c.b16 %v1608, %v1607
      %v1626 = vpack.c.b16 %v1610, %v1609
      %v1627 = vpack.c.b16 %v1612, %v1611
      %v1628 = vpack.c.b16 %v1614, %v1613
      %v1629 = vpack.c.b16 %v1616, %v1615
      %v1630 = vpack.c.b16 %v1618, %v1617
      %v1631 = vpack.c.b16 %v1620, %v1619
      %v1632 = vpack.c.b16 %v1622, %v1621
      %v1633 = vpack.c.b16 %v1624, %v1623
      %v1644 = vsel %vm1544, %v1543, 0
      %1646 = vmatprep.subr.bf16.mxu0 0
      %1647 = vmatpush1.bf16.msra.mxu0 %v1625
      %1648 = vmatprep.subr.bf16.mxu0 0
      %1649 = vmatpush1.bf16.msra.mxu0 %v1626
      %1650 = vmatprep.subr.bf16.mxu0 0
      %1651 = vmatpush1.bf16.msra.mxu0 %v1627
      %1652 = vmatprep.subr.bf16.mxu0 0
      %1653 = vmatpush1.bf16.msra.mxu0 %v1628
      %1654 = vmatprep.subr.bf16.mxu0 0
      %1655 = vmatpush1.bf16.msra.mxu0 %v1629
      %1656 = vmatprep.subr.bf16.mxu0 0
      %1657 = vmatpush1.bf16.msra.mxu0 %v1630
      %1658 = vmatprep.subr.bf16.mxu0 0
      %1659 = vmatpush1.bf16.msra.mxu0 %v1631
      %1660 = vmatprep.subr.bf16.mxu0 0
      %1661 = vmatpush1.bf16.msra.mxu0 %v1632
      %1662 = vmatprep.subr.bf16.mxu0 0
      %1663 = vmatpush1.bf16.msra.mxu0 %v1633
      %1664 = vmatprep.subr.bf16.mxu0 0
      %1665 = vmatpush1.bf16.msra.mxu0 0
      %1666 = vmatprep.subr.bf16.mxu0 0
      %1667 = vmatpush1.bf16.msra.mxu0 0
      %1668 = vmatprep.subr.bf16.mxu0 0
      %1669 = vmatpush1.bf16.msra.mxu0 0
      %1670 = vmatprep.subr.bf16.mxu0 0
      %1671 = vmatpush1.bf16.msra.mxu0 0
      %1672 = vmatprep.subr.bf16.mxu0 0
      %1673 = vmatpush1.bf16.msra.mxu0 0
      %1674 = vmatprep.subr.bf16.mxu0 0
      %1675 = vmatpush1.bf16.msra.mxu0 0
      %1676 = vmatprep.subr.bf16.mxu0 0
      %1677 = vmatpush1.bf16.msra.mxu0 0
      %1678 = vmatprep.mubr.bf16.mxu0 %v1644
      %1679 = vmatmul.mubr.bf16.gmra.mrb[0].mxu0 %v1562
      %v1680 = vpop.f32.mrb[0].mxu0
      %v1681 = vadd.f32 %v1587, %v1680
      %v1682 = vpop.f32.mrb[0].mxu0
      %v1683 = vpop.f32.mrb[0].mxu0
      %v1684 = vadd.f32 %v1587, %v1683
      %v1685 = vpop.f32.mrb[0].mxu0
      %1686 = vdwg.mxu0
      %v1687 = vmax.f32 %v1681, 0.0
      %v1688 = vmax.f32 %v1684, 0.0
      %v1689 = vpack.c.bf16 %v1688, %v1687
      %v1691 = vcombine.high %v1689, %v1689
      %v1693 = vunpack.c.l.s4 1983009808
      %v1694 = vunpack.c.0.s8 %v1693
      %v1695 = vlaneseq
      %v1696 = vshrl.u32 %v1695, 7
      %v1697 = vsub.s32 %v1694, %v1696
      %v1698 = vrot.slane %v1689, %v1697
      %v1700 = vunpack.c.l.s4 1983009808
      %v1701 = vunpack.c.0.s8 %v1700
      %v1702 = vlaneseq
      %v1703 = vshrl.u32 %v1702, 7
      %v1704 = vsub.s32 %v1701, %v1703
      %v1705 = vrot.slane %v1691, %v1704
      %v1706 = vcombine.high %v1698, %v1698
      %v1707 = vcombine.high %v1705, %v1705
      %1708 = vst.msk [vmem:[#allocation4] sm:$0x7] %vm811, 0
      %s1709 = scalar_lea.vmem [#allocation4], 20
      %1710 = vst.msk [vmem:[%s1709] sm:$0x7] %vm811, 0
      %v1712 = vunpack.c.l.s4 1983009808
      %v1713 = vunpack.c.0.s8 %v1712
      %v1714 = vlaneseq
      %v1715 = vshrl.u32 %v1714, 7
      %v1716 = vsub.s32 %v1713, %v1715
      %v1717 = vrot.slane %v1698, %v1716
      %v1719 = vunpack.c.l.s4 1983009808
      %v1720 = vunpack.c.0.s8 %v1719
      %v1721 = vlaneseq
      %v1722 = vshrl.u32 %v1721, 7
      %v1723 = vsub.s32 %v1720, %v1722
      %v1724 = vrot.slane %v1706, %v1723
      %v1726 = vunpack.c.l.s4 1983009808
      %v1727 = vunpack.c.0.s8 %v1726
      %v1728 = vlaneseq
      %v1729 = vshrl.u32 %v1728, 7
      %v1730 = vsub.s32 %v1727, %v1729
      %v1731 = vrot.slane %v1705, %v1730
      %v1733 = vunpack.c.l.s4 1983009808
      %v1734 = vunpack.c.0.s8 %v1733
      %v1735 = vlaneseq
      %v1736 = vshrl.u32 %v1735, 7
      %v1737 = vsub.s32 %v1734, %v1736
      %v1738 = vrot.slane %v1707, %v1737
      %v1740 = vshrl.u32 %v1717, 16
      %v1742 = vrot.slane %v1740, 7
      %v1743 = vshll.u32 %v1717, 16
      %v1745 = vor.u32 %v1742, %v1743
      %v1747 = vshrl.u32 %v1724, 16
      %v1749 = vrot.slane %v1747, 7
      %v1750 = vshll.u32 %v1724, 16
      %v1752 = vor.u32 %v1749, %v1750
      %v1754 = vshrl.u32 %v1731, 16
      %v1756 = vrot.slane %v1754, 7
      %v1757 = vshll.u32 %v1731, 16
      %v1759 = vor.u32 %v1756, %v1757
      %v1761 = vshrl.u32 %v1738, 16
      %v1763 = vrot.slane %v1761, 7
      %v1764 = vshll.u32 %v1738, 16
      %v1766 = vor.u32 %v1763, %v1764
      %v1771 = vsel %vm356, 0, %v1745
      %v1772 = vsel %vm356, 0, %v1752
      %v1773 = vsel %vm356, 0, %v1759
      %v1774 = vsel %vm356, 0, %v1766
      %v1775 = vsel %vm880, %v1771, 0
      %v1776 = vsel %vm880, %v1772, 0
      %v1777 = vsel %vm880, %v1773, 0
      %v1778 = vsel %vm880, %v1774, 0
      %s1779 = scalar_lea.vmem [#allocation4], 4
      %1780 = vst.msk [vmem:[%s1779] sm:$0x7] %vm811, %v1775
      %1781 = vst.msk [vmem:[%s1779 + $0x4] sm:$0x7] %vm811, %v1776
      %1782 = vst.msk [vmem:[%s1779 + $0x8] sm:$0x7] %vm811, %v1777
      %1783 = vst.msk [vmem:[%s1779 + $0xc] sm:$0x7] %vm811, %v1778
      %v1784 = vld [vmem:[#allocation4] sm:$0x3]
      %v1785 = vld [vmem:[#allocation4 + $0x4] sm:$0x3]
      %v1786 = vld [vmem:[#allocation4 + $0x8] sm:$0x3]
      %v1787 = vld [vmem:[#allocation4 + $0xc] sm:$0x3]
      %v1788 = vld [vmem:[#allocation4] sm:$0x7]
      %v1789 = vld [vmem:[#allocation4 + $0x4] sm:$0x7]
      %v1790 = vld [vmem:[#allocation4 + $0x8] sm:$0x7]
      %v1791 = vld [vmem:[#allocation4 + $0xc] sm:$0x7]
      %v1797 = vunpack.c.l.s4 1983009808
      %v1798 = vunpack.c.0.s8 %v1797
      %v1799 = vlaneseq
      %v1800 = vshrl.u32 %v1799, 7
      %v1801 = vsub.s32 %v1798, %v1800
      %v1802 = vrot.slane %v1788, %v1801
      %v1803 = vcombine.high %v1802, %v1802
      %v1805 = vunpack.c.l.s4 1983009808
      %v1806 = vunpack.c.0.s8 %v1805
      %v1807 = vlaneseq
      %v1808 = vshrl.u32 %v1807, 7
      %v1809 = vsub.s32 %v1806, %v1808
      %v1810 = vrot.slane %v1789, %v1809
      %v1811 = vcombine.high %v1810, %v1810
      %v1813 = vunpack.c.l.s4 1983009808
      %v1814 = vunpack.c.0.s8 %v1813
      %v1815 = vlaneseq
      %v1816 = vshrl.u32 %v1815, 7
      %v1817 = vsub.s32 %v1814, %v1816
      %v1818 = vrot.slane %v1790, %v1817
      %v1819 = vcombine.high %v1818, %v1818
      %v1821 = vunpack.c.l.s4 1983009808
      %v1822 = vunpack.c.0.s8 %v1821
      %v1823 = vlaneseq
      %v1824 = vshrl.u32 %v1823, 7
      %v1825 = vsub.s32 %v1822, %v1824
      %v1826 = vrot.slane %v1791, %v1825
      %v1827 = vcombine.high %v1826, %v1826
      %v1829 = vshrl.u32 %v1802, 16
      %v1831 = vrot.slane %v1829, 6
      %v1832 = vshll.u32 %v1802, 16
      %v1834 = vrot.slane %v1832, 7
      %v1835 = vor.u32 %v1831, %v1834
      %v1836 = vrot.slane %v1835, 2
      %v1838 = vshll.u32 %v1803, 16
      %v1840 = vrot.slane %v1838, 7
      %v1841 = vsel %vm424, %v1836, %v1840
      %v1843 = vshrl.u32 %v1810, 16
      %v1845 = vrot.slane %v1843, 6
      %v1846 = vshll.u32 %v1810, 16
      %v1848 = vrot.slane %v1846, 7
      %v1849 = vor.u32 %v1845, %v1848
      %v1850 = vrot.slane %v1849, 2
      %v1852 = vshll.u32 %v1811, 16
      %v1854 = vrot.slane %v1852, 7
      %v1855 = vsel %vm424, %v1850, %v1854
      %v1857 = vshrl.u32 %v1818, 16
      %v1859 = vrot.slane %v1857, 6
      %v1860 = vshll.u32 %v1818, 16
      %v1862 = vrot.slane %v1860, 7
      %v1863 = vor.u32 %v1859, %v1862
      %v1864 = vrot.slane %v1863, 2
      %v1866 = vshll.u32 %v1819, 16
      %v1868 = vrot.slane %v1866, 7
      %v1869 = vsel %vm424, %v1864, %v1868
      %v1871 = vshrl.u32 %v1826, 16
      %v1873 = vrot.slane %v1871, 6
      %v1874 = vshll.u32 %v1826, 16
      %v1876 = vrot.slane %v1874, 7
      %v1877 = vor.u32 %v1873, %v1876
      %v1878 = vrot.slane %v1877, 2
      %v1880 = vshll.u32 %v1827, 16
      %v1882 = vrot.slane %v1880, 7
      %v1883 = vsel %vm424, %v1878, %v1882
      %v1884 = vld [vmem:[#allocation4] sm:$0x6]
      %v1885 = vld [vmem:[#allocation4 + $0x4] sm:$0x6]
      %v1886 = vld [vmem:[#allocation4 + $0x8] sm:$0x6]
      %v1887 = vld [vmem:[#allocation4 + $0xc] sm:$0x6]
      %v1893 = vunpack.c.l.s4 1983009808
      %v1894 = vunpack.c.0.s8 %v1893
      %v1895 = vlaneseq
      %v1896 = vshrl.u32 %v1895, 7
      %v1897 = vsub.s32 %v1894, %v1896
      %v1898 = vrot.slane %v1884, %v1897
      %v1899 = vcombine.high %v1898, %v1898
      %v1901 = vunpack.c.l.s4 1983009808
      %v1902 = vunpack.c.0.s8 %v1901
      %v1903 = vlaneseq
      %v1904 = vshrl.u32 %v1903, 7
      %v1905 = vsub.s32 %v1902, %v1904
      %v1906 = vrot.slane %v1885, %v1905
      %v1907 = vcombine.high %v1906, %v1906
      %v1909 = vunpack.c.l.s4 1983009808
      %v1910 = vunpack.c.0.s8 %v1909
      %v1911 = vlaneseq
      %v1912 = vshrl.u32 %v1911, 7
      %v1913 = vsub.s32 %v1910, %v1912
      %v1914 = vrot.slane %v1886, %v1913
      %v1915 = vcombine.high %v1914, %v1914
      %v1917 = vunpack.c.l.s4 1983009808
      %v1918 = vunpack.c.0.s8 %v1917
      %v1919 = vlaneseq
      %v1920 = vshrl.u32 %v1919, 7
      %v1921 = vsub.s32 %v1918, %v1920
      %v1922 = vrot.slane %v1887, %v1921
      %v1923 = vcombine.high %v1922, %v1922
      %v1924 = vrot.slane %v1898, 7
      %v1925 = vrot.slane %v1924, 2
      %v1926 = vrot.slane %v1899, 7
      %v1927 = vsel %vm1035, %v1925, %v1926
      %v1928 = vrot.slane %v1906, 7
      %v1929 = vrot.slane %v1928, 2
      %v1930 = vrot.slane %v1907, 7
      %v1931 = vsel %vm1035, %v1929, %v1930
      %v1932 = vrot.slane %v1914, 7
      %v1933 = vrot.slane %v1932, 2
      %v1934 = vrot.slane %v1915, 7
      %v1935 = vsel %vm1035, %v1933, %v1934
      %v1936 = vrot.slane %v1922, 7
      %v1937 = vrot.slane %v1936, 2
      %v1938 = vrot.slane %v1923, 7
      %v1939 = vsel %vm1035, %v1937, %v1938
      %v1940 = vld [vmem:[%s1779] sm:$0x3]
      %v1941 = vld [vmem:[%s1779 + $0x4] sm:$0x3]
      %v1942 = vld [vmem:[%s1779 + $0x8] sm:$0x3]
      %v1943 = vld [vmem:[%s1779 + $0xc] sm:$0x3]
      %v1944 = vld [vmem:[%s1779] sm:$0x7]
      %v1945 = vld [vmem:[%s1779 + $0x4] sm:$0x7]
      %v1946 = vld [vmem:[%s1779 + $0x8] sm:$0x7]
      %v1947 = vld [vmem:[%s1779 + $0xc] sm:$0x7]
      %v1953 = vunpack.c.l.s4 1983009808
      %v1954 = vunpack.c.0.s8 %v1953
      %v1955 = vlaneseq
      %v1956 = vshrl.u32 %v1955, 7
      %v1957 = vsub.s32 %v1954, %v1956
      %v1958 = vrot.slane %v1944, %v1957
      %v1959 = vcombine.high %v1958, %v1958
      %v1961 = vunpack.c.l.s4 1983009808
      %v1962 = vunpack.c.0.s8 %v1961
      %v1963 = vlaneseq
      %v1964 = vshrl.u32 %v1963, 7
      %v1965 = vsub.s32 %v1962, %v1964
      %v1966 = vrot.slane %v1945, %v1965
      %v1967 = vcombine.high %v1966, %v1966
      %v1969 = vunpack.c.l.s4 1983009808
      %v1970 = vunpack.c.0.s8 %v1969
      %v1971 = vlaneseq
      %v1972 = vshrl.u32 %v1971, 7
      %v1973 = vsub.s32 %v1970, %v1972
      %v1974 = vrot.slane %v1946, %v1973
      %v1975 = vcombine.high %v1974, %v1974
      %v1977 = vunpack.c.l.s4 1983009808
      %v1978 = vunpack.c.0.s8 %v1977
      %v1979 = vlaneseq
      %v1980 = vshrl.u32 %v1979, 7
      %v1981 = vsub.s32 %v1978, %v1980
      %v1982 = vrot.slane %v1947, %v1981
      %v1983 = vcombine.high %v1982, %v1982
      %v1985 = vshrl.u32 %v1958, 16
      %v1987 = vrot.slane %v1985, 6
      %v1988 = vshll.u32 %v1958, 16
      %v1990 = vrot.slane %v1988, 7
      %v1991 = vor.u32 %v1987, %v1990
      %v1992 = vrot.slane %v1991, 2
      %v1994 = vshll.u32 %v1959, 16
      %v1996 = vrot.slane %v1994, 7
      %v1997 = vsel %vm424, %v1992, %v1996
      %v1999 = vshrl.u32 %v1966, 16
      %v2001 = vrot.slane %v1999, 6
      %v2002 = vshll.u32 %v1966, 16
      %v2004 = vrot.slane %v2002, 7
      %v2005 = vor.u32 %v2001, %v2004
      %v2006 = vrot.slane %v2005, 2
      %v2008 = vshll.u32 %v1967, 16
      %v2010 = vrot.slane %v2008, 7
      %v2011 = vsel %vm424, %v2006, %v2010
      %v2013 = vshrl.u32 %v1974, 16
      %v2015 = vrot.slane %v2013, 6
      %v2016 = vshll.u32 %v1974, 16
      %v2018 = vrot.slane %v2016, 7
      %v2019 = vor.u32 %v2015, %v2018
      %v2020 = vrot.slane %v2019, 2
      %v2022 = vshll.u32 %v1975, 16
      %v2024 = vrot.slane %v2022, 7
      %v2025 = vsel %vm424, %v2020, %v2024
      %v2027 = vshrl.u32 %v1982, 16
      %v2029 = vrot.slane %v2027, 6
      %v2030 = vshll.u32 %v1982, 16
      %v2032 = vrot.slane %v2030, 7
      %v2033 = vor.u32 %v2029, %v2032
      %v2034 = vrot.slane %v2033, 2
      %v2036 = vshll.u32 %v1983, 16
      %v2038 = vrot.slane %v2036, 7
      %v2039 = vsel %vm424, %v2034, %v2038
      %v2040 = vld [vmem:[%s1779] sm:$0x6]
      %v2041 = vld [vmem:[%s1779 + $0x4] sm:$0x6]
      %v2042 = vld [vmem:[%s1779 + $0x8] sm:$0x6]
      %v2043 = vld [vmem:[%s1779 + $0xc] sm:$0x6]
      %v2049 = vunpack.c.l.s4 1983009808
      %v2050 = vunpack.c.0.s8 %v2049
      %v2051 = vlaneseq
      %v2052 = vshrl.u32 %v2051, 7
      %v2053 = vsub.s32 %v2050, %v2052
      %v2054 = vrot.slane %v2040, %v2053
      %v2055 = vcombine.high %v2054, %v2054
      %v2057 = vunpack.c.l.s4 1983009808
      %v2058 = vunpack.c.0.s8 %v2057
      %v2059 = vlaneseq
      %v2060 = vshrl.u32 %v2059, 7
      %v2061 = vsub.s32 %v2058, %v2060
      %v2062 = vrot.slane %v2041, %v2061
      %v2063 = vcombine.high %v2062, %v2062
      %v2065 = vunpack.c.l.s4 1983009808
      %v2066 = vunpack.c.0.s8 %v2065
      %v2067 = vlaneseq
      %v2068 = vshrl.u32 %v2067, 7
      %v2069 = vsub.s32 %v2066, %v2068
      %v2070 = vrot.slane %v2042, %v2069
      %v2071 = vcombine.high %v2070, %v2070
      %v2073 = vunpack.c.l.s4 1983009808
      %v2074 = vunpack.c.0.s8 %v2073
      %v2075 = vlaneseq
      %v2076 = vshrl.u32 %v2075, 7
      %v2077 = vsub.s32 %v2074, %v2076
      %v2078 = vrot.slane %v2043, %v2077
      %v2079 = vcombine.high %v2078, %v2078
      %v2080 = vrot.slane %v2054, 7
      %v2081 = vrot.slane %v2080, 2
      %v2082 = vrot.slane %v2055, 7
      %v2083 = vsel %vm1035, %v2081, %v2082
      %v2084 = vrot.slane %v2062, 7
      %v2085 = vrot.slane %v2084, 2
      %v2086 = vrot.slane %v2063, 7
      %v2087 = vsel %vm1035, %v2085, %v2086
      %v2088 = vrot.slane %v2070, 7
      %v2089 = vrot.slane %v2088, 2
      %v2090 = vrot.slane %v2071, 7
      %v2091 = vsel %vm1035, %v2089, %v2090
      %v2092 = vrot.slane %v2078, 7
      %v2093 = vrot.slane %v2092, 2
      %v2094 = vrot.slane %v2079, 7
      %v2095 = vsel %vm1035, %v2093, %v2094
      %s2096 = scalar_lea.vmem [#allocation4], 8
      %v2097 = vld [vmem:[%s2096] sm:$0x3]
      %v2098 = vld [vmem:[%s2096 + $0x4] sm:$0x3]
      %v2099 = vld [vmem:[%s2096 + $0x8] sm:$0x3]
      %v2100 = vld [vmem:[%s2096 + $0xc] sm:$0x3]
      %v2101 = vld [vmem:[%s2096] sm:$0x7]
      %v2102 = vld [vmem:[%s2096 + $0x4] sm:$0x7]
      %v2103 = vld [vmem:[%s2096 + $0x8] sm:$0x7]
      %v2104 = vld [vmem:[%s2096 + $0xc] sm:$0x7]
      %v2110 = vunpack.c.l.s4 1983009808
      %v2111 = vunpack.c.0.s8 %v2110
      %v2112 = vlaneseq
      %v2113 = vshrl.u32 %v2112, 7
      %v2114 = vsub.s32 %v2111, %v2113
      %v2115 = vrot.slane %v2101, %v2114
      %v2116 = vcombine.high %v2115, %v2115
      %v2118 = vunpack.c.l.s4 1983009808
      %v2119 = vunpack.c.0.s8 %v2118
      %v2120 = vlaneseq
      %v2121 = vshrl.u32 %v2120, 7
      %v2122 = vsub.s32 %v2119, %v2121
      %v2123 = vrot.slane %v2102, %v2122
      %v2124 = vcombine.high %v2123, %v2123
      %v2126 = vunpack.c.l.s4 1983009808
      %v2127 = vunpack.c.0.s8 %v2126
      %v2128 = vlaneseq
      %v2129 = vshrl.u32 %v2128, 7
      %v2130 = vsub.s32 %v2127, %v2129
      %v2131 = vrot.slane %v2103, %v2130
      %v2132 = vcombine.high %v2131, %v2131
      %v2134 = vunpack.c.l.s4 1983009808
      %v2135 = vunpack.c.0.s8 %v2134
      %v2136 = vlaneseq
      %v2137 = vshrl.u32 %v2136, 7
      %v2138 = vsub.s32 %v2135, %v2137
      %v2139 = vrot.slane %v2104, %v2138
      %v2140 = vcombine.high %v2139, %v2139
      %v2142 = vshrl.u32 %v2115, 16
      %v2144 = vrot.slane %v2142, 6
      %v2145 = vshll.u32 %v2115, 16
      %v2147 = vrot.slane %v2145, 7
      %v2148 = vor.u32 %v2144, %v2147
      %v2149 = vrot.slane %v2148, 2
      %v2151 = vshll.u32 %v2116, 16
      %v2153 = vrot.slane %v2151, 7
      %v2154 = vsel %vm424, %v2149, %v2153
      %v2156 = vshrl.u32 %v2123, 16
      %v2158 = vrot.slane %v2156, 6
      %v2159 = vshll.u32 %v2123, 16
      %v2161 = vrot.slane %v2159, 7
      %v2162 = vor.u32 %v2158, %v2161
      %v2163 = vrot.slane %v2162, 2
      %v2165 = vshll.u32 %v2124, 16
      %v2167 = vrot.slane %v2165, 7
      %v2168 = vsel %vm424, %v2163, %v2167
      %v2170 = vshrl.u32 %v2131, 16
      %v2172 = vrot.slane %v2170, 6
      %v2173 = vshll.u32 %v2131, 16
      %v2175 = vrot.slane %v2173, 7
      %v2176 = vor.u32 %v2172, %v2175
      %v2177 = vrot.slane %v2176, 2
      %v2179 = vshll.u32 %v2132, 16
      %v2181 = vrot.slane %v2179, 7
      %v2182 = vsel %vm424, %v2177, %v2181
      %v2184 = vshrl.u32 %v2139, 16
      %v2186 = vrot.slane %v2184, 6
      %v2187 = vshll.u32 %v2139, 16
      %v2189 = vrot.slane %v2187, 7
      %v2190 = vor.u32 %v2186, %v2189
      %v2191 = vrot.slane %v2190, 2
      %v2193 = vshll.u32 %v2140, 16
      %v2195 = vrot.slane %v2193, 7
      %v2196 = vsel %vm424, %v2191, %v2195
      %v2197 = vld [vmem:[%s2096] sm:$0x6]
      %v2198 = vld [vmem:[%s2096 + $0x4] sm:$0x6]
      %v2199 = vld [vmem:[%s2096 + $0x8] sm:$0x6]
      %v2200 = vld [vmem:[%s2096 + $0xc] sm:$0x6]
      %v2206 = vunpack.c.l.s4 1983009808
      %v2207 = vunpack.c.0.s8 %v2206
      %v2208 = vlaneseq
      %v2209 = vshrl.u32 %v2208, 7
      %v2210 = vsub.s32 %v2207, %v2209
      %v2211 = vrot.slane %v2197, %v2210
      %v2212 = vcombine.high %v2211, %v2211
      %v2214 = vunpack.c.l.s4 1983009808
      %v2215 = vunpack.c.0.s8 %v2214
      %v2216 = vlaneseq
      %v2217 = vshrl.u32 %v2216, 7
      %v2218 = vsub.s32 %v2215, %v2217
      %v2219 = vrot.slane %v2198, %v2218
      %v2220 = vcombine.high %v2219, %v2219
      %v2222 = vunpack.c.l.s4 1983009808
      %v2223 = vunpack.c.0.s8 %v2222
      %v2224 = vlaneseq
      %v2225 = vshrl.u32 %v2224, 7
      %v2226 = vsub.s32 %v2223, %v2225
      %v2227 = vrot.slane %v2199, %v2226
      %v2228 = vcombine.high %v2227, %v2227
      %v2230 = vunpack.c.l.s4 1983009808
      %v2231 = vunpack.c.0.s8 %v2230
      %v2232 = vlaneseq
      %v2233 = vshrl.u32 %v2232, 7
      %v2234 = vsub.s32 %v2231, %v2233
      %v2235 = vrot.slane %v2200, %v2234
      %v2236 = vcombine.high %v2235, %v2235
      %v2237 = vrot.slane %v2211, 7
      %v2238 = vrot.slane %v2237, 2
      %v2239 = vrot.slane %v2212, 7
      %v2240 = vsel %vm1035, %v2238, %v2239
      %v2241 = vrot.slane %v2219, 7
      %v2242 = vrot.slane %v2241, 2
      %v2243 = vrot.slane %v2220, 7
      %v2244 = vsel %vm1035, %v2242, %v2243
      %v2245 = vrot.slane %v2227, 7
      %v2246 = vrot.slane %v2245, 2
      %v2247 = vrot.slane %v2228, 7
      %v2248 = vsel %vm1035, %v2246, %v2247
      %v2249 = vrot.slane %v2235, 7
      %v2250 = vrot.slane %v2249, 2
      %v2251 = vrot.slane %v2236, 7
      %v2252 = vsel %vm1035, %v2250, %v2251
      %v2257 = vcombine.low %v1784, %v1785
      %v2258 = vcombine.low %v1786, %v1787
      %v2260 = vunpack.c.l.s4 1983009808
      %v2261 = vunpack.c.0.s8 %v2260
      %v2262 = vlaneseq
      %v2263 = vshrl.u32 %v2262, 7
      %v2264 = vsub.s32 %v2261, %v2263
      %v2265 = vrot.slane %v2257, %v2264
      %v2267 = vunpack.c.l.s4 1983009808
      %v2268 = vunpack.c.0.s8 %v2267
      %v2269 = vlaneseq
      %v2270 = vshrl.u32 %v2269, 7
      %v2271 = vsub.s32 %v2268, %v2270
      %v2272 = vrot.slane %v2258, %v2271
      %v2273 = vcombine.low %v2265, %v2272
      %v2274 = vcombine.low %v1841, %v1855
      %v2275 = vcombine.low %v1869, %v1883
      %v2277 = vunpack.c.l.s4 1983009808
      %v2278 = vunpack.c.0.s8 %v2277
      %v2279 = vlaneseq
      %v2280 = vshrl.u32 %v2279, 7
      %v2281 = vsub.s32 %v2278, %v2280
      %v2282 = vrot.slane %v2274, %v2281
      %v2284 = vunpack.c.l.s4 1983009808
      %v2285 = vunpack.c.0.s8 %v2284
      %v2286 = vlaneseq
      %v2287 = vshrl.u32 %v2286, 7
      %v2288 = vsub.s32 %v2285, %v2287
      %v2289 = vrot.slane %v2275, %v2288
      %v2290 = vcombine.low %v2282, %v2289
      %2291 = vrot.lane.b32.xlu0 %v2290, 16
      %v2292 = vpop.permute.xlu0 %2291
      %v2293 = vcombine.low %v1927, %v1931
      %v2294 = vcombine.low %v1935, %v1939
      %v2296 = vunpack.c.l.s4 1983009808
      %v2297 = vunpack.c.0.s8 %v2296
      %v2298 = vlaneseq
      %v2299 = vshrl.u32 %v2298, 7
      %v2300 = vsub.s32 %v2297, %v2299
      %v2301 = vrot.slane %v2293, %v2300
      %v2303 = vunpack.c.l.s4 1983009808
      %v2304 = vunpack.c.0.s8 %v2303
      %v2305 = vlaneseq
      %v2306 = vshrl.u32 %v2305, 7
      %v2307 = vsub.s32 %v2304, %v2306
      %v2308 = vrot.slane %v2294, %v2307
      %v2309 = vcombine.low %v2301, %v2308
      %2310 = vrot.lane.b32.xlu0 %v2309, 32
      %v2311 = vpop.permute.xlu0 %2310
      %v2316 = vcombine.low %v1940, %v1941
      %v2317 = vcombine.low %v1942, %v1943
      %v2319 = vunpack.c.l.s4 1983009808
      %v2320 = vunpack.c.0.s8 %v2319
      %v2321 = vlaneseq
      %v2322 = vshrl.u32 %v2321, 7
      %v2323 = vsub.s32 %v2320, %v2322
      %v2324 = vrot.slane %v2316, %v2323
      %v2326 = vunpack.c.l.s4 1983009808
      %v2327 = vunpack.c.0.s8 %v2326
      %v2328 = vlaneseq
      %v2329 = vshrl.u32 %v2328, 7
      %v2330 = vsub.s32 %v2327, %v2329
      %v2331 = vrot.slane %v2317, %v2330
      %v2332 = vcombine.low %v2324, %v2331
      %2333 = vrot.lane.b32.xlu0 %v2332, 48
      %v2334 = vpop.permute.xlu0 %2333
      %v2335 = vcombine.low %v1997, %v2011
      %v2336 = vcombine.low %v2025, %v2039
      %v2338 = vunpack.c.l.s4 1983009808
      %v2339 = vunpack.c.0.s8 %v2338
      %v2340 = vlaneseq
      %v2341 = vshrl.u32 %v2340, 7
      %v2342 = vsub.s32 %v2339, %v2341
      %v2343 = vrot.slane %v2335, %v2342
      %v2345 = vunpack.c.l.s4 1983009808
      %v2346 = vunpack.c.0.s8 %v2345
      %v2347 = vlaneseq
      %v2348 = vshrl.u32 %v2347, 7
      %v2349 = vsub.s32 %v2346, %v2348
      %v2350 = vrot.slane %v2336, %v2349
      %v2351 = vcombine.low %v2343, %v2350
      %2352 = vrot.lane.b32.xlu0 %v2351, 64
      %v2353 = vpop.permute.xlu0 %2352
      %v2354 = vcombine.low %v2083, %v2087
      %v2355 = vcombine.low %v2091, %v2095
      %v2357 = vunpack.c.l.s4 1983009808
      %v2358 = vunpack.c.0.s8 %v2357
      %v2359 = vlaneseq
      %v2360 = vshrl.u32 %v2359, 7
      %v2361 = vsub.s32 %v2358, %v2360
      %v2362 = vrot.slane %v2354, %v2361
      %v2364 = vunpack.c.l.s4 1983009808
      %v2365 = vunpack.c.0.s8 %v2364
      %v2366 = vlaneseq
      %v2367 = vshrl.u32 %v2366, 7
      %v2368 = vsub.s32 %v2365, %v2367
      %v2369 = vrot.slane %v2355, %v2368
      %v2370 = vcombine.low %v2362, %v2369
      %2371 = vrot.lane.b32.xlu0 %v2370, 80
      %v2372 = vpop.permute.xlu0 %2371
      %v2377 = vcombine.low %v2097, %v2098
      %v2378 = vcombine.low %v2099, %v2100
      %v2380 = vunpack.c.l.s4 1983009808
      %v2381 = vunpack.c.0.s8 %v2380
      %v2382 = vlaneseq
      %v2383 = vshrl.u32 %v2382, 7
      %v2384 = vsub.s32 %v2381, %v2383
      %v2385 = vrot.slane %v2377, %v2384
      %v2387 = vunpack.c.l.s4 1983009808
      %v2388 = vunpack.c.0.s8 %v2387
      %v2389 = vlaneseq
      %v2390 = vshrl.u32 %v2389, 7
      %v2391 = vsub.s32 %v2388, %v2390
      %v2392 = vrot.slane %v2378, %v2391
      %v2393 = vcombine.low %v2385, %v2392
      %2394 = vrot.lane.b32.xlu0 %v2393, 96
      %v2395 = vpop.permute.xlu0 %2394
      %v2396 = vcombine.low %v2154, %v2168
      %v2397 = vcombine.low %v2182, %v2196
      %v2399 = vunpack.c.l.s4 1983009808
      %v2400 = vunpack.c.0.s8 %v2399
      %v2401 = vlaneseq
      %v2402 = vshrl.u32 %v2401, 7
      %v2403 = vsub.s32 %v2400, %v2402
      %v2404 = vrot.slane %v2396, %v2403
      %v2406 = vunpack.c.l.s4 1983009808
      %v2407 = vunpack.c.0.s8 %v2406
      %v2408 = vlaneseq
      %v2409 = vshrl.u32 %v2408, 7
      %v2410 = vsub.s32 %v2407, %v2409
      %v2411 = vrot.slane %v2397, %v2410
      %v2412 = vcombine.low %v2404, %v2411
      %2413 = vrot.lane.b32.xlu0 %v2412, 112
      %v2414 = vpop.permute.xlu0 %2413
      %v2415 = vcombine.low %v2240, %v2244
      %v2416 = vcombine.low %v2248, %v2252
      %v2418 = vunpack.c.l.s4 1983009808
      %v2419 = vunpack.c.0.s8 %v2418
      %v2420 = vlaneseq
      %v2421 = vshrl.u32 %v2420, 7
      %v2422 = vsub.s32 %v2419, %v2421
      %v2423 = vrot.slane %v2415, %v2422
      %v2425 = vunpack.c.l.s4 1983009808
      %v2426 = vunpack.c.0.s8 %v2425
      %v2427 = vlaneseq
      %v2428 = vshrl.u32 %v2427, 7
      %v2429 = vsub.s32 %v2426, %v2428
      %v2430 = vrot.slane %v2416, %v2429
      %v2431 = vcombine.low %v2423, %v2430
      %v2434 = vsel %vm1544, %v2273, %v2292
      %v2436 = vsel %vm663, %v2434, %v2311
      %v2438 = vsel %vm1550, %v2436, %v2334
      %v2440 = vsel %vm667, %v2438, %v2353
      %v2442 = vsel %vm1555, %v2440, %v2372
      %v2444 = vsel %vm670, %v2442, %v2395
      %v2446 = vsel %vm1560, %v2444, %v2414
      %v2448 = vld [vmem:[%s5] sm:$0xf]
      %v2449 = vld [vmem:[%s5 + $0x4] sm:$0xf]
      %v2450 = vld [vmem:[%s5 + $0x8] sm:$0xf]
      %v2451 = vld [vmem:[%s5 + $0xc] sm:$0xf]
      %v2452 = vld [vmem:[%s5 + $0x10] sm:$0xf]
      %v2453 = vld [vmem:[%s5 + $0x14] sm:$0xf]
      %v2454 = vld [vmem:[%s5 + $0x18] sm:$0xf]
      %v2455 = vld [vmem:[%s5 + $0x1c] sm:$0xf]
      %v2456 = vld [vmem:[%s5 + $0x20] sm:$0xf]
      %v2457 = vld [vmem:[%s5 + $0x24] sm:$0xf]
      %v2458 = vld [vmem:[%s5 + $0x28] sm:$0xf]
      %v2459 = vld [vmem:[%s5 + $0x2c] sm:$0xf]
      %v2460 = vld [vmem:[%s5 + $0x30] sm:$0xf]
      %v2461 = vld [vmem:[%s5 + $0x34] sm:$0xf]
      %v2462 = vld [vmem:[%s5 + $0x38] sm:$0xf]
      %v2463 = vld [vmem:[%s5 + $0x3c] sm:$0xf]
      %v2464 = vld [vmem:[%s5 + $0x40] sm:$0xf]
      %v2465 = vld [vmem:[%s5 + $0x44] sm:$0xf]
      %v2466 = vld [vmem:[%s885] sm:$0x7]
      %v2467 = vld [vmem:[%s885 + $0x4] sm:$0x7]
      %v2468 = vld [vmem:[%s885 + $0x8] sm:$0x7]
      %v2469 = vld [vmem:[%s885 + $0xc] sm:$0x7]
      %v2475 = vunpack.c.l.s4 1983009808
      %v2476 = vunpack.c.0.s8 %v2475
      %v2477 = vlaneseq
      %v2478 = vshrl.u32 %v2477, 7
      %v2479 = vsub.s32 %v2476, %v2478
      %v2480 = vrot.slane %v2466, %v2479
      %v2481 = vcombine.high %v2480, %v2480
      %v2483 = vunpack.c.l.s4 1983009808
      %v2484 = vunpack.c.0.s8 %v2483
      %v2485 = vlaneseq
      %v2486 = vshrl.u32 %v2485, 7
      %v2487 = vsub.s32 %v2484, %v2486
      %v2488 = vrot.slane %v2467, %v2487
      %v2489 = vcombine.high %v2488, %v2488
      %v2491 = vunpack.c.l.s4 1983009808
      %v2492 = vunpack.c.0.s8 %v2491
      %v2493 = vlaneseq
      %v2494 = vshrl.u32 %v2493, 7
      %v2495 = vsub.s32 %v2492, %v2494
      %v2496 = vrot.slane %v2468, %v2495
      %v2497 = vcombine.high %v2496, %v2496
      %v2499 = vunpack.c.l.s4 1983009808
      %v2500 = vunpack.c.0.s8 %v2499
      %v2501 = vlaneseq
      %v2502 = vshrl.u32 %v2501, 7
      %v2503 = vsub.s32 %v2500, %v2502
      %v2504 = vrot.slane %v2469, %v2503
      %v2505 = vcombine.high %v2504, %v2504
      %v2507 = vshrl.u32 %v2480, 16
      %v2509 = vrot.slane %v2507, 6
      %v2510 = vshll.u32 %v2480, 16
      %v2512 = vrot.slane %v2510, 7
      %v2513 = vor.u32 %v2509, %v2512
      %v2514 = vrot.slane %v2513, 2
      %v2516 = vshll.u32 %v2481, 16
      %v2518 = vrot.slane %v2516, 7
      %v2519 = vsel %vm424, %v2514, %v2518
      %v2521 = vshrl.u32 %v2488, 16
      %v2523 = vrot.slane %v2521, 6
      %v2524 = vshll.u32 %v2488, 16
      %v2526 = vrot.slane %v2524, 7
      %v2527 = vor.u32 %v2523, %v2526
      %v2528 = vrot.slane %v2527, 2
      %v2530 = vshll.u32 %v2489, 16
      %v2532 = vrot.slane %v2530, 7
      %v2533 = vsel %vm424, %v2528, %v2532
      %v2535 = vshrl.u32 %v2496, 16
      %v2537 = vrot.slane %v2535, 6
      %v2538 = vshll.u32 %v2496, 16
      %v2540 = vrot.slane %v2538, 7
      %v2541 = vor.u32 %v2537, %v2540
      %v2542 = vrot.slane %v2541, 2
      %v2544 = vshll.u32 %v2497, 16
      %v2546 = vrot.slane %v2544, 7
      %v2547 = vsel %vm424, %v2542, %v2546
      %v2549 = vshrl.u32 %v2504, 16
      %v2551 = vrot.slane %v2549, 6
      %v2552 = vshll.u32 %v2504, 16
      %v2554 = vrot.slane %v2552, 7
      %v2555 = vor.u32 %v2551, %v2554
      %v2556 = vrot.slane %v2555, 2
      %v2558 = vshll.u32 %v2505, 16
      %v2560 = vrot.slane %v2558, 7
      %v2561 = vsel %vm424, %v2556, %v2560
      %v2566 = vunpack.c.l.bf16 %v2519
      %v2567 = vunpack.c.l.bf16 %v2533
      %v2568 = vunpack.c.l.bf16 %v2547
      %v2569 = vunpack.c.l.bf16 %v2561
      %v2570 = vld [vmem:[%s6] sm:$0x1]
      %v2572 = vlaneseq
      %v2573 = vshrl.u32 %v2572, 7
      %v2574 = vsub.s32 0, %v2573
      %v2575 = vrot.slane %v2570, %v2574
      %v2595 = vunpack.c.l.b16 %v2448
      %v2596 = vunpack.c.l.b16 %v2449
      %v2597 = vunpack.c.l.b16 %v2450
      %v2598 = vunpack.c.l.b16 %v2451
      %v2599 = vunpack.c.l.b16 %v2452
      %v2600 = vunpack.c.l.b16 %v2453
      %v2601 = vunpack.c.l.b16 %v2454
      %v2602 = vunpack.c.l.b16 %v2455
      %v2603 = vunpack.c.l.b16 %v2456
      %v2604 = vunpack.c.l.b16 %v2457
      %v2605 = vunpack.c.l.b16 %v2458
      %v2606 = vunpack.c.l.b16 %v2459
      %v2607 = vunpack.c.l.b16 %v2460
      %v2608 = vunpack.c.l.b16 %v2461
      %v2609 = vunpack.c.l.b16 %v2462
      %v2610 = vunpack.c.l.b16 %v2463
      %v2611 = vunpack.c.l.b16 %v2464
      %v2612 = vunpack.c.l.b16 %v2465
      %v2613 = vpack.c.b16 %v2596, %v2595
      %v2614 = vpack.c.b16 %v2598, %v2597
      %v2615 = vpack.c.b16 %v2600, %v2599
      %v2616 = vpack.c.b16 %v2602, %v2601
      %v2617 = vpack.c.b16 %v2604, %v2603
      %v2618 = vpack.c.b16 %v2606, %v2605
      %v2619 = vpack.c.b16 %v2608, %v2607
      %v2620 = vpack.c.b16 %v2610, %v2609
      %v2621 = vpack.c.b16 %v2612, %v2611
      %v2632 = vsel %vm1544, %v2431, 0
      %2634 = vmatprep.subr.bf16.mxu0 0
      %2635 = vmatpush1.bf16.msra.mxu0 %v2613
      %2636 = vmatprep.subr.bf16.mxu0 0
      %2637 = vmatpush1.bf16.msra.mxu0 %v2614
      %2638 = vmatprep.subr.bf16.mxu0 0
      %2639 = vmatpush1.bf16.msra.mxu0 %v2615
      %2640 = vmatprep.subr.bf16.mxu0 0
      %2641 = vmatpush1.bf16.msra.mxu0 %v2616
      %2642 = vmatprep.subr.bf16.mxu0 0
      %2643 = vmatpush1.bf16.msra.mxu0 %v2617
      %2644 = vmatprep.subr.bf16.mxu0 0
      %2645 = vmatpush1.bf16.msra.mxu0 %v2618
      %2646 = vmatprep.subr.bf16.mxu0 0
      %2647 = vmatpush1.bf16.msra.mxu0 %v2619
      %2648 = vmatprep.subr.bf16.mxu0 0
      %2649 = vmatpush1.bf16.msra.mxu0 %v2620
      %2650 = vmatprep.subr.bf16.mxu0 0
      %2651 = vmatpush1.bf16.msra.mxu0 %v2621
      %2652 = vmatprep.subr.bf16.mxu0 0
      %2653 = vmatpush1.bf16.msra.mxu0 0
      %2654 = vmatprep.subr.bf16.mxu0 0
      %2655 = vmatpush1.bf16.msra.mxu0 0
      %2656 = vmatprep.subr.bf16.mxu0 0
      %2657 = vmatpush1.bf16.msra.mxu0 0
      %2658 = vmatprep.subr.bf16.mxu0 0
      %2659 = vmatpush1.bf16.msra.mxu0 0
      %2660 = vmatprep.subr.bf16.mxu0 0
      %2661 = vmatpush1.bf16.msra.mxu0 0
      %2662 = vmatprep.subr.bf16.mxu0 0
      %2663 = vmatpush1.bf16.msra.mxu0 0
      %2664 = vmatprep.subr.bf16.mxu0 0
      %2665 = vmatpush1.bf16.msra.mxu0 0
      %2666 = vmatprep.mubr.bf16.mxu0 %v2632
      %2667 = vmatmul.mubr.bf16.gmra.mrb[0].mxu0 %v2446
      %v2668 = vpop.f32.mrb[0].mxu0
      %v2669 = vadd.f32 %v2575, %v2668
      %v2670 = vpop.f32.mrb[0].mxu0
      %v2671 = vpop.f32.mrb[0].mxu0
      %v2672 = vadd.f32 %v2575, %v2671
      %v2673 = vpop.f32.mrb[0].mxu0
      %2674 = vdwg.mxu0
      %v2679 = vcombine.low %v2566, %v2567
      %v2680 = vcombine.low %v2568, %v2569
      %v2683 = vadd.f32 %v2669, %v2679
      %v2684 = vadd.f32 %v2672, %v2680
      %v2685 = vmax.f32 %v2683, 0.0
      %v2686 = vmax.f32 %v2684, 0.0
      %v2687 = vpack.c.bf16 %v2686, %v2685
      %v2689 = vunpack.c.l.b16 %v2687
      %v2690 = vunpack.c.h.b16 %v2687
      %v2691 = vpack.c.b16 %v2689, %v2689
      %v2692 = vpack.c.b16 %v2690, %v2690
      %vm2695 = vcmask 125952
      %2696 = vst.msk [vmem:[%s278] sm:$0xf] %vm2695, %v2691
      %2697 = vst.msk [vmem:[%s278 + $0x4] sm:$0xf] %vm2695, %v2692
      %p2698 = scmp.lt.s32.totalorder %s18, 1
      %s2699 = scalar_select %p2698, %s18, 1
      %s2700 = smul.addr %s2699, 2
      %s2701 = smul.addr %s2700, 4
      %s2702 = scalar_lea.vmem %s7, %s2701
      // Predicated region
      $region49: #{_unnamed_function_.4} parent=47 // pred_check
        %p2703 = pneg %p188
      $region50: #{_unnamed_function_.4} parent=47 // pred_check_branch
        %2705 = sbr.rel (%p2703) target = $region52
      $region51: #{_unnamed_function_.4} parent=47 // pred_region
        _
      $region52: #{_unnamed_function_.4} parent=47 // pred_fallthru
        _
    $region48: #{_unnamed_function_.4} parent=5 // pred_fallthru
      _
    %p2706 = scmp.le.s32.totalorder 2, %s13
    // Predicated region
    $region53: #{_unnamed_function_.4} parent=5 // pred_check
      %p2707 = pneg %p2706
    $region54: #{_unnamed_function_.4} parent=5 // pred_check_branch
      %2709 = sbr.rel (%p2707) target = $region56
    $region55: #{_unnamed_function_.4} parent=5 // pred_region
      %s2710 = ssub.s32 %s13, 2
      // Predicated region
      $region57: #{_unnamed_function_.4} parent=55 // pred_check
        %p2711 = pneg %p194
      $region58: #{_unnamed_function_.4} parent=55 // pred_check_branch
        %2713 = sbr.rel (%p2711) target = $region60
      $region59: #{_unnamed_function_.4} parent=55 // pred_region
        %p2714 = scmp.lt.s32.totalorder %s19, 1
        %s2715 = scalar_select %p2714, %s19, 1
        %s2716 = smul.addr %s2715, 2
        %s2717 = smul.addr %s2716, 4
        %s2718 = scalar_lea.vmem %s7, %s2717
      $region60: #{_unnamed_function_.4} parent=55 // pred_fallthru
        _
    $region56: #{_unnamed_function_.4} parent=5 // pred_fallthru
      _
  $region6: #{_unnamed_function_.4} parent=0 // loop_footer
    %s17 = sadd.s32 1, %s13
  $region7: #{_unnamed_function_.4} parent=0 // loop_footer_branch
    %12 = sbr.rel target = $region3
  $region8: #{_unnamed_function_.4} parent=0 // loop_exit
    _

// kernel: _unnamed_function_.3
$region0: #{_unnamed_function_.3}
  #allocation0 [shape = 'u32[]', space=smem, size = 0x4, offset = 0x4, fixed_abs, tag = 'smem constant byte address 0x4 - core index']
  #allocation1 [shape = 'u32[144,128]{1,0:T(1,128)}', space=vmem, size = 0x12000, scoped, tag = 'internal scratch']
  #allocation2 [shape = 'bf16[9,9,8]{2,1,0:T(8,128)(2,1)}', space=vmem, size = 0x9000, scoped, tag = 'scratch operand']
  #allocation3 [shape = 'bf16[10,10,8]{2,1,0:T(8,128)(2,1)}', space=vmem, size = 0xa000, scoped, tag = 'scratch operand']
  #allocation4 [shape = 'bf16[10,10,8]{2,1,0:T(8,128)(2,1)}', space=vmem, size = 0xa000, scoped, tag = 'scratch operand']
  %s0 = inlined_call_operand.vmem [shape: bf16[2,8,8,8], index: 0, kind: input, shape index: {}]
  %s1 = inlined_call_operand.vmem [shape: bf16[32,8], index: 1, kind: input, shape index: {}]
  %s2 = inlined_call_operand.vmem [shape: f32[1,8], index: 2, kind: input, shape index: {}]
  %s3 = inlined_call_operand.vmem [shape: bf16[72,8], index: 3, kind: input, shape index: {}]
  %s4 = inlined_call_operand.vmem [shape: f32[1,8], index: 4, kind: input, shape index: {}, may-alias: {4,6}]
  %s5 = inlined_call_operand.vmem [shape: bf16[72,8], index: 5, kind: input, shape index: {}]
  %s6 = inlined_call_operand.vmem [shape: f32[1,8], index: 6, kind: input, shape index: {}, may-alias: {4,6}]
  %s7 = inlined_call_operand.vmem [shape: bf16[2,64,8], index: 7, kind: output, shape index: {}]
  %s8 = sld [smem:[#allocation0]]
  $region61: #{_unnamed_function_.3} parent=0
    _
  %s10 = ssub.s32 1, %s8
  %s11 = scalar_select 0, %s10, %s8
  loop: start=0, step=1, limit=4
  $region2: #{_unnamed_function_.3} parent=0 // loop_pre_header
    _
  $region3: #{_unnamed_function_.3} parent=0 // loop_header
    %s13 = sphi 0, %s17
    %p14 = scmp.ge.s32.totalorder %s13, 4
    %s23 = sphi 0, %s25
    %s26 = sphi 0, %s23
    %s27 = sphi 0, %s26
    %s43 = sphi 0, %s27
    %s47 = sphi 0, %s47
    %s49 = sphi 0, %s47
    %s50 = sphi 0, %s49
    %s64 = sphi 0, %s50
    %s68 = sphi 0, %s68
    %s70 = sphi 0, %s68
    %s71 = sphi 0, %s70
    %s85 = sphi 0, %s71
    %s89 = sphi 0, %s89
    %s91 = sphi 0, %s89
    %s92 = sphi 0, %s91
    %s106 = sphi 0, %s92
    %s110 = sphi 0, %s110
    %s112 = sphi 0, %s110
    %s113 = sphi 0, %s112
    %s127 = sphi 0, %s113
    %s131 = sphi 0, %s131
    %s133 = sphi 0, %s131
    %s134 = sphi 0, %s133
    %s148 = sphi 0, %s134
    %s152 = sphi 0, %s152
    %s154 = sphi 0, %s152
    %s155 = sphi 0, %s154
    %s169 = sphi 0, %s155
    %s175 = sphi 0, %s177
    %s178 = sphi 0, %s175
    %s179 = sphi 0, %s178
    %s195 = sphi 0, %s179
  $region4: #{_unnamed_function_.3} parent=0 // loop_header_branch
    %16 = sbr.rel (%p14) target = $region8
  $region5: #{_unnamed_function_.3} parent=0 // loop_body
    %s18 = ssub.s32 %s13, 1
    %s19 = ssub.s32 %s13, 2
    %s20 = sadd.s32 %s13, 1
    %s21 = ssub.s32 %s13, %s20
    %p22 = scmp.eq.s32.totalorder %s21, 0
    %s24 = sadd.s32 %s23, 1
    %s25 = scalar_select %p22, %s23, %s24
    %p28 = pneg %p22
    %p29 = scmp.eq.s32.totalorder %s13, 1
    %p30 = por %p28, %p29
    %p31 = scmp.ne.s32.totalorder %s23, %s26
    %p32 = scmp.eq.s32.totalorder %s13, 0
    %p33 = por %p31, %p32
    %p34 = scmp.ne.s32.totalorder %s23, %s26
    %p35 = scmp.eq.s32.totalorder %s18, 1
    %p36 = por %p34, %p35
    %p37 = scmp.ne.s32.totalorder %s26, %s27
    %p38 = scmp.eq.s32.totalorder %s18, 0
    %p39 = por %p37, %p38
    %p40 = scmp.ne.s32.totalorder %s26, %s27
    %p41 = scmp.eq.s32.totalorder %s19, 1
    %p42 = por %p40, %p41
    %p44 = scmp.ne.s32.totalorder %s27, %s43
    %p45 = scmp.eq.s32.totalorder %s19, 0
    %p46 = por %p44, %p45
    %s48 = sadd.s32 %s47, 1
    %p51 = scmp.eq.s32.totalorder %s13, 1
    %p52 = scmp.ne.s32.totalorder %s47, %s49
    %p53 = scmp.eq.s32.totalorder %s13, 0
    %p54 = por %p52, %p53
    %p55 = scmp.ne.s32.totalorder %s47, %s49
    %p56 = scmp.eq.s32.totalorder %s18, 1
    %p57 = por %p55, %p56
    %p58 = scmp.ne.s32.totalorder %s49, %s50
    %p59 = scmp.eq.s32.totalorder %s18, 0
    %p60 = por %p58, %p59
    %p61 = scmp.ne.s32.totalorder %s49, %s50
    %p62 = scmp.eq.s32.totalorder %s19, 1
    %p63 = por %p61, %p62
    %p65 = scmp.ne.s32.totalorder %s50, %s64
    %p66 = scmp.eq.s32.totalorder %s19, 0
    %p67 = por %p65, %p66
    %s69 = sadd.s32 %s68, 1
    %p72 = scmp.eq.s32.totalorder %s13, 1
    %p73 = scmp.ne.s32.totalorder %s68, %s70
    %p74 = scmp.eq.s32.totalorder %s13, 0
    %p75 = por %p73, %p74
    %p76 = scmp.ne.s32.totalorder %s68, %s70
    %p77 = scmp.eq.s32.totalorder %s18, 1
    %p78 = por %p76, %p77
    %p79 = scmp.ne.s32.totalorder %s70, %s71
    %p80 = scmp.eq.s32.totalorder %s18, 0
    %p81 = por %p79, %p80
    %p82 = scmp.ne.s32.totalorder %s70, %s71
    %p83 = scmp.eq.s32.totalorder %s19, 1
    %p84 = por %p82, %p83
    %p86 = scmp.ne.s32.totalorder %s71, %s85
    %p87 = scmp.eq.s32.totalorder %s19, 0
    %p88 = por %p86, %p87
    %s90 = sadd.s32 %s89, 1
    %p93 = scmp.eq.s32.totalorder %s13, 1
    %p94 = scmp.ne.s32.totalorder %s89, %s91
    %p95 = scmp.eq.s32.totalorder %s13, 0
    %p96 = por %p94, %p95
    %p97 = scmp.ne.s32.totalorder %s89, %s91
    %p98 = scmp.eq.s32.totalorder %s18, 1
    %p99 = por %p97, %p98
    %p100 = scmp.ne.s32.totalorder %s91, %s92
    %p101 = scmp.eq.s32.totalorder %s18, 0
    %p102 = por %p100, %p101
    %p103 = scmp.ne.s32.totalorder %s91, %s92
    %p104 = scmp.eq.s32.totalorder %s19, 1
    %p105 = por %p103, %p104
    %p107 = scmp.ne.s32.totalorder %s92, %s106
    %p108 = scmp.eq.s32.totalorder %s19, 0
    %p109 = por %p107, %p108
    %s111 = sadd.s32 %s110, 1
    %p114 = scmp.eq.s32.totalorder %s13, 1
    %p115 = scmp.ne.s32.totalorder %s110, %s112
    %p116 = scmp.eq.s32.totalorder %s13, 0
    %p117 = por %p115, %p116
    %p118 = scmp.ne.s32.totalorder %s110, %s112
    %p119 = scmp.eq.s32.totalorder %s18, 1
    %p120 = por %p118, %p119
    %p121 = scmp.ne.s32.totalorder %s112, %s113
    %p122 = scmp.eq.s32.totalorder %s18, 0
    %p123 = por %p121, %p122
    %p124 = scmp.ne.s32.totalorder %s112, %s113
    %p125 = scmp.eq.s32.totalorder %s19, 1
    %p126 = por %p124, %p125
    %p128 = scmp.ne.s32.totalorder %s113, %s127
    %p129 = scmp.eq.s32.totalorder %s19, 0
    %p130 = por %p128, %p129
    %s132 = sadd.s32 %s131, 1
    %p135 = scmp.eq.s32.totalorder %s13, 1
    %p136 = scmp.ne.s32.totalorder %s131, %s133
    %p137 = scmp.eq.s32.totalorder %s13, 0
    %p138 = por %p136, %p137
    %p139 = scmp.ne.s32.totalorder %s131, %s133
    %p140 = scmp.eq.s32.totalorder %s18, 1
    %p141 = por %p139, %p140
    %p142 = scmp.ne.s32.totalorder %s133, %s134
    %p143 = scmp.eq.s32.totalorder %s18, 0
    %p144 = por %p142, %p143
    %p145 = scmp.ne.s32.totalorder %s133, %s134
    %p146 = scmp.eq.s32.totalorder %s19, 1
    %p147 = por %p145, %p146
    %p149 = scmp.ne.s32.totalorder %s134, %s148
    %p150 = scmp.eq.s32.totalorder %s19, 0
    %p151 = por %p149, %p150
    %s153 = sadd.s32 %s152, 1
    %p156 = scmp.eq.s32.totalorder %s13, 1
    %p157 = scmp.ne.s32.totalorder %s152, %s154
    %p158 = scmp.eq.s32.totalorder %s13, 0
    %p159 = por %p157, %p158
    %p160 = scmp.ne.s32.totalorder %s152, %s154
    %p161 = scmp.eq.s32.totalorder %s18, 1
    %p162 = por %p160, %p161
    %p163 = scmp.ne.s32.totalorder %s154, %s155
    %p164 = scmp.eq.s32.totalorder %s18, 0
    %p165 = por %p163, %p164
    %p166 = scmp.ne.s32.totalorder %s154, %s155
    %p167 = scmp.eq.s32.totalorder %s19, 1
    %p168 = por %p166, %p167
    %p170 = scmp.ne.s32.totalorder %s155, %s169
    %p171 = scmp.eq.s32.totalorder %s19, 0
    %p172 = por %p170, %p171
    %s173 = ssub.s32 %s13, %s20
    %p174 = scmp.eq.s32.totalorder %s173, 0
    %s176 = sadd.s32 %s175, 1
    %s177 = scalar_select %p174, %s175, %s176
    %p180 = pneg %p174
    %p181 = scmp.eq.s32.totalorder %s13, 1
    %p182 = por %p180, %p181
    %p183 = scmp.ne.s32.totalorder %s175, %s178
    %p184 = scmp.eq.s32.totalorder %s13, 0
    %p185 = por %p183, %p184
    %p186 = scmp.ne.s32.totalorder %s175, %s178
    %p187 = scmp.eq.s32.totalorder %s18, 1
    %p188 = por %p186, %p187
    %p189 = scmp.ne.s32.totalorder %s178, %s179
    %p190 = scmp.eq.s32.totalorder %s18, 0
    %p191 = por %p189, %p190
    %p192 = scmp.ne.s32.totalorder %s178, %s179
    %p193 = scmp.eq.s32.totalorder %s19, 1
    %p194 = por %p192, %p193
    %p196 = scmp.ne.s32.totalorder %s179, %s195
    %p197 = scmp.eq.s32.totalorder %s19, 0
    %p198 = por %p196, %p197
    %p199 = scmp.le.s32.totalorder 1, %s13
    %p200 = scmp.lt.s32.totalorder %s13, 3
    %p201 = pnand %p199, %p200
    %p202 = pneg %p201
    // Predicated region
    $region9: #{_unnamed_function_.3} parent=5 // pred_check
      _
    $region10: #{_unnamed_function_.3} parent=5 // pred_check_branch
      %204 = sbr.rel (%p201) target = $region12
    $region11: #{_unnamed_function_.3} parent=5 // pred_region
      %s205 = ssub.s32 %s13, 1
      // Predicated region
      $region13: #{_unnamed_function_.3} parent=11 // pred_check
        %p206 = pneg %p60
      $region14: #{_unnamed_function_.3} parent=11 // pred_check_branch
        %208 = sbr.rel (%p206) target = $region16
      $region15: #{_unnamed_function_.3} parent=11 // pred_region
        _
      $region16: #{_unnamed_function_.3} parent=11 // pred_fallthru
        _
      // Predicated region
      $region17: #{_unnamed_function_.3} parent=11 // pred_check
        %p209 = pneg %p81
      $region18: #{_unnamed_function_.3} parent=11 // pred_check_branch
        %211 = sbr.rel (%p209) target = $region20
      $region19: #{_unnamed_function_.3} parent=11 // pred_region
        _
      $region20: #{_unnamed_function_.3} parent=11 // pred_fallthru
        _
      // Predicated region
      $region21: #{_unnamed_function_.3} parent=11 // pred_check
        %p212 = pneg %p102
      $region22: #{_unnamed_function_.3} parent=11 // pred_check_branch
        %214 = sbr.rel (%p212) target = $region24
      $region23: #{_unnamed_function_.3} parent=11 // pred_region
        _
      $region24: #{_unnamed_function_.3} parent=11 // pred_fallthru
        _
      // Predicated region
      $region25: #{_unnamed_function_.3} parent=11 // pred_check
        %p215 = pneg %p123
      $region26: #{_unnamed_function_.3} parent=11 // pred_check_branch
        %217 = sbr.rel (%p215) target = $region28
      $region27: #{_unnamed_function_.3} parent=11 // pred_region
        _
      $region28: #{_unnamed_function_.3} parent=11 // pred_fallthru
        _
      // Predicated region
      $region29: #{_unnamed_function_.3} parent=11 // pred_check
        %p218 = pneg %p144
      $region30: #{_unnamed_function_.3} parent=11 // pred_check_branch
        %220 = sbr.rel (%p218) target = $region32
      $region31: #{_unnamed_function_.3} parent=11 // pred_region
        _
      $region32: #{_unnamed_function_.3} parent=11 // pred_fallthru
        _
      // Predicated region
      $region33: #{_unnamed_function_.3} parent=11 // pred_check
        %p221 = pneg %p165
      $region34: #{_unnamed_function_.3} parent=11 // pred_check_branch
        %223 = sbr.rel (%p221) target = $region36
      $region35: #{_unnamed_function_.3} parent=11 // pred_region
        _
      $region36: #{_unnamed_function_.3} parent=11 // pred_fallthru
        _
    $region12: #{_unnamed_function_.3} parent=5 // pred_fallthru
      _
    %p224 = scmp.lt.s32.totalorder %s13, 2
    // Predicated region
    $region37: #{_unnamed_function_.3} parent=5 // pred_check
      %p225 = pneg %p224
    $region38: #{_unnamed_function_.3} parent=5 // pred_check_branch
      %227 = sbr.rel (%p225) target = $region40
    $region39: #{_unnamed_function_.3} parent=5 // pred_region
      // Predicated region
      $region41: #{_unnamed_function_.3} parent=39 // pred_check
        %p228 = pneg %p33
      $region42: #{_unnamed_function_.3} parent=39 // pred_check_branch
        %230 = sbr.rel (%p228) target = $region44
      $region43: #{_unnamed_function_.3} parent=39 // pred_region
        %p231 = scmp.lt.s32.totalorder %s13, 1
        %s232 = scalar_select %p231, %s13, 1
        %s233 = smul.addr %s232, 8
        %s234 = smul.addr %s233, 4
        %s235 = scalar_lea.vmem %s0, %s234
      $region44: #{_unnamed_function_.3} parent=39 // pred_fallthru
        _
    $region40: #{_unnamed_function_.3} parent=5 // pred_fallthru
      _
    %p236 = scmp.le.s32.totalorder 1, %s13
    %p237 = scmp.lt.s32.totalorder %s13, 3
    %p238 = pnand %p236, %p237
    %p239 = pneg %p238
    // Predicated region
    $region45: #{_unnamed_function_.3} parent=5 // pred_check
      _
    $region46: #{_unnamed_function_.3} parent=5 // pred_check_branch
      %241 = sbr.rel (%p238) target = $region48
    $region47: #{_unnamed_function_.3} parent=5 // pred_region
      %s242 = ssub.s32 %s13, 1
      %p243 = scmp.lt.s32.totalorder %s18, 1
      %s244 = scalar_select %p243, %s18, 1
      %s245 = smul.addr %s244, 8
      %s246 = smul.addr %s245, 4
      %s247 = scalar_lea.vmem %s0, %s246
      %p248 = pneg %p39
      %p249 = pneg %p36
      %p250 = pneg %p60
      %p251 = pneg %p57
      %p252 = pneg %p81
      %p253 = pneg %p78
      %p254 = pneg %p102
      %p255 = pneg %p99
      %p256 = pneg %p123
      %p257 = pneg %p120
      %p258 = pneg %p144
      %p259 = pneg %p141
      %p260 = pneg %p165
      %p261 = pneg %p162
      %p262 = pneg %p191
      %p263 = pneg %p188
      %p264 = scmp.lt.s32.totalorder %s18, 1
      %s265 = scalar_select %p264, %s18, 1
      %s266 = smul.addr %s265, 8
      %s267 = smul.addr %s266, 4
      %s268 = scalar_lea.vmem %s7, %s267
      %p269 = scmp.lt.s32.totalorder %s18, 1
      %s270 = scalar_select %p269, %s18, 1
      %s271 = smul.addr %s270, 8
      %s272 = smul.addr %s271, 4
      %s273 = scalar_lea.vmem %s0, %s272
      %p274 = scmp.lt.s32.totalorder %s18, 1
      %s275 = scalar_select %p274, %s18, 1
      %s276 = smul.addr %s275, 8
      %s277 = smul.addr %s276, 4
      %s278 = scalar_lea.vmem %s7, %s277
      %v280 = vld [vmem:[%s273] sm:$0xf]
      %v281 = vld [vmem:[%s273 + $0x4] sm:$0xf]
      %v282 = vld [vmem:[%s273 + $0x8] sm:$0xf]
      %v283 = vld [vmem:[%s273 + $0xc] sm:$0xf]
      %v284 = vld [vmem:[%s273 + $0x10] sm:$0xf]
      %v285 = vld [vmem:[%s273 + $0x14] sm:$0xf]
      %v286 = vld [vmem:[%s273 + $0x18] sm:$0xf]
      %v287 = vld [vmem:[%s273 + $0x1c] sm:$0xf]
      %vm288 = vcmask 60416
      %289 = vst.msk [vmem:[#allocation2] sm:$0xf] %vm288, 0
      %vm290 = vcmask 57344
      %vm291 = vsmask.f32 256
      %vm292 = vmand %vm290, %vm291
      %v293 = vld [vmem:[#allocation2 + $0x4] sm:$0x1]
      %v294 = vsel %vm292, 0, %v293
      %295 = vst [vmem:[#allocation2 + $0x4] sm:$0x1] %v294
      %v304 = vunpack.c.l.b16 %v280
      %v305 = vunpack.c.l.b16 %v281
      %v306 = vunpack.c.l.b16 %v282
      %v307 = vunpack.c.l.b16 %v283
      %v308 = vunpack.c.l.b16 %v284
      %v309 = vunpack.c.l.b16 %v285
      %v310 = vunpack.c.l.b16 %v286
      %v311 = vunpack.c.l.b16 %v287
      %v312 = vpack.c.b16 %v304, %v304
      %v313 = vpack.c.b16 %v305, %v305
      %v314 = vpack.c.b16 %v306, %v306
      %v315 = vpack.c.b16 %v307, %v307
      %v316 = vpack.c.b16 %v308, %v308
      %v317 = vpack.c.b16 %v309, %v309
      %v318 = vpack.c.b16 %v310, %v310
      %v319 = vpack.c.b16 %v311, %v311
      %v321 = vshrl.u32 %v312, 16
      %v323 = vrot.slane %v321, 7
      %v324 = vshll.u32 %v312, 16
      %v326 = vor.u32 %v323, %v324
      %v328 = vshrl.u32 %v313, 16
      %v330 = vrot.slane %v328, 7
      %v331 = vshll.u32 %v313, 16
      %v333 = vor.u32 %v330, %v331
      %v335 = vshrl.u32 %v314, 16
      %v337 = vrot.slane %v335, 7
      %v338 = vshll.u32 %v314, 16
      %v340 = vor.u32 %v337, %v338
      %v342 = vshrl.u32 %v315, 16
      %v344 = vrot.slane %v342, 7
      %v345 = vshll.u32 %v315, 16
      %v347 = vor.u32 %v344, %v345
      %v349 = vshrl.u32 %v316, 16
      %v351 = vrot.slane %v349, 7
      %v352 = vshll.u32 %v316, 16
      %v354 = vor.u32 %v351, %v352
      %v356 = vshrl.u32 %v317, 16
      %v358 = vrot.slane %v356, 7
      %v359 = vshll.u32 %v317, 16
      %v361 = vor.u32 %v358, %v359
      %v363 = vshrl.u32 %v318, 16
      %v365 = vrot.slane %v363, 7
      %v366 = vshll.u32 %v318, 16
      %v368 = vor.u32 %v365, %v366
      %v370 = vshrl.u32 %v319, 16
      %v372 = vrot.slane %v370, 7
      %v373 = vshll.u32 %v319, 16
      %v375 = vor.u32 %v372, %v373
      %vm384 = vcmask 1040384
      %vm385 = vmand %vm384, %vm291
      %v386 = vsel %vm385, 0, %v326
      %v387 = vsel %vm385, 0, %v333
      %v388 = vsel %vm385, 0, %v340
      %v389 = vsel %vm385, 0, %v347
      %v390 = vsel %vm385, 0, %v354
      %v391 = vsel %vm385, 0, %v361
      %v392 = vsel %vm385, 0, %v368
      %v393 = vsel %vm385, 0, %v375
      %v402 = vunpack.c.l.b16 %v386
      %v403 = vunpack.c.h.b16 %v386
      %v404 = vunpack.c.l.b16 %v387
      %v405 = vunpack.c.h.b16 %v387
      %v406 = vunpack.c.l.b16 %v388
      %v407 = vunpack.c.h.b16 %v388
      %v408 = vunpack.c.l.b16 %v389
      %v409 = vunpack.c.h.b16 %v389
      %v410 = vunpack.c.l.b16 %v390
      %v411 = vunpack.c.h.b16 %v390
      %v412 = vunpack.c.l.b16 %v391
      %v413 = vunpack.c.h.b16 %v391
      %v414 = vunpack.c.l.b16 %v392
      %v415 = vunpack.c.h.b16 %v392
      %v416 = vunpack.c.l.b16 %v393
      %v417 = vunpack.c.h.b16 %v393
      %v418 = vpack.c.b16 %v402, %v402
      %v419 = vpack.c.b16 %v403, %v403
      %v420 = vpack.c.b16 %v404, %v404
      %v421 = vpack.c.b16 %v405, %v405
      %v422 = vpack.c.b16 %v406, %v406
      %v423 = vpack.c.b16 %v407, %v407
      %v424 = vpack.c.b16 %v408, %v408
      %v425 = vpack.c.b16 %v409, %v409
      %v426 = vpack.c.b16 %v410, %v410
      %v427 = vpack.c.b16 %v411, %v411
      %v428 = vpack.c.b16 %v412, %v412
      %v429 = vpack.c.b16 %v413, %v413
      %v430 = vpack.c.b16 %v414, %v414
      %v431 = vpack.c.b16 %v415, %v415
      %v432 = vpack.c.b16 %v416, %v416
      %v433 = vpack.c.b16 %v417, %v417
      %s450 = scalar_lea.vmem [#allocation2], 8
      %451 = vst.msk [vmem:[%s450] sm:$0xf] %vm288, %v418
      %v452 = vld [vmem:[%s450 + $0x4] sm:$0x1]
      %v453 = vsel %vm292, %v419, %v452
      %454 = vst [vmem:[%s450 + $0x4] sm:$0x1] %v453
      %455 = vst.msk [vmem:[%s450 + $0x8] sm:$0xf] %vm288, %v420
      %v456 = vld [vmem:[%s450 + $0xc] sm:$0x1]
      %v457 = vsel %vm292, %v421, %v456
      %458 = vst [vmem:[%s450 + $0xc] sm:$0x1] %v457
      %459 = vst.msk [vmem:[%s450 + $0x10] sm:$0xf] %vm288, %v422
      %v460 = vld [vmem:[%s450 + $0x14] sm:$0x1]
      %v461 = vsel %vm292, %v423, %v460
      %462 = vst [vmem:[%s450 + $0x14] sm:$0x1] %v461
      %463 = vst.msk [vmem:[%s450 + $0x18] sm:$0xf] %vm288, %v424
      %v464 = vld [vmem:[%s450 + $0x1c] sm:$0x1]
      %v465 = vsel %vm292, %v425, %v464
      %466 = vst [vmem:[%s450 + $0x1c] sm:$0x1] %v465
      %467 = vst.msk [vmem:[%s450 + $0x20] sm:$0xf] %vm288, %v426
      %v468 = vld [vmem:[%s450 + $0x24] sm:$0x1]
      %v469 = vsel %vm292, %v427, %v468
      %470 = vst [vmem:[%s450 + $0x24] sm:$0x1] %v469
      %471 = vst.msk [vmem:[%s450 + $0x28] sm:$0xf] %vm288, %v428
      %v472 = vld [vmem:[%s450 + $0x2c] sm:$0x1]
      %v473 = vsel %vm292, %v429, %v472
      %474 = vst [vmem:[%s450 + $0x2c] sm:$0x1] %v473
      %475 = vst.msk [vmem:[%s450 + $0x30] sm:$0xf] %vm288, %v430
      %v476 = vld [vmem:[%s450 + $0x34] sm:$0x1]
      %v477 = vsel %vm292, %v431, %v476
      %478 = vst [vmem:[%s450 + $0x34] sm:$0x1] %v477
      %479 = vst.msk [vmem:[%s450 + $0x38] sm:$0xf] %vm288, %v432
      %v480 = vld [vmem:[%s450 + $0x3c] sm:$0x1]
      %v481 = vsel %vm292, %v433, %v480
      %482 = vst [vmem:[%s450 + $0x3c] sm:$0x1] %v481
      %v483 = vld [vmem:[#allocation2] sm:$0xf]
      %v484 = vld [vmem:[#allocation2 + $0x8] sm:$0xf]
      %v485 = vld [vmem:[#allocation2 + $0x10] sm:$0xf]
      %v486 = vld [vmem:[#allocation2 + $0x18] sm:$0xf]
      %v487 = vld [vmem:[#allocation2 + $0x20] sm:$0xf]
      %v488 = vld [vmem:[#allocation2 + $0x28] sm:$0xf]
      %v489 = vld [vmem:[#allocation2 + $0x30] sm:$0xf]
      %v490 = vld [vmem:[#allocation2 + $0x38] sm:$0xf]
      %v491 = vld [vmem:[#allocation2 + $0x4] sm:$0x1]
      %v492 = vld [vmem:[#allocation2 + $0xc] sm:$0x1]
      %v493 = vld [vmem:[#allocation2 + $0x14] sm:$0x1]
      %v494 = vld [vmem:[#allocation2 + $0x1c] sm:$0x1]
      %v495 = vld [vmem:[#allocation2 + $0x24] sm:$0x1]
      %v496 = vld [vmem:[#allocation2 + $0x2c] sm:$0x1]
      %v497 = vld [vmem:[#allocation2 + $0x34] sm:$0x1]
      %v498 = vld [vmem:[#allocation2 + $0x3c] sm:$0x1]
      %vm499 = vsmask.f32 3328
      %vm500 = vsmask.f32 7440
      %vm501 = vmor %vm499, %vm500
      %v503 = vshrl.u32 %v483, 16
      %v505 = vrot.slane %v503, 4
      %v506 = vshll.u32 %v483, 16
      %v508 = vrot.slane %v506, 5
      %v509 = vor.u32 %v505, %v508
      %v510 = vrot.slane %v509, 4
      %v512 = vshll.u32 %v491, 16
      %v514 = vrot.slane %v512, 5
      %v515 = vsel %vm501, %v510, %v514
      %v517 = vshrl.u32 %v484, 16
      %v519 = vrot.slane %v517, 4
      %v520 = vshll.u32 %v484, 16
      %v522 = vrot.slane %v520, 5
      %v523 = vor.u32 %v519, %v522
      %v524 = vrot.slane %v523, 4
      %v526 = vshll.u32 %v492, 16
      %v528 = vrot.slane %v526, 5
      %v529 = vsel %vm501, %v524, %v528
      %v531 = vshrl.u32 %v485, 16
      %v533 = vrot.slane %v531, 4
      %v534 = vshll.u32 %v485, 16
      %v536 = vrot.slane %v534, 5
      %v537 = vor.u32 %v533, %v536
      %v538 = vrot.slane %v537, 4
      %v540 = vshll.u32 %v493, 16
      %v542 = vrot.slane %v540, 5
      %v543 = vsel %vm501, %v538, %v542
      %v545 = vshrl.u32 %v486, 16
      %v547 = vrot.slane %v545, 4
      %v548 = vshll.u32 %v486, 16
      %v550 = vrot.slane %v548, 5
      %v551 = vor.u32 %v547, %v550
      %v552 = vrot.slane %v551, 4
      %v554 = vshll.u32 %v494, 16
      %v556 = vrot.slane %v554, 5
      %v557 = vsel %vm501, %v552, %v556
      %v559 = vshrl.u32 %v487, 16
      %v561 = vrot.slane %v559, 4
      %v562 = vshll.u32 %v487, 16
      %v564 = vrot.slane %v562, 5
      %v565 = vor.u32 %v561, %v564
      %v566 = vrot.slane %v565, 4
      %v568 = vshll.u32 %v495, 16
      %v570 = vrot.slane %v568, 5
      %v571 = vsel %vm501, %v566, %v570
      %v573 = vshrl.u32 %v488, 16
      %v575 = vrot.slane %v573, 4
      %v576 = vshll.u32 %v488, 16
      %v578 = vrot.slane %v576, 5
      %v579 = vor.u32 %v575, %v578
      %v580 = vrot.slane %v579, 4
      %v582 = vshll.u32 %v496, 16
      %v584 = vrot.slane %v582, 5
      %v585 = vsel %vm501, %v580, %v584
      %v587 = vshrl.u32 %v489, 16
      %v589 = vrot.slane %v587, 4
      %v590 = vshll.u32 %v489, 16
      %v592 = vrot.slane %v590, 5
      %v593 = vor.u32 %v589, %v592
      %v594 = vrot.slane %v593, 4
      %v596 = vshll.u32 %v497, 16
      %v598 = vrot.slane %v596, 5
      %v599 = vsel %vm501, %v594, %v598
      %v601 = vshrl.u32 %v490, 16
      %v603 = vrot.slane %v601, 4
      %v604 = vshll.u32 %v490, 16
      %v606 = vrot.slane %v604, 5
      %v607 = vor.u32 %v603, %v606
      %v608 = vrot.slane %v607, 4
      %v610 = vshll.u32 %v498, 16
      %v612 = vrot.slane %v610, 5
      %v613 = vsel %vm501, %v608, %v612
      %v614 = vld [vmem:[%s450] sm:$0xf]
      %v615 = vld [vmem:[%s450 + $0x8] sm:$0xf]
      %v616 = vld [vmem:[%s450 + $0x10] sm:$0xf]
      %v617 = vld [vmem:[%s450 + $0x18] sm:$0xf]
      %v618 = vld [vmem:[%s450 + $0x20] sm:$0xf]
      %v619 = vld [vmem:[%s450 + $0x28] sm:$0xf]
      %v620 = vld [vmem:[%s450 + $0x30] sm:$0xf]
      %v621 = vld [vmem:[%s450 + $0x38] sm:$0xf]
      %v622 = vld [vmem:[%s450 + $0x4] sm:$0x1]
      %v623 = vld [vmem:[%s450 + $0xc] sm:$0x1]
      %v624 = vld [vmem:[%s450 + $0x14] sm:$0x1]
      %v625 = vld [vmem:[%s450 + $0x1c] sm:$0x1]
      %v626 = vld [vmem:[%s450 + $0x24] sm:$0x1]
      %v627 = vld [vmem:[%s450 + $0x2c] sm:$0x1]
      %v628 = vld [vmem:[%s450 + $0x34] sm:$0x1]
      %v629 = vld [vmem:[%s450 + $0x3c] sm:$0x1]
      %v631 = vshrl.u32 %v614, 16
      %v633 = vrot.slane %v631, 4
      %v634 = vshll.u32 %v614, 16
      %v636 = vrot.slane %v634, 5
      %v637 = vor.u32 %v633, %v636
      %v638 = vrot.slane %v637, 4
      %v640 = vshll.u32 %v622, 16
      %v642 = vrot.slane %v640, 5
      %v643 = vsel %vm501, %v638, %v642
      %v645 = vshrl.u32 %v615, 16
      %v647 = vrot.slane %v645, 4
      %v648 = vshll.u32 %v615, 16
      %v650 = vrot.slane %v648, 5
      %v651 = vor.u32 %v647, %v650
      %v652 = vrot.slane %v651, 4
      %v654 = vshll.u32 %v623, 16
      %v656 = vrot.slane %v654, 5
      %v657 = vsel %vm501, %v652, %v656
      %v659 = vshrl.u32 %v616, 16
      %v661 = vrot.slane %v659, 4
      %v662 = vshll.u32 %v616, 16
      %v664 = vrot.slane %v662, 5
      %v665 = vor.u32 %v661, %v664
      %v666 = vrot.slane %v665, 4
      %v668 = vshll.u32 %v624, 16
      %v670 = vrot.slane %v668, 5
      %v671 = vsel %vm501, %v666, %v670
      %v673 = vshrl.u32 %v617, 16
      %v675 = vrot.slane %v673, 4
      %v676 = vshll.u32 %v617, 16
      %v678 = vrot.slane %v676, 5
      %v679 = vor.u32 %v675, %v678
      %v680 = vrot.slane %v679, 4
      %v682 = vshll.u32 %v625, 16
      %v684 = vrot.slane %v682, 5
      %v685 = vsel %vm501, %v680, %v684
      %v687 = vshrl.u32 %v618, 16
      %v689 = vrot.slane %v687, 4
      %v690 = vshll.u32 %v618, 16
      %v692 = vrot.slane %v690, 5
      %v693 = vor.u32 %v689, %v692
      %v694 = vrot.slane %v693, 4
      %v696 = vshll.u32 %v626, 16
      %v698 = vrot.slane %v696, 5
      %v699 = vsel %vm501, %v694, %v698
      %v701 = vshrl.u32 %v619, 16
      %v703 = vrot.slane %v701, 4
      %v704 = vshll.u32 %v619, 16
      %v706 = vrot.slane %v704, 5
      %v707 = vor.u32 %v703, %v706
      %v708 = vrot.slane %v707, 4
      %v710 = vshll.u32 %v627, 16
      %v712 = vrot.slane %v710, 5
      %v713 = vsel %vm501, %v708, %v712
      %v715 = vshrl.u32 %v620, 16
      %v717 = vrot.slane %v715, 4
      %v718 = vshll.u32 %v620, 16
      %v720 = vrot.slane %v718, 5
      %v721 = vor.u32 %v717, %v720
      %v722 = vrot.slane %v721, 4
      %v724 = vshll.u32 %v628, 16
      %v726 = vrot.slane %v724, 5
      %v727 = vsel %vm501, %v722, %v726
      %v729 = vshrl.u32 %v621, 16
      %v731 = vrot.slane %v729, 4
      %v732 = vshll.u32 %v621, 16
      %v734 = vrot.slane %v732, 5
      %v735 = vor.u32 %v731, %v734
      %v736 = vrot.slane %v735, 4
      %v738 = vshll.u32 %v629, 16
      %v740 = vrot.slane %v738, 5
      %v741 = vsel %vm501, %v736, %v740
      %v750 = vunpack.c.l.b16 %v483
      %v751 = vunpack.c.l.b16 %v484
      %v752 = vunpack.c.l.b16 %v485
      %v753 = vunpack.c.l.b16 %v486
      %v754 = vunpack.c.l.b16 %v487
      %v755 = vunpack.c.l.b16 %v488
      %v756 = vunpack.c.l.b16 %v489
      %v757 = vunpack.c.l.b16 %v490
      %v758 = vpack.c.b16 %v751, %v750
      %v759 = vpack.c.b16 %v753, %v752
      %v760 = vpack.c.b16 %v755, %v754
      %v761 = vpack.c.b16 %v757, %v756
      %v762 = vunpack.c.l.b16 %v515
      %v763 = vunpack.c.l.b16 %v529
      %v764 = vunpack.c.l.b16 %v543
      %v765 = vunpack.c.l.b16 %v557
      %v766 = vunpack.c.l.b16 %v571
      %v767 = vunpack.c.l.b16 %v585
      %v768 = vunpack.c.l.b16 %v599
      %v769 = vunpack.c.l.b16 %v613
      %v770 = vpack.c.b16 %v763, %v762
      %v771 = vpack.c.b16 %v765, %v764
      %v772 = vpack.c.b16 %v767, %v766
      %v773 = vpack.c.b16 %v769, %v768
      %774 = vrot.lane.b32.xlu0 %v770, 8
      %v775 = vpop.permute.xlu0 %774
      %776 = vrot.lane.b32.xlu0 %v771, 8
      %v777 = vpop.permute.xlu0 %776
      %778 = vrot.lane.b32.xlu0 %v772, 8
      %v779 = vpop.permute.xlu0 %778
      %780 = vrot.lane.b32.xlu0 %v773, 8
      %v781 = vpop.permute.xlu0 %780
      %v790 = vunpack.c.l.b16 %v614
      %v791 = vunpack.c.l.b16 %v615
      %v792 = vunpack.c.l.b16 %v616
      %v793 = vunpack.c.l.b16 %v617
      %v794 = vunpack.c.l.b16 %v618
      %v795 = vunpack.c.l.b16 %v619
      %v796 = vunpack.c.l.b16 %v620
      %v797 = vunpack.c.l.b16 %v621
      %v798 = vpack.c.b16 %v791, %v790
      %v799 = vpack.c.b16 %v793, %v792
      %v800 = vpack.c.b16 %v795, %v794
      %v801 = vpack.c.b16 %v797, %v796
      %802 = vrot.lane.b32.xlu0 %v798, 16
      %v803 = vpop.permute.xlu0 %802
      %804 = vrot.lane.b32.xlu0 %v799, 16
      %v805 = vpop.permute.xlu0 %804
      %806 = vrot.lane.b32.xlu0 %v800, 16
      %v807 = vpop.permute.xlu0 %806
      %808 = vrot.lane.b32.xlu0 %v801, 16
      %v809 = vpop.permute.xlu0 %808
      %v810 = vunpack.c.l.b16 %v643
      %v811 = vunpack.c.l.b16 %v657
      %v812 = vunpack.c.l.b16 %v671
      %v813 = vunpack.c.l.b16 %v685
      %v814 = vunpack.c.l.b16 %v699
      %v815 = vunpack.c.l.b16 %v713
      %v816 = vunpack.c.l.b16 %v727
      %v817 = vunpack.c.l.b16 %v741
      %v818 = vpack.c.b16 %v811, %v810
      %v819 = vpack.c.b16 %v813, %v812
      %v820 = vpack.c.b16 %v815, %v814
      %v821 = vpack.c.b16 %v817, %v816
      %822 = vrot.lane.b32.xlu0 %v818, 24
      %v823 = vpop.permute.xlu0 %822
      %824 = vrot.lane.b32.xlu0 %v819, 24
      %v825 = vpop.permute.xlu0 %824
      %826 = vrot.lane.b32.xlu0 %v820, 24
      %v827 = vpop.permute.xlu0 %826
      %828 = vrot.lane.b32.xlu0 %v821, 24
      %v829 = vpop.permute.xlu0 %828
      %vm830 = vcmask 64512
      %v833 = vsel %vm830, %v758, %v775
      %v836 = vsel %vm830, %v759, %v777
      %v839 = vsel %vm830, %v760, %v779
      %v842 = vsel %vm830, %v761, %v781
      %vm843 = vcmask 130048
      %v845 = vsel %vm843, %v833, %v803
      %v847 = vsel %vm843, %v836, %v805
      %v849 = vsel %vm843, %v839, %v807
      %v851 = vsel %vm843, %v842, %v809
      %vm852 = vcmask 195584
      %v854 = vsel %vm852, %v845, %v823
      %v856 = vsel %vm852, %v847, %v825
      %v858 = vsel %vm852, %v849, %v827
      %v860 = vsel %vm852, %v851, %v829
      %v861 = vld [vmem:[%s1] sm:$0xf]
      %v862 = vld [vmem:[%s1 + $0x4] sm:$0xf]
      %v863 = vld [vmem:[%s1 + $0x8] sm:$0xf]
      %v864 = vld [vmem:[%s1 + $0xc] sm:$0xf]
      %v865 = vld [vmem:[%s2] sm:$0x1]
      %v867 = vlaneseq
      %v868 = vshrl.u32 %v867, 7
      %v869 = vsub.s32 0, %v868
      %v870 = vrot.slane %v865, %v869
      %v876 = vunpack.c.l.b16 %v861
      %v877 = vunpack.c.l.b16 %v862
      %v878 = vunpack.c.l.b16 %v863
      %v879 = vunpack.c.l.b16 %v864
      %v880 = vpack.c.b16 %v877, %v876
      %v881 = vpack.c.b16 %v879, %v878
      %vm884 = vcmask 261120
      %v885 = vsel %vm884, %v854, 0
      %v887 = vsel %vm884, %v856, 0
      %v889 = vsel %vm884, %v858, 0
      %v891 = vsel %vm884, %v860, 0
      %893 = vmatprep.subr.bf16.mxu0 0
      %894 = vmatpush1.bf16.msra.mxu0 %v880
      %895 = vmatprep.subr.bf16.mxu0 0
      %896 = vmatpush1.bf16.msra.mxu0 %v881
      %897 = vmatprep.subr.bf16.mxu0 0
      %898 = vmatpush1.bf16.msra.mxu0 0
      %899 = vmatprep.subr.bf16.mxu0 0
      %900 = vmatpush1.bf16.msra.mxu0 0
      %901 = vmatprep.subr.bf16.mxu0 0
      %902 = vmatpush1.bf16.msra.mxu0 0
      %903 = vmatprep.subr.bf16.mxu0 0
      %904 = vmatpush1.bf16.msra.mxu0 0
      %905 = vmatprep.subr.bf16.mxu0 0
      %906 = vmatpush1.bf16.msra.mxu0 0
      %907 = vmatprep.subr.bf16.mxu0 0
      %908 = vmatpush1.bf16.msra.mxu0 0
      %909 = vmatprep.subr.bf16.mxu0 0
      %910 = vmatpush1.bf16.msra.mxu0 0
      %911 = vmatprep.subr.bf16.mxu0 0
      %912 = vmatpush1.bf16.msra.mxu0 0
      %913 = vmatprep.subr.bf16.mxu0 0
      %914 = vmatpush1.bf16.msra.mxu0 0
      %915 = vmatprep.subr.bf16.mxu0 0
      %916 = vmatpush1.bf16.msra.mxu0 0
      %917 = vmatprep.subr.bf16.mxu0 0
      %918 = vmatpush1.bf16.msra.mxu0 0
      %919 = vmatprep.subr.bf16.mxu0 0
      %920 = vmatpush1.bf16.msra.mxu0 0
      %921 = vmatprep.subr.bf16.mxu0 0
      %922 = vmatpush1.bf16.msra.mxu0 0
      %923 = vmatprep.subr.bf16.mxu0 0
      %924 = vmatpush1.bf16.msra.mxu0 0
      %925 = vmatprep.mubr.bf16.mxu0 0
      %926 = vmatmul.mubr.bf16.gmra.mrb[0].mxu0 %v885
      %v927 = vpop.f32.mrb[0].mxu0
      %v928 = vadd.f32 %v870, %v927
      %v929 = vpop.f32.mrb[0].mxu0
      %v930 = vpop.f32.mrb[0].mxu0
      %v931 = vadd.f32 %v870, %v930
      %v932 = vpop.f32.mrb[0].mxu0
      %933 = vmatprep.mubr.bf16.mxu0 0
      %934 = vmatmul.mubr.bf16.gmra.mrb[0].mxu0 %v887
      %v935 = vpop.f32.mrb[0].mxu0
      %v936 = vadd.f32 %v870, %v935
      %v937 = vpop.f32.mrb[0].mxu0
      %v938 = vpop.f32.mrb[0].mxu0
      %v939 = vadd.f32 %v870, %v938
      %v940 = vpop.f32.mrb[0].mxu0
      %941 = vmatprep.mubr.bf16.mxu0 0
      %942 = vmatmul.mubr.bf16.gmra.mrb[0].mxu0 %v889
      %v943 = vpop.f32.mrb[0].mxu0
      %v944 = vadd.f32 %v870, %v943
      %v945 = vpop.f32.mrb[0].mxu0
      %v946 = vpop.f32.mrb[0].mxu0
      %v947 = vadd.f32 %v870, %v946
      %v948 = vpop.f32.mrb[0].mxu0
      %949 = vmatprep.mubr.bf16.mxu0 0
      %950 = vmatmul.mubr.bf16.gmra.mrb[0].mxu0 %v891
      %v951 = vpop.f32.mrb[0].mxu0
      %v952 = vadd.f32 %v870, %v951
      %v953 = vpop.f32.mrb[0].mxu0
      %v954 = vpop.f32.mrb[0].mxu0
      %v955 = vadd.f32 %v870, %v954
      %v956 = vpop.f32.mrb[0].mxu0
      %957 = vdwg.mxu0
      %vm958 = vcmp.gt.f32.partialorder %v928, 0.0
      %vm959 = vcmp.gt.f32.partialorder %v931, 0.0
      %vm960 = vcmp.gt.f32.partialorder %v936, 0.0
      %vm961 = vcmp.gt.f32.partialorder %v939, 0.0
      %vm962 = vcmp.gt.f32.partialorder %v944, 0.0
      %vm963 = vcmp.gt.f32.partialorder %v947, 0.0
      %vm964 = vcmp.gt.f32.partialorder %v952, 0.0
      %vm965 = vcmp.gt.f32.partialorder %v955, 0.0
      %v966 = vmul.f32 %v928, 0.01
      %v967 = vmul.f32 %v931, 0.01
      %v968 = vmul.f32 %v936, 0.01
      %v969 = vmul.f32 %v939, 0.01
      %v970 = vmul.f32 %v944, 0.01
      %v971 = vmul.f32 %v947, 0.01
      %v972 = vmul.f32 %v952, 0.01
      %v973 = vmul.f32 %v955, 0.01
      %v974 = vsel %vm958, %v928, %v966
      %v975 = vsel %vm959, %v931, %v967
      %v976 = vsel %vm960, %v936, %v968
      %v977 = vsel %vm961, %v939, %v969
      %v978 = vsel %vm962, %v944, %v970
      %v979 = vsel %vm963, %v947, %v971
      %v980 = vsel %vm964, %v952, %v972
      %v981 = vsel %vm965, %v955, %v973
      %v982 = vpack.c.bf16 %v975, %v974
      %v983 = vpack.c.bf16 %v977, %v976
      %v984 = vpack.c.bf16 %v979, %v978
      %v985 = vpack.c.bf16 %v981, %v980
      %v990 = vunpack.c.l.b16 %v982
      %v991 = vunpack.c.h.b16 %v982
      %v992 = vunpack.c.l.b16 %v983
      %v993 = vunpack.c.h.b16 %v983
      %v994 = vunpack.c.l.b16 %v984
      %v995 = vunpack.c.h.b16 %v984
      %v996 = vunpack.c.l.b16 %v985
      %v997 = vunpack.c.h.b16 %v985
      %998 = vst.msk [vmem:[#allocation3] sm:$0xf] %vm288, 0
      %vm999 = vcmask 57344
      %1000 = vst.msk [vmem:[#allocation3 + $0x4] sm:$0x1] %vm999, 0
      %s1001 = scalar_lea.vmem [#allocation3], 72
      %1002 = vst.msk [vmem:[%s1001] sm:$0xf] %vm288, 0
      %1003 = vst.msk [vmem:[%s1001 + $0x4] sm:$0x1] %vm999, 0
      %v1004 = vpack.c.b16 %v990, %v990
      %v1005 = vpack.c.b16 %v991, %v991
      %v1006 = vpack.c.b16 %v992, %v992
      %v1007 = vpack.c.b16 %v993, %v993
      %v1008 = vpack.c.b16 %v994, %v994
      %v1009 = vpack.c.b16 %v995, %v995
      %v1010 = vpack.c.b16 %v996, %v996
      %v1011 = vpack.c.b16 %v997, %v997
      %v1013 = vshrl.u32 %v1004, 16
      %v1015 = vrot.slane %v1013, 7
      %v1016 = vshll.u32 %v1004, 16
      %v1018 = vor.u32 %v1015, %v1016
      %v1020 = vshrl.u32 %v1005, 16
      %v1022 = vrot.slane %v1020, 7
      %v1023 = vshll.u32 %v1005, 16
      %v1025 = vor.u32 %v1022, %v1023
      %v1027 = vshrl.u32 %v1006, 16
      %v1029 = vrot.slane %v1027, 7
      %v1030 = vshll.u32 %v1006, 16
      %v1032 = vor.u32 %v1029, %v1030
      %v1034 = vshrl.u32 %v1007, 16
      %v1036 = vrot.slane %v1034, 7
      %v1037 = vshll.u32 %v1007, 16
      %v1039 = vor.u32 %v1036, %v1037
      %v1041 = vshrl.u32 %v1008, 16
      %v1043 = vrot.slane %v1041, 7
      %v1044 = vshll.u32 %v1008, 16
      %v1046 = vor.u32 %v1043, %v1044
      %v1048 = vshrl.u32 %v1009, 16
      %v1050 = vrot.slane %v1048, 7
      %v1051 = vshll.u32 %v1009, 16
      %v1053 = vor.u32 %v1050, %v1051
      %v1055 = vshrl.u32 %v1010, 16
      %v1057 = vrot.slane %v1055, 7
      %v1058 = vshll.u32 %v1010, 16
      %v1060 = vor.u32 %v1057, %v1058
      %v1062 = vshrl.u32 %v1011, 16
      %v1064 = vrot.slane %v1062, 7
      %v1065 = vshll.u32 %v1011, 16
      %v1067 = vor.u32 %v1064, %v1065
      %v1076 = vsel %vm385, 0, %v1018
      %v1077 = vsel %vm385, 0, %v1025
      %v1078 = vsel %vm385, 0, %v1032
      %v1079 = vsel %vm385, 0, %v1039
      %v1080 = vsel %vm385, 0, %v1046
      %v1081 = vsel %vm385, 0, %v1053
      %v1082 = vsel %vm385, 0, %v1060
      %v1083 = vsel %vm385, 0, %v1067
      %vm1084 = vcmask 1044480
      %vm1085 = vsmask.f32 4352
      %vm1086 = vmand %vm1084, %vm1085
      %v1087 = vsel %vm1086, %v1076, 0
      %v1088 = vsel %vm1086, %v1077, 0
      %v1089 = vsel %vm1086, %v1078, 0
      %v1090 = vsel %vm1086, %v1079, 0
      %v1091 = vsel %vm1086, %v1080, 0
      %v1092 = vsel %vm1086, %v1081, 0
      %v1093 = vsel %vm1086, %v1082, 0
      %v1094 = vsel %vm1086, %v1083, 0
      %v1103 = vunpack.c.l.b16 %v1087
      %v1104 = vunpack.c.h.b16 %v1087
      %v1105 = vunpack.c.l.b16 %v1088
      %v1106 = vunpack.c.h.b16 %v1088
      %v1107 = vunpack.c.l.b16 %v1089
      %v1108 = vunpack.c.h.b16 %v1089
      %v1109 = vunpack.c.l.b16 %v1090
      %v1110 = vunpack.c.h.b16 %v1090
      %v1111 = vunpack.c.l.b16 %v1091
      %v1112 = vunpack.c.h.b16 %v1091
      %v1113 = vunpack.c.l.b16 %v1092
      %v1114 = vunpack.c.h.b16 %v1092
      %v1115 = vunpack.c.l.b16 %v1093
      %v1116 = vunpack.c.h.b16 %v1093
      %v1117 = vunpack.c.l.b16 %v1094
      %v1118 = vunpack.c.h.b16 %v1094
      %v1119 = vpack.c.b16 %v1103, %v1103
      %v1120 = vpack.c.b16 %v1104, %v1104
      %v1121 = vpack.c.b16 %v1105, %v1105
      %v1122 = vpack.c.b16 %v1106, %v1106
      %v1123 = vpack.c.b16 %v1107, %v1107
      %v1124 = vpack.c.b16 %v1108, %v1108
      %v1125 = vpack.c.b16 %v1109, %v1109
      %v1126 = vpack.c.b16 %v1110, %v1110
      %v1127 = vpack.c.b16 %v1111, %v1111
      %v1128 = vpack.c.b16 %v1112, %v1112
      %v1129 = vpack.c.b16 %v1113, %v1113
      %v1130 = vpack.c.b16 %v1114, %v1114
      %v1131 = vpack.c.b16 %v1115, %v1115
      %v1132 = vpack.c.b16 %v1116, %v1116
      %v1133 = vpack.c.b16 %v1117, %v1117
      %v1134 = vpack.c.b16 %v1118, %v1118
      %s1151 = scalar_lea.vmem [#allocation3], 8
      %1152 = vst.msk [vmem:[%s1151] sm:$0xf] %vm288, %v1119
      %1153 = vst.msk [vmem:[%s1151 + $0x4] sm:$0x1] %vm999, %v1120
      %1154 = vst.msk [vmem:[%s1151 + $0x8] sm:$0xf] %vm288, %v1121
      %1155 = vst.msk [vmem:[%s1151 + $0xc] sm:$0x1] %vm999, %v1122
      %1156 = vst.msk [vmem:[%s1151 + $0x10] sm:$0xf] %vm288, %v1123
      %1157 = vst.msk [vmem:[%s1151 + $0x14] sm:$0x1] %vm999, %v1124
      %1158 = vst.msk [vmem:[%s1151 + $0x18] sm:$0xf] %vm288, %v1125
      %1159 = vst.msk [vmem:[%s1151 + $0x1c] sm:$0x1] %vm999, %v1126
      %1160 = vst.msk [vmem:[%s1151 + $0x20] sm:$0xf] %vm288, %v1127
      %1161 = vst.msk [vmem:[%s1151 + $0x24] sm:$0x1] %vm999, %v1128
      %1162 = vst.msk [vmem:[%s1151 + $0x28] sm:$0xf] %vm288, %v1129
      %1163 = vst.msk [vmem:[%s1151 + $0x2c] sm:$0x1] %vm999, %v1130
      %1164 = vst.msk [vmem:[%s1151 + $0x30] sm:$0xf] %vm288, %v1131
      %1165 = vst.msk [vmem:[%s1151 + $0x34] sm:$0x1] %vm999, %v1132
      %1166 = vst.msk [vmem:[%s1151 + $0x38] sm:$0xf] %vm288, %v1133
      %1167 = vst.msk [vmem:[%s1151 + $0x3c] sm:$0x1] %vm999, %v1134
      %v1168 = vld [vmem:[#allocation3] sm:$0xf]
      %v1169 = vld [vmem:[#allocation3 + $0x8] sm:$0xf]
      %v1170 = vld [vmem:[#allocation3 + $0x10] sm:$0xf]
      %v1171 = vld [vmem:[#allocation3 + $0x18] sm:$0xf]
      %v1172 = vld [vmem:[#allocation3 + $0x20] sm:$0xf]
      %v1173 = vld [vmem:[#allocation3 + $0x28] sm:$0xf]
      %v1174 = vld [vmem:[#allocation3 + $0x30] sm:$0xf]
      %v1175 = vld [vmem:[#allocation3 + $0x38] sm:$0xf]
      %v1176 = vld [vmem:[#allocation3 + $0x4] sm:$0x1]
      %v1177 = vld [vmem:[#allocation3 + $0xc] sm:$0x1]
      %v1178 = vld [vmem:[#allocation3 + $0x14] sm:$0x1]
      %v1179 = vld [vmem:[#allocation3 + $0x1c] sm:$0x1]
      %v1180 = vld [vmem:[#allocation3 + $0x24] sm:$0x1]
      %v1181 = vld [vmem:[#allocation3 + $0x2c] sm:$0x1]
      %v1182 = vld [vmem:[#allocation3 + $0x34] sm:$0x1]
      %v1183 = vld [vmem:[#allocation3 + $0x3c] sm:$0x1]
      %v1185 = vshrl.u32 %v1168, 16
      %v1187 = vrot.slane %v1185, 4
      %v1188 = vshll.u32 %v1168, 16
      %v1190 = vrot.slane %v1188, 5
      %v1191 = vor.u32 %v1187, %v1190
      %v1192 = vrot.slane %v1191, 4
      %v1194 = vshll.u32 %v1176, 16
      %v1196 = vrot.slane %v1194, 5
      %v1197 = vsel %vm501, %v1192, %v1196
      %v1199 = vshrl.u32 %v1169, 16
      %v1201 = vrot.slane %v1199, 4
      %v1202 = vshll.u32 %v1169, 16
      %v1204 = vrot.slane %v1202, 5
      %v1205 = vor.u32 %v1201, %v1204
      %v1206 = vrot.slane %v1205, 4
      %v1208 = vshll.u32 %v1177, 16
      %v1210 = vrot.slane %v1208, 5
      %v1211 = vsel %vm501, %v1206, %v1210
      %v1213 = vshrl.u32 %v1170, 16
      %v1215 = vrot.slane %v1213, 4
      %v1216 = vshll.u32 %v1170, 16
      %v1218 = vrot.slane %v1216, 5
      %v1219 = vor.u32 %v1215, %v1218
      %v1220 = vrot.slane %v1219, 4
      %v1222 = vshll.u32 %v1178, 16
      %v1224 = vrot.slane %v1222, 5
      %v1225 = vsel %vm501, %v1220, %v1224
      %v1227 = vshrl.u32 %v1171, 16
      %v1229 = vrot.slane %v1227, 4
      %v1230 = vshll.u32 %v1171, 16
      %v1232 = vrot.slane %v1230, 5
      %v1233 = vor.u32 %v1229, %v1232
      %v1234 = vrot.slane %v1233, 4
      %v1236 = vshll.u32 %v1179, 16
      %v1238 = vrot.slane %v1236, 5
      %v1239 = vsel %vm501, %v1234, %v1238
      %v1241 = vshrl.u32 %v1172, 16
      %v1243 = vrot.slane %v1241, 4
      %v1244 = vshll.u32 %v1172, 16
      %v1246 = vrot.slane %v1244, 5
      %v1247 = vor.u32 %v1243, %v1246
      %v1248 = vrot.slane %v1247, 4
      %v1250 = vshll.u32 %v1180, 16
      %v1252 = vrot.slane %v1250, 5
      %v1253 = vsel %vm501, %v1248, %v1252
      %v1255 = vshrl.u32 %v1173, 16
      %v1257 = vrot.slane %v1255, 4
      %v1258 = vshll.u32 %v1173, 16
      %v1260 = vrot.slane %v1258, 5
      %v1261 = vor.u32 %v1257, %v1260
      %v1262 = vrot.slane %v1261, 4
      %v1264 = vshll.u32 %v1181, 16
      %v1266 = vrot.slane %v1264, 5
      %v1267 = vsel %vm501, %v1262, %v1266
      %v1269 = vshrl.u32 %v1174, 16
      %v1271 = vrot.slane %v1269, 4
      %v1272 = vshll.u32 %v1174, 16
      %v1274 = vrot.slane %v1272, 5
      %v1275 = vor.u32 %v1271, %v1274
      %v1276 = vrot.slane %v1275, 4
      %v1278 = vshll.u32 %v1182, 16
      %v1280 = vrot.slane %v1278, 5
      %v1281 = vsel %vm501, %v1276, %v1280
      %v1283 = vshrl.u32 %v1175, 16
      %v1285 = vrot.slane %v1283, 4
      %v1286 = vshll.u32 %v1175, 16
      %v1288 = vrot.slane %v1286, 5
      %v1289 = vor.u32 %v1285, %v1288
      %v1290 = vrot.slane %v1289, 4
      %v1292 = vshll.u32 %v1183, 16
      %v1294 = vrot.slane %v1292, 5
      %v1295 = vsel %vm501, %v1290, %v1294
      %v1296 = vld [vmem:[#allocation3] sm:$0xe]
      %v1297 = vld [vmem:[#allocation3 + $0x8] sm:$0xe]
      %v1298 = vld [vmem:[#allocation3 + $0x10] sm:$0xe]
      %v1299 = vld [vmem:[#allocation3 + $0x18] sm:$0xe]
      %v1300 = vld [vmem:[#allocation3 + $0x20] sm:$0xe]
      %v1301 = vld [vmem:[#allocation3 + $0x28] sm:$0xe]
      %v1302 = vld [vmem:[#allocation3 + $0x30] sm:$0xe]
      %v1303 = vld [vmem:[#allocation3 + $0x38] sm:$0xe]
      %vm1320 = vcmask 1042432
      %vm1321 = vcmask 1046532
      %vm1322 = vmor %vm1320, %vm1321
      %v1323 = vrot.slane %v1296, 5
      %v1324 = vrot.slane %v1323, 4
      %v1325 = vrot.slane %v1176, 5
      %v1326 = vsel %vm1322, %v1324, %v1325
      %v1327 = vrot.slane %v1297, 5
      %v1328 = vrot.slane %v1327, 4
      %v1329 = vrot.slane %v1177, 5
      %v1330 = vsel %vm1322, %v1328, %v1329
      %v1331 = vrot.slane %v1298, 5
      %v1332 = vrot.slane %v1331, 4
      %v1333 = vrot.slane %v1178, 5
      %v1334 = vsel %vm1322, %v1332, %v1333
      %v1335 = vrot.slane %v1299, 5
      %v1336 = vrot.slane %v1335, 4
      %v1337 = vrot.slane %v1179, 5
      %v1338 = vsel %vm1322, %v1336, %v1337
      %v1339 = vrot.slane %v1300, 5
      %v1340 = vrot.slane %v1339, 4
      %v1341 = vrot.slane %v1180, 5
      %v1342 = vsel %vm1322, %v1340, %v1341
      %v1343 = vrot.slane %v1301, 5
      %v1344 = vrot.slane %v1343, 4
      %v1345 = vrot.slane %v1181, 5
      %v1346 = vsel %vm1322, %v1344, %v1345
      %v1347 = vrot.slane %v1302, 5
      %v1348 = vrot.slane %v1347, 4
      %v1349 = vrot.slane %v1182, 5
      %v1350 = vsel %vm1322, %v1348, %v1349
      %v1351 = vrot.slane %v1303, 5
      %v1352 = vrot.slane %v1351, 4
      %v1353 = vrot.slane %v1183, 5
      %v1354 = vsel %vm1322, %v1352, %v1353
      %v1355 = vld [vmem:[%s1151] sm:$0xf]
      %v1356 = vld [vmem:[%s1151 + $0x8] sm:$0xf]
      %v1357 = vld [vmem:[%s1151 + $0x10] sm:$0xf]
      %v1358 = vld [vmem:[%s1151 + $0x18] sm:$0xf]
      %v1359 = vld [vmem:[%s1151 + $0x20] sm:$0xf]
      %v1360 = vld [vmem:[%s1151 + $0x28] sm:$0xf]
      %v1361 = vld [vmem:[%s1151 + $0x30] sm:$0xf]
      %v1362 = vld [vmem:[%s1151 + $0x38] sm:$0xf]
      %v1363 = vld [vmem:[%s1151 + $0x4] sm:$0x1]
      %v1364 = vld [vmem:[%s1151 + $0xc] sm:$0x1]
      %v1365 = vld [vmem:[%s1151 + $0x14] sm:$0x1]
      %v1366 = vld [vmem:[%s1151 + $0x1c] sm:$0x1]
      %v1367 = vld [vmem:[%s1151 + $0x24] sm:$0x1]
      %v1368 = vld [vmem:[%s1151 + $0x2c] sm:$0x1]
      %v1369 = vld [vmem:[%s1151 + $0x34] sm:$0x1]
      %v1370 = vld [vmem:[%s1151 + $0x3c] sm:$0x1]
      %v1372 = vshrl.u32 %v1355, 16
      %v1374 = vrot.slane %v1372, 4
      %v1375 = vshll.u32 %v1355, 16
      %v1377 = vrot.slane %v1375, 5
      %v1378 = vor.u32 %v1374, %v1377
      %v1379 = vrot.slane %v1378, 4
      %v1381 = vshll.u32 %v1363, 16
      %v1383 = vrot.slane %v1381, 5
      %v1384 = vsel %vm501, %v1379, %v1383
      %v1386 = vshrl.u32 %v1356, 16
      %v1388 = vrot.slane %v1386, 4
      %v1389 = vshll.u32 %v1356, 16
      %v1391 = vrot.slane %v1389, 5
      %v1392 = vor.u32 %v1388, %v1391
      %v1393 = vrot.slane %v1392, 4
      %v1395 = vshll.u32 %v1364, 16
      %v1397 = vrot.slane %v1395, 5
      %v1398 = vsel %vm501, %v1393, %v1397
      %v1400 = vshrl.u32 %v1357, 16
      %v1402 = vrot.slane %v1400, 4
      %v1403 = vshll.u32 %v1357, 16
      %v1405 = vrot.slane %v1403, 5
      %v1406 = vor.u32 %v1402, %v1405
      %v1407 = vrot.slane %v1406, 4
      %v1409 = vshll.u32 %v1365, 16
      %v1411 = vrot.slane %v1409, 5
      %v1412 = vsel %vm501, %v1407, %v1411
      %v1414 = vshrl.u32 %v1358, 16
      %v1416 = vrot.slane %v1414, 4
      %v1417 = vshll.u32 %v1358, 16
      %v1419 = vrot.slane %v1417, 5
      %v1420 = vor.u32 %v1416, %v1419
      %v1421 = vrot.slane %v1420, 4
      %v1423 = vshll.u32 %v1366, 16
      %v1425 = vrot.slane %v1423, 5
      %v1426 = vsel %vm501, %v1421, %v1425
      %v1428 = vshrl.u32 %v1359, 16
      %v1430 = vrot.slane %v1428, 4
      %v1431 = vshll.u32 %v1359, 16
      %v1433 = vrot.slane %v1431, 5
      %v1434 = vor.u32 %v1430, %v1433
      %v1435 = vrot.slane %v1434, 4
      %v1437 = vshll.u32 %v1367, 16
      %v1439 = vrot.slane %v1437, 5
      %v1440 = vsel %vm501, %v1435, %v1439
      %v1442 = vshrl.u32 %v1360, 16
      %v1444 = vrot.slane %v1442, 4
      %v1445 = vshll.u32 %v1360, 16
      %v1447 = vrot.slane %v1445, 5
      %v1448 = vor.u32 %v1444, %v1447
      %v1449 = vrot.slane %v1448, 4
      %v1451 = vshll.u32 %v1368, 16
      %v1453 = vrot.slane %v1451, 5
      %v1454 = vsel %vm501, %v1449, %v1453
      %v1456 = vshrl.u32 %v1361, 16
      %v1458 = vrot.slane %v1456, 4
      %v1459 = vshll.u32 %v1361, 16
      %v1461 = vrot.slane %v1459, 5
      %v1462 = vor.u32 %v1458, %v1461
      %v1463 = vrot.slane %v1462, 4
      %v1465 = vshll.u32 %v1369, 16
      %v1467 = vrot.slane %v1465, 5
      %v1468 = vsel %vm501, %v1463, %v1467
      %v1470 = vshrl.u32 %v1362, 16
      %v1472 = vrot.slane %v1470, 4
      %v1473 = vshll.u32 %v1362, 16
      %v1475 = vrot.slane %v1473, 5
      %v1476 = vor.u32 %v1472, %v1475
      %v1477 = vrot.slane %v1476, 4
      %v1479 = vshll.u32 %v1370, 16
      %v1481 = vrot.slane %v1479, 5
      %v1482 = vsel %vm501, %v1477, %v1481
      %v1483 = vld [vmem:[%s1151] sm:$0xe]
      %v1484 = vld [vmem:[%s1151 + $0x8] sm:$0xe]
      %v1485 = vld [vmem:[%s1151 + $0x10] sm:$0xe]
      %v1486 = vld [vmem:[%s1151 + $0x18] sm:$0xe]
      %v1487 = vld [vmem:[%s1151 + $0x20] sm:$0xe]
      %v1488 = vld [vmem:[%s1151 + $0x28] sm:$0xe]
      %v1489 = vld [vmem:[%s1151 + $0x30] sm:$0xe]
      %v1490 = vld [vmem:[%s1151 + $0x38] sm:$0xe]
      %v1507 = vrot.slane %v1483, 5
      %v1508 = vrot.slane %v1507, 4
      %v1509 = vrot.slane %v1363, 5
      %v1510 = vsel %vm1322, %v1508, %v1509
      %v1511 = vrot.slane %v1484, 5
      %v1512 = vrot.slane %v1511, 4
      %v1513 = vrot.slane %v1364, 5
      %v1514 = vsel %vm1322, %v1512, %v1513
      %v1515 = vrot.slane %v1485, 5
      %v1516 = vrot.slane %v1515, 4
      %v1517 = vrot.slane %v1365, 5
      %v1518 = vsel %vm1322, %v1516, %v1517
      %v1519 = vrot.slane %v1486, 5
      %v1520 = vrot.slane %v1519, 4
      %v1521 = vrot.slane %v1366, 5
      %v1522 = vsel %vm1322, %v1520, %v1521
      %v1523 = vrot.slane %v1487, 5
      %v1524 = vrot.slane %v1523, 4
      %v1525 = vrot.slane %v1367, 5
      %v1526 = vsel %vm1322, %v1524, %v1525
      %v1527 = vrot.slane %v1488, 5
      %v1528 = vrot.slane %v1527, 4
      %v1529 = vrot.slane %v1368, 5
      %v1530 = vsel %vm1322, %v1528, %v1529
      %v1531 = vrot.slane %v1489, 5
      %v1532 = vrot.slane %v1531, 4
      %v1533 = vrot.slane %v1369, 5
      %v1534 = vsel %vm1322, %v1532, %v1533
      %v1535 = vrot.slane %v1490, 5
      %v1536 = vrot.slane %v1535, 4
      %v1537 = vrot.slane %v1370, 5
      %v1538 = vsel %vm1322, %v1536, %v1537
      %s1539 = scalar_lea.vmem [#allocation3], 16
      %v1540 = vld [vmem:[%s1539] sm:$0xf]
      %v1541 = vld [vmem:[%s1539 + $0x8] sm:$0xf]
      %v1542 = vld [vmem:[%s1539 + $0x10] sm:$0xf]
      %v1543 = vld [vmem:[%s1539 + $0x18] sm:$0xf]
      %v1544 = vld [vmem:[%s1539 + $0x20] sm:$0xf]
      %v1545 = vld [vmem:[%s1539 + $0x28] sm:$0xf]
      %v1546 = vld [vmem:[%s1539 + $0x30] sm:$0xf]
      %v1547 = vld [vmem:[%s1539 + $0x38] sm:$0xf]
      %v1548 = vld [vmem:[%s1539 + $0x4] sm:$0x1]
      %v1549 = vld [vmem:[%s1539 + $0xc] sm:$0x1]
      %v1550 = vld [vmem:[%s1539 + $0x14] sm:$0x1]
      %v1551 = vld [vmem:[%s1539 + $0x1c] sm:$0x1]
      %v1552 = vld [vmem:[%s1539 + $0x24] sm:$0x1]
      %v1553 = vld [vmem:[%s1539 + $0x2c] sm:$0x1]
      %v1554 = vld [vmem:[%s1539 + $0x34] sm:$0x1]
      %v1555 = vld [vmem:[%s1539 + $0x3c] sm:$0x1]
      %v1557 = vshrl.u32 %v1540, 16
      %v1559 = vrot.slane %v1557, 4
      %v1560 = vshll.u32 %v1540, 16
      %v1562 = vrot.slane %v1560, 5
      %v1563 = vor.u32 %v1559, %v1562
      %v1564 = vrot.slane %v1563, 4
      %v1566 = vshll.u32 %v1548, 16
      %v1568 = vrot.slane %v1566, 5
      %v1569 = vsel %vm501, %v1564, %v1568
      %v1571 = vshrl.u32 %v1541, 16
      %v1573 = vrot.slane %v1571, 4
      %v1574 = vshll.u32 %v1541, 16
      %v1576 = vrot.slane %v1574, 5
      %v1577 = vor.u32 %v1573, %v1576
      %v1578 = vrot.slane %v1577, 4
      %v1580 = vshll.u32 %v1549, 16
      %v1582 = vrot.slane %v1580, 5
      %v1583 = vsel %vm501, %v1578, %v1582
      %v1585 = vshrl.u32 %v1542, 16
      %v1587 = vrot.slane %v1585, 4
      %v1588 = vshll.u32 %v1542, 16
      %v1590 = vrot.slane %v1588, 5
      %v1591 = vor.u32 %v1587, %v1590
      %v1592 = vrot.slane %v1591, 4
      %v1594 = vshll.u32 %v1550, 16
      %v1596 = vrot.slane %v1594, 5
      %v1597 = vsel %vm501, %v1592, %v1596
      %v1599 = vshrl.u32 %v1543, 16
      %v1601 = vrot.slane %v1599, 4
      %v1602 = vshll.u32 %v1543, 16
      %v1604 = vrot.slane %v1602, 5
      %v1605 = vor.u32 %v1601, %v1604
      %v1606 = vrot.slane %v1605, 4
      %v1608 = vshll.u32 %v1551, 16
      %v1610 = vrot.slane %v1608, 5
      %v1611 = vsel %vm501, %v1606, %v1610
      %v1613 = vshrl.u32 %v1544, 16
      %v1615 = vrot.slane %v1613, 4
      %v1616 = vshll.u32 %v1544, 16
      %v1618 = vrot.slane %v1616, 5
      %v1619 = vor.u32 %v1615, %v1618
      %v1620 = vrot.slane %v1619, 4
      %v1622 = vshll.u32 %v1552, 16
      %v1624 = vrot.slane %v1622, 5
      %v1625 = vsel %vm501, %v1620, %v1624
      %v1627 = vshrl.u32 %v1545, 16
      %v1629 = vrot.slane %v1627, 4
      %v1630 = vshll.u32 %v1545, 16
      %v1632 = vrot.slane %v1630, 5
      %v1633 = vor.u32 %v1629, %v1632
      %v1634 = vrot.slane %v1633, 4
      %v1636 = vshll.u32 %v1553, 16
      %v1638 = vrot.slane %v1636, 5
      %v1639 = vsel %vm501, %v1634, %v1638
      %v1641 = vshrl.u32 %v1546, 16
      %v1643 = vrot.slane %v1641, 4
      %v1644 = vshll.u32 %v1546, 16
      %v1646 = vrot.slane %v1644, 5
      %v1647 = vor.u32 %v1643, %v1646
      %v1648 = vrot.slane %v1647, 4
      %v1650 = vshll.u32 %v1554, 16
      %v1652 = vrot.slane %v1650, 5
      %v1653 = vsel %vm501, %v1648, %v1652
      %v1655 = vshrl.u32 %v1547, 16
      %v1657 = vrot.slane %v1655, 4
      %v1658 = vshll.u32 %v1547, 16
      %v1660 = vrot.slane %v1658, 5
      %v1661 = vor.u32 %v1657, %v1660
      %v1662 = vrot.slane %v1661, 4
      %v1664 = vshll.u32 %v1555, 16
      %v1666 = vrot.slane %v1664, 5
      %v1667 = vsel %vm501, %v1662, %v1666
      %v1668 = vld [vmem:[%s1539] sm:$0xe]
      %v1669 = vld [vmem:[%s1539 + $0x8] sm:$0xe]
      %v1670 = vld [vmem:[%s1539 + $0x10] sm:$0xe]
      %v1671 = vld [vmem:[%s1539 + $0x18] sm:$0xe]
      %v1672 = vld [vmem:[%s1539 + $0x20] sm:$0xe]
      %v1673 = vld [vmem:[%s1539 + $0x28] sm:$0xe]
      %v1674 = vld [vmem:[%s1539 + $0x30] sm:$0xe]
      %v1675 = vld [vmem:[%s1539 + $0x38] sm:$0xe]
      %v1692 = vrot.slane %v1668, 5
      %v1693 = vrot.slane %v1692, 4
      %v1694 = vrot.slane %v1548, 5
      %v1695 = vsel %vm1322, %v1693, %v1694
      %v1696 = vrot.slane %v1669, 5
      %v1697 = vrot.slane %v1696, 4
      %v1698 = vrot.slane %v1549, 5
      %v1699 = vsel %vm1322, %v1697, %v1698
      %v1700 = vrot.slane %v1670, 5
      %v1701 = vrot.slane %v1700, 4
      %v1702 = vrot.slane %v1550, 5
      %v1703 = vsel %vm1322, %v1701, %v1702
      %v1704 = vrot.slane %v1671, 5
      %v1705 = vrot.slane %v1704, 4
      %v1706 = vrot.slane %v1551, 5
      %v1707 = vsel %vm1322, %v1705, %v1706
      %v1708 = vrot.slane %v1672, 5
      %v1709 = vrot.slane %v1708, 4
      %v1710 = vrot.slane %v1552, 5
      %v1711 = vsel %vm1322, %v1709, %v1710
      %v1712 = vrot.slane %v1673, 5
      %v1713 = vrot.slane %v1712, 4
      %v1714 = vrot.slane %v1553, 5
      %v1715 = vsel %vm1322, %v1713, %v1714
      %v1716 = vrot.slane %v1674, 5
      %v1717 = vrot.slane %v1716, 4
      %v1718 = vrot.slane %v1554, 5
      %v1719 = vsel %vm1322, %v1717, %v1718
      %v1720 = vrot.slane %v1675, 5
      %v1721 = vrot.slane %v1720, 4
      %v1722 = vrot.slane %v1555, 5
      %v1723 = vsel %vm1322, %v1721, %v1722
      %v1732 = vunpack.c.l.b16 %v1168
      %v1733 = vunpack.c.l.b16 %v1169
      %v1734 = vunpack.c.l.b16 %v1170
      %v1735 = vunpack.c.l.b16 %v1171
      %v1736 = vunpack.c.l.b16 %v1172
      %v1737 = vunpack.c.l.b16 %v1173
      %v1738 = vunpack.c.l.b16 %v1174
      %v1739 = vunpack.c.l.b16 %v1175
      %v1740 = vpack.c.b16 %v1733, %v1732
      %v1741 = vpack.c.b16 %v1735, %v1734
      %v1742 = vpack.c.b16 %v1737, %v1736
      %v1743 = vpack.c.b16 %v1739, %v1738
      %v1744 = vunpack.c.l.b16 %v1197
      %v1745 = vunpack.c.l.b16 %v1211
      %v1746 = vunpack.c.l.b16 %v1225
      %v1747 = vunpack.c.l.b16 %v1239
      %v1748 = vunpack.c.l.b16 %v1253
      %v1749 = vunpack.c.l.b16 %v1267
      %v1750 = vunpack.c.l.b16 %v1281
      %v1751 = vunpack.c.l.b16 %v1295
      %v1752 = vpack.c.b16 %v1745, %v1744
      %v1753 = vpack.c.b16 %v1747, %v1746
      %v1754 = vpack.c.b16 %v1749, %v1748
      %v1755 = vpack.c.b16 %v1751, %v1750
      %1756 = vrot.lane.b32.xlu0 %v1752, 8
      %v1757 = vpop.permute.xlu0 %1756
      %1758 = vrot.lane.b32.xlu0 %v1753, 8
      %v1759 = vpop.permute.xlu0 %1758
      %1760 = vrot.lane.b32.xlu0 %v1754, 8
      %v1761 = vpop.permute.xlu0 %1760
      %1762 = vrot.lane.b32.xlu0 %v1755, 8
      %v1763 = vpop.permute.xlu0 %1762
      %v1764 = vunpack.c.l.b16 %v1326
      %v1765 = vunpack.c.l.b16 %v1330
      %v1766 = vunpack.c.l.b16 %v1334
      %v1767 = vunpack.c.l.b16 %v1338
      %v1768 = vunpack.c.l.b16 %v1342
      %v1769 = vunpack.c.l.b16 %v1346
      %v1770 = vunpack.c.l.b16 %v1350
      %v1771 = vunpack.c.l.b16 %v1354
      %v1772 = vpack.c.b16 %v1765, %v1764
      %v1773 = vpack.c.b16 %v1767, %v1766
      %v1774 = vpack.c.b16 %v1769, %v1768
      %v1775 = vpack.c.b16 %v1771, %v1770
      %1776 = vrot.lane.b32.xlu0 %v1772, 16
      %v1777 = vpop.permute.xlu0 %1776
      %1778 = vrot.lane.b32.xlu0 %v1773, 16
      %v1779 = vpop.permute.xlu0 %1778
      %1780 = vrot.lane.b32.xlu0 %v1774, 16
      %v1781 = vpop.permute.xlu0 %1780
      %1782 = vrot.lane.b32.xlu0 %v1775, 16
      %v1783 = vpop.permute.xlu0 %1782
      %v1792 = vunpack.c.l.b16 %v1355
      %v1793 = vunpack.c.l.b16 %v1356
      %v1794 = vunpack.c.l.b16 %v1357
      %v1795 = vunpack.c.l.b16 %v1358
      %v1796 = vunpack.c.l.b16 %v1359
      %v1797 = vunpack.c.l.b16 %v1360
      %v1798 = vunpack.c.l.b16 %v1361
      %v1799 = vunpack.c.l.b16 %v1362
      %v1800 = vpack.c.b16 %v1793, %v1792
      %v1801 = vpack.c.b16 %v1795, %v1794
      %v1802 = vpack.c.b16 %v1797, %v1796
      %v1803 = vpack.c.b16 %v1799, %v1798
      %1804 = vrot.lane.b32.xlu0 %v1800, 24
      %v1805 = vpop.permute.xlu0 %1804
      %1806 = vrot.lane.b32.xlu0 %v1801, 24
      %v1807 = vpop.permute.xlu0 %1806
      %1808 = vrot.lane.b32.xlu0 %v1802, 24
      %v1809 = vpop.permute.xlu0 %1808
      %1810 = vrot.lane.b32.xlu0 %v1803, 24
      %v1811 = vpop.permute.xlu0 %1810
      %v1812 = vunpack.c.l.b16 %v1384
      %v1813 = vunpack.c.l.b16 %v1398
      %v1814 = vunpack.c.l.b16 %v1412
      %v1815 = vunpack.c.l.b16 %v1426
      %v1816 = vunpack.c.l.b16 %v1440
      %v1817 = vunpack.c.l.b16 %v1454
      %v1818 = vunpack.c.l.b16 %v1468
      %v1819 = vunpack.c.l.b16 %v1482
      %v1820 = vpack.c.b16 %v1813, %v1812
      %v1821 = vpack.c.b16 %v1815, %v1814
      %v1822 = vpack.c.b16 %v1817, %v1816
      %v1823 = vpack.c.b16 %v1819, %v1818
      %1824 = vrot.lane.b32.xlu0 %v1820, 32
      %v1825 = vpop.permute.xlu0 %1824
      %1826 = vrot.lane.b32.xlu0 %v1821, 32
      %v1827 = vpop.permute.xlu0 %1826
      %1828 = vrot.lane.b32.xlu0 %v1822, 32
      %v1829 = vpop.permute.xlu0 %1828
      %1830 = vrot.lane.b32.xlu0 %v1823, 32
      %v1831 = vpop.permute.xlu0 %1830
      %v1832 = vunpack.c.l.b16 %v1510
      %v1833 = vunpack.c.l.b16 %v1514
      %v1834 = vunpack.c.l.b16 %v1518
      %v1835 = vunpack.c.l.b16 %v1522
      %v1836 = vunpack.c.l.b16 %v1526
      %v1837 = vunpack.c.l.b16 %v1530
      %v1838 = vunpack.c.l.b16 %v1534
      %v1839 = vunpack.c.l.b16 %v1538
      %v1840 = vpack.c.b16 %v1833, %v1832
      %v1841 = vpack.c.b16 %v1835, %v1834
      %v1842 = vpack.c.b16 %v1837, %v1836
      %v1843 = vpack.c.b16 %v1839, %v1838
      %1844 = vrot.lane.b32.xlu0 %v1840, 40
      %v1845 = vpop.permute.xlu0 %1844
      %1846 = vrot.lane.b32.xlu0 %v1841, 40
      %v1847 = vpop.permute.xlu0 %1846
      %1848 = vrot.lane.b32.xlu0 %v1842, 40
      %v1849 = vpop.permute.xlu0 %1848
      %1850 = vrot.lane.b32.xlu0 %v1843, 40
      %v1851 = vpop.permute.xlu0 %1850
      %v1860 = vunpack.c.l.b16 %v1540
      %v1861 = vunpack.c.l.b16 %v1541
      %v1862 = vunpack.c.l.b16 %v1542
      %v1863 = vunpack.c.l.b16 %v1543
      %v1864 = vunpack.c.l.b16 %v1544
      %v1865 = vunpack.c.l.b16 %v1545
      %v1866 = vunpack.c.l.b16 %v1546
      %v1867 = vunpack.c.l.b16 %v1547
      %v1868 = vpack.c.b16 %v1861, %v1860
      %v1869 = vpack.c.b16 %v1863, %v1862
      %v1870 = vpack.c.b16 %v1865, %v1864
      %v1871 = vpack.c.b16 %v1867, %v1866
      %1872 = vrot.lane.b32.xlu0 %v1868, 48
      %v1873 = vpop.permute.xlu0 %1872
      %1874 = vrot.lane.b32.xlu0 %v1869, 48
      %v1875 = vpop.permute.xlu0 %1874
      %1876 = vrot.lane.b32.xlu0 %v1870, 48
      %v1877 = vpop.permute.xlu0 %1876
      %1878 = vrot.lane.b32.xlu0 %v1871, 48
      %v1879 = vpop.permute.xlu0 %1878
      %v1880 = vunpack.c.l.b16 %v1569
      %v1881 = vunpack.c.l.b16 %v1583
      %v1882 = vunpack.c.l.b16 %v1597
      %v1883 = vunpack.c.l.b16 %v1611
      %v1884 = vunpack.c.l.b16 %v1625
      %v1885 = vunpack.c.l.b16 %v1639
      %v1886 = vunpack.c.l.b16 %v1653
      %v1887 = vunpack.c.l.b16 %v1667
      %v1888 = vpack.c.b16 %v1881, %v1880
      %v1889 = vpack.c.b16 %v1883, %v1882
      %v1890 = vpack.c.b16 %v1885, %v1884
      %v1891 = vpack.c.b16 %v1887, %v1886
      %1892 = vrot.lane.b32.xlu0 %v1888, 56
      %v1893 = vpop.permute.xlu0 %1892
      %1894 = vrot.lane.b32.xlu0 %v1889, 56
      %v1895 = vpop.permute.xlu0 %1894
      %1896 = vrot.lane.b32.xlu0 %v1890, 56
      %v1897 = vpop.permute.xlu0 %1896
      %1898 = vrot.lane.b32.xlu0 %v1891, 56
      %v1899 = vpop.permute.xlu0 %1898
      %v1900 = vunpack.c.l.b16 %v1695
      %v1901 = vunpack.c.l.b16 %v1699
      %v1902 = vunpack.c.l.b16 %v1703
      %v1903 = vunpack.c.l.b16 %v1707
      %v1904 = vunpack.c.l.b16 %v1711
      %v1905 = vunpack.c.l.b16 %v1715
      %v1906 = vunpack.c.l.b16 %v1719
      %v1907 = vunpack.c.l.b16 %v1723
      %v1908 = vpack.c.b16 %v1901, %v1900
      %v1909 = vpack.c.b16 %v1903, %v1902
      %v1910 = vpack.c.b16 %v1905, %v1904
      %v1911 = vpack.c.b16 %v1907, %v1906
      %1912 = vrot.lane.b32.xlu0 %v1908, 64
      %v1913 = vpop.permute.xlu0 %1912
      %1914 = vrot.lane.b32.xlu0 %v1909, 64
      %v1915 = vpop.permute.xlu0 %1914
      %1916 = vrot.lane.b32.xlu0 %v1910, 64
      %v1917 = vpop.permute.xlu0 %1916
      %1918 = vrot.lane.b32.xlu0 %v1911, 64
      %v1919 = vpop.permute.xlu0 %1918
      %v1922 = vsel %vm830, %v1740, %v1757
      %v1925 = vsel %vm830, %v1741, %v1759
      %v1928 = vsel %vm830, %v1742, %v1761
      %v1931 = vsel %vm830, %v1743, %v1763
      %v1933 = vsel %vm843, %v1922, %v1777
      %v1935 = vsel %vm843, %v1925, %v1779
      %v1937 = vsel %vm843, %v1928, %v1781
      %v1939 = vsel %vm843, %v1931, %v1783
      %v1941 = vsel %vm852, %v1933, %v1805
      %v1943 = vsel %vm852, %v1935, %v1807
      %v1945 = vsel %vm852, %v1937, %v1809
      %v1947 = vsel %vm852, %v1939, %v1811
      %v1949 = vsel %vm884, %v1941, %v1825
      %v1951 = vsel %vm884, %v1943, %v1827
      %v1953 = vsel %vm884, %v1945, %v1829
      %v1955 = vsel %vm884, %v1947, %v1831
      %vm1956 = vcmask 326656
      %v1958 = vsel %vm1956, %v1949, %v1845
      %v1960 = vsel %vm1956, %v1951, %v1847
      %v1962 = vsel %vm1956, %v1953, %v1849
      %v1964 = vsel %vm1956, %v1955, %v1851
      %vm1965 = vcmask 392192
      %v1967 = vsel %vm1965, %v1958, %v1873
      %v1969 = vsel %vm1965, %v1960, %v1875
      %v1971 = vsel %vm1965, %v1962, %v1877
      %v1973 = vsel %vm1965, %v1964, %v1879
      %vm1974 = vcmask 457728
      %v1976 = vsel %vm1974, %v1967, %v1893
      %v1978 = vsel %vm1974, %v1969, %v1895
      %v1980 = vsel %vm1974, %v1971, %v1897
      %v1982 = vsel %vm1974, %v1973, %v1899
      %vm1983 = vcmask 523264
      %v1985 = vsel %vm1983, %v1976, %v1913
      %v1987 = vsel %vm1983, %v1978, %v1915
      %v1989 = vsel %vm1983, %v1980, %v1917
      %v1991 = vsel %vm1983, %v1982, %v1919
      %v1992 = vld [vmem:[%s3] sm:$0xf]
      %v1993 = vld [vmem:[%s3 + $0x4] sm:$0xf]
      %v1994 = vld [vmem:[%s3 + $0x8] sm:$0xf]
      %v1995 = vld [vmem:[%s3 + $0xc] sm:$0xf]
      %v1996 = vld [vmem:[%s3 + $0x10] sm:$0xf]
      %v1997 = vld [vmem:[%s3 + $0x14] sm:$0xf]
      %v1998 = vld [vmem:[%s3 + $0x18] sm:$0xf]
      %v1999 = vld [vmem:[%s3 + $0x1c] sm:$0xf]
      %v2000 = vld [vmem:[%s3 + $0x20] sm:$0xf]
      %v2001 = vld [vmem:[%s4] sm:$0x1]
      %v2003 = vlaneseq
      %v2004 = vshrl.u32 %v2003, 7
      %v2005 = vsub.s32 0, %v2004
      %v2006 = vrot.slane %v2001, %v2005
      %v2017 = vunpack.c.l.b16 %v1992
      %v2018 = vunpack.c.l.b16 %v1993
      %v2019 = vunpack.c.l.b16 %v1994
      %v2020 = vunpack.c.l.b16 %v1995
      %v2021 = vunpack.c.l.b16 %v1996
      %v2022 = vunpack.c.l.b16 %v1997
      %v2023 = vunpack.c.l.b16 %v1998
      %v2024 = vunpack.c.l.b16 %v1999
      %v2025 = vunpack.c.l.b16 %v2000
      %v2026 = vpack.c.b16 %v2018, %v2017
      %v2027 = vpack.c.b16 %v2020, %v2019
      %v2028 = vpack.c.b16 %v2022, %v2021
      %v2029 = vpack.c.b16 %v2024, %v2023
      %v2030 = vpack.c.b16 %v2025, %v2025
      %vm2035 = vcmask 588800
      %v2036 = vsel %vm2035, %v1985, 0
      %v2038 = vsel %vm2035, %v1987, 0
      %v2040 = vsel %vm2035, %v1989, 0
      %v2042 = vsel %vm2035, %v1991, 0
      %vm2044 = vcmask 1043456
      %v2046 = vsel %vm2044, %v2030, 0
      %2048 = vmatprep.subr.bf16.mxu0 0
      %2049 = vmatpush1.bf16.msra.mxu0 %v2026
      %2050 = vmatprep.subr.bf16.mxu0 0
      %2051 = vmatpush1.bf16.msra.mxu0 %v2027
      %2052 = vmatprep.subr.bf16.mxu0 0
      %2053 = vmatpush1.bf16.msra.mxu0 %v2028
      %2054 = vmatprep.subr.bf16.mxu0 0
      %2055 = vmatpush1.bf16.msra.mxu0 %v2029
      %2056 = vmatprep.subr.bf16.mxu0 0
      %2057 = vmatpush1.bf16.msra.mxu0 %v2046
      %2058 = vmatprep.subr.bf16.mxu0 0
      %2059 = vmatpush1.bf16.msra.mxu0 0
      %2060 = vmatprep.subr.bf16.mxu0 0
      %2061 = vmatpush1.bf16.msra.mxu0 0
      %2062 = vmatprep.subr.bf16.mxu0 0
      %2063 = vmatpush1.bf16.msra.mxu0 0
      %2064 = vmatprep.subr.bf16.mxu0 0
      %2065 = vmatpush1.bf16.msra.mxu0 0
      %2066 = vmatprep.subr.bf16.mxu0 0
      %2067 = vmatpush1.bf16.msra.mxu0 0
      %2068 = vmatprep.subr.bf16.mxu0 0
      %2069 = vmatpush1.bf16.msra.mxu0 0
      %2070 = vmatprep.subr.bf16.mxu0 0
      %2071 = vmatpush1.bf16.msra.mxu0 0
      %2072 = vmatprep.subr.bf16.mxu0 0
      %2073 = vmatpush1.bf16.msra.mxu0 0
      %2074 = vmatprep.subr.bf16.mxu0 0
      %2075 = vmatpush1.bf16.msra.mxu0 0
      %2076 = vmatprep.subr.bf16.mxu0 0
      %2077 = vmatpush1.bf16.msra.mxu0 0
      %2078 = vmatprep.subr.bf16.mxu0 0
      %2079 = vmatpush1.bf16.msra.mxu0 0
      %2080 = vmatprep.mubr.bf16.mxu0 0
      %2081 = vmatmul.mubr.bf16.gmra.mrb[0].mxu0 %v2036
      %v2082 = vpop.f32.mrb[0].mxu0
      %v2083 = vadd.f32 %v2006, %v2082
      %v2084 = vpop.f32.mrb[0].mxu0
      %v2085 = vpop.f32.mrb[0].mxu0
      %v2086 = vadd.f32 %v2006, %v2085
      %v2087 = vpop.f32.mrb[0].mxu0
      %2088 = vmatprep.mubr.bf16.mxu0 0
      %2089 = vmatmul.mubr.bf16.gmra.mrb[0].mxu0 %v2038
      %v2090 = vpop.f32.mrb[0].mxu0
      %v2091 = vadd.f32 %v2006, %v2090
      %v2092 = vpop.f32.mrb[0].mxu0
      %v2093 = vpop.f32.mrb[0].mxu0
      %v2094 = vadd.f32 %v2006, %v2093
      %v2095 = vpop.f32.mrb[0].mxu0
      %2096 = vmatprep.mubr.bf16.mxu0 0
      %2097 = vmatmul.mubr.bf16.gmra.mrb[0].mxu0 %v2040
      %v2098 = vpop.f32.mrb[0].mxu0
      %v2099 = vadd.f32 %v2006, %v2098
      %v2100 = vpop.f32.mrb[0].mxu0
      %v2101 = vpop.f32.mrb[0].mxu0
      %v2102 = vadd.f32 %v2006, %v2101
      %v2103 = vpop.f32.mrb[0].mxu0
      %2104 = vmatprep.mubr.bf16.mxu0 0
      %2105 = vmatmul.mubr.bf16.gmra.mrb[0].mxu0 %v2042
      %v2106 = vpop.f32.mrb[0].mxu0
      %v2107 = vadd.f32 %v2006, %v2106
      %v2108 = vpop.f32.mrb[0].mxu0
      %v2109 = vpop.f32.mrb[0].mxu0
      %v2110 = vadd.f32 %v2006, %v2109
      %v2111 = vpop.f32.mrb[0].mxu0
      %2112 = vdwg.mxu0
      %v2113 = vmax.f32 %v2083, 0.0
      %v2114 = vmax.f32 %v2086, 0.0
      %v2115 = vmax.f32 %v2091, 0.0
      %v2116 = vmax.f32 %v2094, 0.0
      %v2117 = vmax.f32 %v2099, 0.0
      %v2118 = vmax.f32 %v2102, 0.0
      %v2119 = vmax.f32 %v2107, 0.0
      %v2120 = vmax.f32 %v2110, 0.0
      %v2121 = vpack.c.bf16 %v2114, %v2113
      %v2122 = vpack.c.bf16 %v2116, %v2115
      %v2123 = vpack.c.bf16 %v2118, %v2117
      %v2124 = vpack.c.bf16 %v2120, %v2119
      %v2129 = vunpack.c.l.b16 %v2121
      %v2130 = vunpack.c.h.b16 %v2121
      %v2131 = vunpack.c.l.b16 %v2122
      %v2132 = vunpack.c.h.b16 %v2122
      %v2133 = vunpack.c.l.b16 %v2123
      %v2134 = vunpack.c.h.b16 %v2123
      %v2135 = vunpack.c.l.b16 %v2124
      %v2136 = vunpack.c.h.b16 %v2124
      %2137 = vst.msk [vmem:[#allocation4] sm:$0xf] %vm288, 0
      %2138 = vst.msk [vmem:[#allocation4 + $0x4] sm:$0x1] %vm999, 0
      %s2139 = scalar_lea.vmem [#allocation4], 72
      %2140 = vst.msk [vmem:[%s2139] sm:$0xf] %vm288, 0
      %2141 = vst.msk [vmem:[%s2139 + $0x4] sm:$0x1] %vm999, 0
      %v2142 = vpack.c.b16 %v2129, %v2129
      %v2143 = vpack.c.b16 %v2130, %v2130
      %v2144 = vpack.c.b16 %v2131, %v2131
      %v2145 = vpack.c.b16 %v2132, %v2132
      %v2146 = vpack.c.b16 %v2133, %v2133
      %v2147 = vpack.c.b16 %v2134, %v2134
      %v2148 = vpack.c.b16 %v2135, %v2135
      %v2149 = vpack.c.b16 %v2136, %v2136
      %v2151 = vshrl.u32 %v2142, 16
      %v2153 = vrot.slane %v2151, 7
      %v2154 = vshll.u32 %v2142, 16
      %v2156 = vor.u32 %v2153, %v2154
      %v2158 = vshrl.u32 %v2143, 16
      %v2160 = vrot.slane %v2158, 7
      %v2161 = vshll.u32 %v2143, 16
      %v2163 = vor.u32 %v2160, %v2161
      %v2165 = vshrl.u32 %v2144, 16
      %v2167 = vrot.slane %v2165, 7
      %v2168 = vshll.u32 %v2144, 16
      %v2170 = vor.u32 %v2167, %v2168
      %v2172 = vshrl.u32 %v2145, 16
      %v2174 = vrot.slane %v2172, 7
      %v2175 = vshll.u32 %v2145, 16
      %v2177 = vor.u32 %v2174, %v2175
      %v2179 = vshrl.u32 %v2146, 16
      %v2181 = vrot.slane %v2179, 7
      %v2182 = vshll.u32 %v2146, 16
      %v2184 = vor.u32 %v2181, %v2182
      %v2186 = vshrl.u32 %v2147, 16
      %v2188 = vrot.slane %v2186, 7
      %v2189 = vshll.u32 %v2147, 16
      %v2191 = vor.u32 %v2188, %v2189
      %v2193 = vshrl.u32 %v2148, 16
      %v2195 = vrot.slane %v2193, 7
      %v2196 = vshll.u32 %v2148, 16
      %v2198 = vor.u32 %v2195, %v2196
      %v2200 = vshrl.u32 %v2149, 16
      %v2202 = vrot.slane %v2200, 7
      %v2203 = vshll.u32 %v2149, 16
      %v2205 = vor.u32 %v2202, %v2203
      %v2214 = vsel %vm385, 0, %v2156
      %v2215 = vsel %vm385, 0, %v2163
      %v2216 = vsel %vm385, 0, %v2170
      %v2217 = vsel %vm385, 0, %v2177
      %v2218 = vsel %vm385, 0, %v2184
      %v2219 = vsel %vm385, 0, %v2191
      %v2220 = vsel %vm385, 0, %v2198
      %v2221 = vsel %vm385, 0, %v2205
      %v2222 = vsel %vm1086, %v2214, 0
      %v2223 = vsel %vm1086, %v2215, 0
      %v2224 = vsel %vm1086, %v2216, 0
      %v2225 = vsel %vm1086, %v2217, 0
      %v2226 = vsel %vm1086, %v2218, 0
      %v2227 = vsel %vm1086, %v2219, 0
      %v2228 = vsel %vm1086, %v2220, 0
      %v2229 = vsel %vm1086, %v2221, 0
      %v2238 = vunpack.c.l.b16 %v2222
      %v2239 = vunpack.c.h.b16 %v2222
      %v2240 = vunpack.c.l.b16 %v2223
      %v2241 = vunpack.c.h.b16 %v2223
      %v2242 = vunpack.c.l.b16 %v2224
      %v2243 = vunpack.c.h.b16 %v2224
      %v2244 = vunpack.c.l.b16 %v2225
      %v2245 = vunpack.c.h.b16 %v2225
      %v2246 = vunpack.c.l.b16 %v2226
      %v2247 = vunpack.c.h.b16 %v2226
      %v2248 = vunpack.c.l.b16 %v2227
      %v2249 = vunpack.c.h.b16 %v2227
      %v2250 = vunpack.c.l.b16 %v2228
      %v2251 = vunpack.c.h.b16 %v2228
      %v2252 = vunpack.c.l.b16 %v2229
      %v2253 = vunpack.c.h.b16 %v2229
      %v2254 = vpack.c.b16 %v2238, %v2238
      %v2255 = vpack.c.b16 %v2239, %v2239
      %v2256 = vpack.c.b16 %v2240, %v2240
      %v2257 = vpack.c.b16 %v2241, %v2241
      %v2258 = vpack.c.b16 %v2242, %v2242
      %v2259 = vpack.c.b16 %v2243, %v2243
      %v2260 = vpack.c.b16 %v2244, %v2244
      %v2261 = vpack.c.b16 %v2245, %v2245
      %v2262 = vpack.c.b16 %v2246, %v2246
      %v2263 = vpack.c.b16 %v2247, %v2247
      %v2264 = vpack.c.b16 %v2248, %v2248
      %v2265 = vpack.c.b16 %v2249, %v2249
      %v2266 = vpack.c.b16 %v2250, %v2250
      %v2267 = vpack.c.b16 %v2251, %v2251
      %v2268 = vpack.c.b16 %v2252, %v2252
      %v2269 = vpack.c.b16 %v2253, %v2253
      %s2286 = scalar_lea.vmem [#allocation4], 8
      %2287 = vst.msk [vmem:[%s2286] sm:$0xf] %vm288, %v2254
      %2288 = vst.msk [vmem:[%s2286 + $0x4] sm:$0x1] %vm999, %v2255
      %2289 = vst.msk [vmem:[%s2286 + $0x8] sm:$0xf] %vm288, %v2256
      %2290 = vst.msk [vmem:[%s2286 + $0xc] sm:$0x1] %vm999, %v2257
      %2291 = vst.msk [vmem:[%s2286 + $0x10] sm:$0xf] %vm288, %v2258
      %2292 = vst.msk [vmem:[%s2286 + $0x14] sm:$0x1] %vm999, %v2259
      %2293 = vst.msk [vmem:[%s2286 + $0x18] sm:$0xf] %vm288, %v2260
      %2294 = vst.msk [vmem:[%s2286 + $0x1c] sm:$0x1] %vm999, %v2261
      %2295 = vst.msk [vmem:[%s2286 + $0x20] sm:$0xf] %vm288, %v2262
      %2296 = vst.msk [vmem:[%s2286 + $0x24] sm:$0x1] %vm999, %v2263
      %2297 = vst.msk [vmem:[%s2286 + $0x28] sm:$0xf] %vm288, %v2264
      %2298 = vst.msk [vmem:[%s2286 + $0x2c] sm:$0x1] %vm999, %v2265
      %2299 = vst.msk [vmem:[%s2286 + $0x30] sm:$0xf] %vm288, %v2266
      %2300 = vst.msk [vmem:[%s2286 + $0x34] sm:$0x1] %vm999, %v2267
      %2301 = vst.msk [vmem:[%s2286 + $0x38] sm:$0xf] %vm288, %v2268
      %2302 = vst.msk [vmem:[%s2286 + $0x3c] sm:$0x1] %vm999, %v2269
      %v2303 = vld [vmem:[#allocation4] sm:$0xf]
      %v2304 = vld [vmem:[#allocation4 + $0x8] sm:$0xf]
      %v2305 = vld [vmem:[#allocation4 + $0x10] sm:$0xf]
      %v2306 = vld [vmem:[#allocation4 + $0x18] sm:$0xf]
      %v2307 = vld [vmem:[#allocation4 + $0x20] sm:$0xf]
      %v2308 = vld [vmem:[#allocation4 + $0x28] sm:$0xf]
      %v2309 = vld [vmem:[#allocation4 + $0x30] sm:$0xf]
      %v2310 = vld [vmem:[#allocation4 + $0x38] sm:$0xf]
      %v2311 = vld [vmem:[#allocation4 + $0x4] sm:$0x1]
      %v2312 = vld [vmem:[#allocation4 + $0xc] sm:$0x1]
      %v2313 = vld [vmem:[#allocation4 + $0x14] sm:$0x1]
      %v2314 = vld [vmem:[#allocation4 + $0x1c] sm:$0x1]
      %v2315 = vld [vmem:[#allocation4 + $0x24] sm:$0x1]
      %v2316 = vld [vmem:[#allocation4 + $0x2c] sm:$0x1]
      %v2317 = vld [vmem:[#allocation4 + $0x34] sm:$0x1]
      %v2318 = vld [vmem:[#allocation4 + $0x3c] sm:$0x1]
      %v2320 = vshrl.u32 %v2303, 16
      %v2322 = vrot.slane %v2320, 4
      %v2323 = vshll.u32 %v2303, 16
      %v2325 = vrot.slane %v2323, 5
      %v2326 = vor.u32 %v2322, %v2325
      %v2327 = vrot.slane %v2326, 4
      %v2329 = vshll.u32 %v2311, 16
      %v2331 = vrot.slane %v2329, 5
      %v2332 = vsel %vm501, %v2327, %v2331
      %v2334 = vshrl.u32 %v2304, 16
      %v2336 = vrot.slane %v2334, 4
      %v2337 = vshll.u32 %v2304, 16
      %v2339 = vrot.slane %v2337, 5
      %v2340 = vor.u32 %v2336, %v2339
      %v2341 = vrot.slane %v2340, 4
      %v2343 = vshll.u32 %v2312, 16
      %v2345 = vrot.slane %v2343, 5
      %v2346 = vsel %vm501, %v2341, %v2345
      %v2348 = vshrl.u32 %v2305, 16
      %v2350 = vrot.slane %v2348, 4
      %v2351 = vshll.u32 %v2305, 16
      %v2353 = vrot.slane %v2351, 5
      %v2354 = vor.u32 %v2350, %v2353
      %v2355 = vrot.slane %v2354, 4
      %v2357 = vshll.u32 %v2313, 16
      %v2359 = vrot.slane %v2357, 5
      %v2360 = vsel %vm501, %v2355, %v2359
      %v2362 = vshrl.u32 %v2306, 16
      %v2364 = vrot.slane %v2362, 4
      %v2365 = vshll.u32 %v2306, 16
      %v2367 = vrot.slane %v2365, 5
      %v2368 = vor.u32 %v2364, %v2367
      %v2369 = vrot.slane %v2368, 4
      %v2371 = vshll.u32 %v2314, 16
      %v2373 = vrot.slane %v2371, 5
      %v2374 = vsel %vm501, %v2369, %v2373
      %v2376 = vshrl.u32 %v2307, 16
      %v2378 = vrot.slane %v2376, 4
      %v2379 = vshll.u32 %v2307, 16
      %v2381 = vrot.slane %v2379, 5
      %v2382 = vor.u32 %v2378, %v2381
      %v2383 = vrot.slane %v2382, 4
      %v2385 = vshll.u32 %v2315, 16
      %v2387 = vrot.slane %v2385, 5
      %v2388 = vsel %vm501, %v2383, %v2387
      %v2390 = vshrl.u32 %v2308, 16
      %v2392 = vrot.slane %v2390, 4
      %v2393 = vshll.u32 %v2308, 16
      %v2395 = vrot.slane %v2393, 5
      %v2396 = vor.u32 %v2392, %v2395
      %v2397 = vrot.slane %v2396, 4
      %v2399 = vshll.u32 %v2316, 16
      %v2401 = vrot.slane %v2399, 5
      %v2402 = vsel %vm501, %v2397, %v2401
      %v2404 = vshrl.u32 %v2309, 16
      %v2406 = vrot.slane %v2404, 4
      %v2407 = vshll.u32 %v2309, 16
      %v2409 = vrot.slane %v2407, 5
      %v2410 = vor.u32 %v2406, %v2409
      %v2411 = vrot.slane %v2410, 4
      %v2413 = vshll.u32 %v2317, 16
      %v2415 = vrot.slane %v2413, 5
      %v2416 = vsel %vm501, %v2411, %v2415
      %v2418 = vshrl.u32 %v2310, 16
      %v2420 = vrot.slane %v2418, 4
      %v2421 = vshll.u32 %v2310, 16
      %v2423 = vrot.slane %v2421, 5
      %v2424 = vor.u32 %v2420, %v2423
      %v2425 = vrot.slane %v2424, 4
      %v2427 = vshll.u32 %v2318, 16
      %v2429 = vrot.slane %v2427, 5
      %v2430 = vsel %vm501, %v2425, %v2429
      %v2431 = vld [vmem:[#allocation4] sm:$0xe]
      %v2432 = vld [vmem:[#allocation4 + $0x8] sm:$0xe]
      %v2433 = vld [vmem:[#allocation4 + $0x10] sm:$0xe]
      %v2434 = vld [vmem:[#allocation4 + $0x18] sm:$0xe]
      %v2435 = vld [vmem:[#allocation4 + $0x20] sm:$0xe]
      %v2436 = vld [vmem:[#allocation4 + $0x28] sm:$0xe]
      %v2437 = vld [vmem:[#allocation4 + $0x30] sm:$0xe]
      %v2438 = vld [vmem:[#allocation4 + $0x38] sm:$0xe]
      %v2455 = vrot.slane %v2431, 5
      %v2456 = vrot.slane %v2455, 4
      %v2457 = vrot.slane %v2311, 5
      %v2458 = vsel %vm1322, %v2456, %v2457
      %v2459 = vrot.slane %v2432, 5
      %v2460 = vrot.slane %v2459, 4
      %v2461 = vrot.slane %v2312, 5
      %v2462 = vsel %vm1322, %v2460, %v2461
      %v2463 = vrot.slane %v2433, 5
      %v2464 = vrot.slane %v2463, 4
      %v2465 = vrot.slane %v2313, 5
      %v2466 = vsel %vm1322, %v2464, %v2465
      %v2467 = vrot.slane %v2434, 5
      %v2468 = vrot.slane %v2467, 4
      %v2469 = vrot.slane %v2314, 5
      %v2470 = vsel %vm1322, %v2468, %v2469
      %v2471 = vrot.slane %v2435, 5
      %v2472 = vrot.slane %v2471, 4
      %v2473 = vrot.slane %v2315, 5
      %v2474 = vsel %vm1322, %v2472, %v2473
      %v2475 = vrot.slane %v2436, 5
      %v2476 = vrot.slane %v2475, 4
      %v2477 = vrot.slane %v2316, 5
      %v2478 = vsel %vm1322, %v2476, %v2477
      %v2479 = vrot.slane %v2437, 5
      %v2480 = vrot.slane %v2479, 4
      %v2481 = vrot.slane %v2317, 5
      %v2482 = vsel %vm1322, %v2480, %v2481
      %v2483 = vrot.slane %v2438, 5
      %v2484 = vrot.slane %v2483, 4
      %v2485 = vrot.slane %v2318, 5
      %v2486 = vsel %vm1322, %v2484, %v2485
      %v2487 = vld [vmem:[%s2286] sm:$0xf]
      %v2488 = vld [vmem:[%s2286 + $0x8] sm:$0xf]
      %v2489 = vld [vmem:[%s2286 + $0x10] sm:$0xf]
      %v2490 = vld [vmem:[%s2286 + $0x18] sm:$0xf]
      %v2491 = vld [vmem:[%s2286 + $0x20] sm:$0xf]
      %v2492 = vld [vmem:[%s2286 + $0x28] sm:$0xf]
      %v2493 = vld [vmem:[%s2286 + $0x30] sm:$0xf]
      %v2494 = vld [vmem:[%s2286 + $0x38] sm:$0xf]
      %v2495 = vld [vmem:[%s2286 + $0x4] sm:$0x1]
      %v2496 = vld [vmem:[%s2286 + $0xc] sm:$0x1]
      %v2497 = vld [vmem:[%s2286 + $0x14] sm:$0x1]
      %v2498 = vld [vmem:[%s2286 + $0x1c] sm:$0x1]
      %v2499 = vld [vmem:[%s2286 + $0x24] sm:$0x1]
      %v2500 = vld [vmem:[%s2286 + $0x2c] sm:$0x1]
      %v2501 = vld [vmem:[%s2286 + $0x34] sm:$0x1]
      %v2502 = vld [vmem:[%s2286 + $0x3c] sm:$0x1]
      %v2504 = vshrl.u32 %v2487, 16
      %v2506 = vrot.slane %v2504, 4
      %v2507 = vshll.u32 %v2487, 16
      %v2509 = vrot.slane %v2507, 5
      %v2510 = vor.u32 %v2506, %v2509
      %v2511 = vrot.slane %v2510, 4
      %v2513 = vshll.u32 %v2495, 16
      %v2515 = vrot.slane %v2513, 5
      %v2516 = vsel %vm501, %v2511, %v2515
      %v2518 = vshrl.u32 %v2488, 16
      %v2520 = vrot.slane %v2518, 4
      %v2521 = vshll.u32 %v2488, 16
      %v2523 = vrot.slane %v2521, 5
      %v2524 = vor.u32 %v2520, %v2523
      %v2525 = vrot.slane %v2524, 4
      %v2527 = vshll.u32 %v2496, 16
      %v2529 = vrot.slane %v2527, 5
      %v2530 = vsel %vm501, %v2525, %v2529
      %v2532 = vshrl.u32 %v2489, 16
      %v2534 = vrot.slane %v2532, 4
      %v2535 = vshll.u32 %v2489, 16
      %v2537 = vrot.slane %v2535, 5
      %v2538 = vor.u32 %v2534, %v2537
      %v2539 = vrot.slane %v2538, 4
      %v2541 = vshll.u32 %v2497, 16
      %v2543 = vrot.slane %v2541, 5
      %v2544 = vsel %vm501, %v2539, %v2543
      %v2546 = vshrl.u32 %v2490, 16
      %v2548 = vrot.slane %v2546, 4
      %v2549 = vshll.u32 %v2490, 16
      %v2551 = vrot.slane %v2549, 5
      %v2552 = vor.u32 %v2548, %v2551
      %v2553 = vrot.slane %v2552, 4
      %v2555 = vshll.u32 %v2498, 16
      %v2557 = vrot.slane %v2555, 5
      %v2558 = vsel %vm501, %v2553, %v2557
      %v2560 = vshrl.u32 %v2491, 16
      %v2562 = vrot.slane %v2560, 4
      %v2563 = vshll.u32 %v2491, 16
      %v2565 = vrot.slane %v2563, 5
      %v2566 = vor.u32 %v2562, %v2565
      %v2567 = vrot.slane %v2566, 4
      %v2569 = vshll.u32 %v2499, 16
      %v2571 = vrot.slane %v2569, 5
      %v2572 = vsel %vm501, %v2567, %v2571
      %v2574 = vshrl.u32 %v2492, 16
      %v2576 = vrot.slane %v2574, 4
      %v2577 = vshll.u32 %v2492, 16
      %v2579 = vrot.slane %v2577, 5
      %v2580 = vor.u32 %v2576, %v2579
      %v2581 = vrot.slane %v2580, 4
      %v2583 = vshll.u32 %v2500, 16
      %v2585 = vrot.slane %v2583, 5
      %v2586 = vsel %vm501, %v2581, %v2585
      %v2588 = vshrl.u32 %v2493, 16
      %v2590 = vrot.slane %v2588, 4
      %v2591 = vshll.u32 %v2493, 16
      %v2593 = vrot.slane %v2591, 5
      %v2594 = vor.u32 %v2590, %v2593
      %v2595 = vrot.slane %v2594, 4
      %v2597 = vshll.u32 %v2501, 16
      %v2599 = vrot.slane %v2597, 5
      %v2600 = vsel %vm501, %v2595, %v2599
      %v2602 = vshrl.u32 %v2494, 16
      %v2604 = vrot.slane %v2602, 4
      %v2605 = vshll.u32 %v2494, 16
      %v2607 = vrot.slane %v2605, 5
      %v2608 = vor.u32 %v2604, %v2607
      %v2609 = vrot.slane %v2608, 4
      %v2611 = vshll.u32 %v2502, 16
      %v2613 = vrot.slane %v2611, 5
      %v2614 = vsel %vm501, %v2609, %v2613
      %v2615 = vld [vmem:[%s2286] sm:$0xe]
      %v2616 = vld [vmem:[%s2286 + $0x8] sm:$0xe]
      %v2617 = vld [vmem:[%s2286 + $0x10] sm:$0xe]
      %v2618 = vld [vmem:[%s2286 + $0x18] sm:$0xe]
      %v2619 = vld [vmem:[%s2286 + $0x20] sm:$0xe]
      %v2620 = vld [vmem:[%s2286 + $0x28] sm:$0xe]
      %v2621 = vld [vmem:[%s2286 + $0x30] sm:$0xe]
      %v2622 = vld [vmem:[%s2286 + $0x38] sm:$0xe]
      %v2639 = vrot.slane %v2615, 5
      %v2640 = vrot.slane %v2639, 4
      %v2641 = vrot.slane %v2495, 5
      %v2642 = vsel %vm1322, %v2640, %v2641
      %v2643 = vrot.slane %v2616, 5
      %v2644 = vrot.slane %v2643, 4
      %v2645 = vrot.slane %v2496, 5
      %v2646 = vsel %vm1322, %v2644, %v2645
      %v2647 = vrot.slane %v2617, 5
      %v2648 = vrot.slane %v2647, 4
      %v2649 = vrot.slane %v2497, 5
      %v2650 = vsel %vm1322, %v2648, %v2649
      %v2651 = vrot.slane %v2618, 5
      %v2652 = vrot.slane %v2651, 4
      %v2653 = vrot.slane %v2498, 5
      %v2654 = vsel %vm1322, %v2652, %v2653
      %v2655 = vrot.slane %v2619, 5
      %v2656 = vrot.slane %v2655, 4
      %v2657 = vrot.slane %v2499, 5
      %v2658 = vsel %vm1322, %v2656, %v2657
      %v2659 = vrot.slane %v2620, 5
      %v2660 = vrot.slane %v2659, 4
      %v2661 = vrot.slane %v2500, 5
      %v2662 = vsel %vm1322, %v2660, %v2661
      %v2663 = vrot.slane %v2621, 5
      %v2664 = vrot.slane %v2663, 4
      %v2665 = vrot.slane %v2501, 5
      %v2666 = vsel %vm1322, %v2664, %v2665
      %v2667 = vrot.slane %v2622, 5
      %v2668 = vrot.slane %v2667, 4
      %v2669 = vrot.slane %v2502, 5
      %v2670 = vsel %vm1322, %v2668, %v2669
      %s2671 = scalar_lea.vmem [#allocation4], 16
      %v2672 = vld [vmem:[%s2671] sm:$0xf]
      %v2673 = vld [vmem:[%s2671 + $0x8] sm:$0xf]
      %v2674 = vld [vmem:[%s2671 + $0x10] sm:$0xf]
      %v2675 = vld [vmem:[%s2671 + $0x18] sm:$0xf]
      %v2676 = vld [vmem:[%s2671 + $0x20] sm:$0xf]
      %v2677 = vld [vmem:[%s2671 + $0x28] sm:$0xf]
      %v2678 = vld [vmem:[%s2671 + $0x30] sm:$0xf]
      %v2679 = vld [vmem:[%s2671 + $0x38] sm:$0xf]
      %v2680 = vld [vmem:[%s2671 + $0x4] sm:$0x1]
      %v2681 = vld [vmem:[%s2671 + $0xc] sm:$0x1]
      %v2682 = vld [vmem:[%s2671 + $0x14] sm:$0x1]
      %v2683 = vld [vmem:[%s2671 + $0x1c] sm:$0x1]
      %v2684 = vld [vmem:[%s2671 + $0x24] sm:$0x1]
      %v2685 = vld [vmem:[%s2671 + $0x2c] sm:$0x1]
      %v2686 = vld [vmem:[%s2671 + $0x34] sm:$0x1]
      %v2687 = vld [vmem:[%s2671 + $0x3c] sm:$0x1]
      %v2689 = vshrl.u32 %v2672, 16
      %v2691 = vrot.slane %v2689, 4
      %v2692 = vshll.u32 %v2672, 16
      %v2694 = vrot.slane %v2692, 5
      %v2695 = vor.u32 %v2691, %v2694
      %v2696 = vrot.slane %v2695, 4
      %v2698 = vshll.u32 %v2680, 16
      %v2700 = vrot.slane %v2698, 5
      %v2701 = vsel %vm501, %v2696, %v2700
      %v2703 = vshrl.u32 %v2673, 16
      %v2705 = vrot.slane %v2703, 4
      %v2706 = vshll.u32 %v2673, 16
      %v2708 = vrot.slane %v2706, 5
      %v2709 = vor.u32 %v2705, %v2708
      %v2710 = vrot.slane %v2709, 4
      %v2712 = vshll.u32 %v2681, 16
      %v2714 = vrot.slane %v2712, 5
      %v2715 = vsel %vm501, %v2710, %v2714
      %v2717 = vshrl.u32 %v2674, 16
      %v2719 = vrot.slane %v2717, 4
      %v2720 = vshll.u32 %v2674, 16
      %v2722 = vrot.slane %v2720, 5
      %v2723 = vor.u32 %v2719, %v2722
      %v2724 = vrot.slane %v2723, 4
      %v2726 = vshll.u32 %v2682, 16
      %v2728 = vrot.slane %v2726, 5
      %v2729 = vsel %vm501, %v2724, %v2728
      %v2731 = vshrl.u32 %v2675, 16
      %v2733 = vrot.slane %v2731, 4
      %v2734 = vshll.u32 %v2675, 16
      %v2736 = vrot.slane %v2734, 5
      %v2737 = vor.u32 %v2733, %v2736
      %v2738 = vrot.slane %v2737, 4
      %v2740 = vshll.u32 %v2683, 16
      %v2742 = vrot.slane %v2740, 5
      %v2743 = vsel %vm501, %v2738, %v2742
      %v2745 = vshrl.u32 %v2676, 16
      %v2747 = vrot.slane %v2745, 4
      %v2748 = vshll.u32 %v2676, 16
      %v2750 = vrot.slane %v2748, 5
      %v2751 = vor.u32 %v2747, %v2750
      %v2752 = vrot.slane %v2751, 4
      %v2754 = vshll.u32 %v2684, 16
      %v2756 = vrot.slane %v2754, 5
      %v2757 = vsel %vm501, %v2752, %v2756
      %v2759 = vshrl.u32 %v2677, 16
      %v2761 = vrot.slane %v2759, 4
      %v2762 = vshll.u32 %v2677, 16
      %v2764 = vrot.slane %v2762, 5
      %v2765 = vor.u32 %v2761, %v2764
      %v2766 = vrot.slane %v2765, 4
      %v2768 = vshll.u32 %v2685, 16
      %v2770 = vrot.slane %v2768, 5
      %v2771 = vsel %vm501, %v2766, %v2770
      %v2773 = vshrl.u32 %v2678, 16
      %v2775 = vrot.slane %v2773, 4
      %v2776 = vshll.u32 %v2678, 16
      %v2778 = vrot.slane %v2776, 5
      %v2779 = vor.u32 %v2775, %v2778
      %v2780 = vrot.slane %v2779, 4
      %v2782 = vshll.u32 %v2686, 16
      %v2784 = vrot.slane %v2782, 5
      %v2785 = vsel %vm501, %v2780, %v2784
      %v2787 = vshrl.u32 %v2679, 16
      %v2789 = vrot.slane %v2787, 4
      %v2790 = vshll.u32 %v2679, 16
      %v2792 = vrot.slane %v2790, 5
      %v2793 = vor.u32 %v2789, %v2792
      %v2794 = vrot.slane %v2793, 4
      %v2796 = vshll.u32 %v2687, 16
      %v2798 = vrot.slane %v2796, 5
      %v2799 = vsel %vm501, %v2794, %v2798
      %v2800 = vld [vmem:[%s2671] sm:$0xe]
      %v2801 = vld [vmem:[%s2671 + $0x8] sm:$0xe]
      %v2802 = vld [vmem:[%s2671 + $0x10] sm:$0xe]
      %v2803 = vld [vmem:[%s2671 + $0x18] sm:$0xe]
      %v2804 = vld [vmem:[%s2671 + $0x20] sm:$0xe]
      %v2805 = vld [vmem:[%s2671 + $0x28] sm:$0xe]
      %v2806 = vld [vmem:[%s2671 + $0x30] sm:$0xe]
      %v2807 = vld [vmem:[%s2671 + $0x38] sm:$0xe]
      %v2824 = vrot.slane %v2800, 5
      %v2825 = vrot.slane %v2824, 4
      %v2826 = vrot.slane %v2680, 5
      %v2827 = vsel %vm1322, %v2825, %v2826
      %v2828 = vrot.slane %v2801, 5
      %v2829 = vrot.slane %v2828, 4
      %v2830 = vrot.slane %v2681, 5
      %v2831 = vsel %vm1322, %v2829, %v2830
      %v2832 = vrot.slane %v2802, 5
      %v2833 = vrot.slane %v2832, 4
      %v2834 = vrot.slane %v2682, 5
      %v2835 = vsel %vm1322, %v2833, %v2834
      %v2836 = vrot.slane %v2803, 5
      %v2837 = vrot.slane %v2836, 4
      %v2838 = vrot.slane %v2683, 5
      %v2839 = vsel %vm1322, %v2837, %v2838
      %v2840 = vrot.slane %v2804, 5
      %v2841 = vrot.slane %v2840, 4
      %v2842 = vrot.slane %v2684, 5
      %v2843 = vsel %vm1322, %v2841, %v2842
      %v2844 = vrot.slane %v2805, 5
      %v2845 = vrot.slane %v2844, 4
      %v2846 = vrot.slane %v2685, 5
      %v2847 = vsel %vm1322, %v2845, %v2846
      %v2848 = vrot.slane %v2806, 5
      %v2849 = vrot.slane %v2848, 4
      %v2850 = vrot.slane %v2686, 5
      %v2851 = vsel %vm1322, %v2849, %v2850
      %v2852 = vrot.slane %v2807, 5
      %v2853 = vrot.slane %v2852, 4
      %v2854 = vrot.slane %v2687, 5
      %v2855 = vsel %vm1322, %v2853, %v2854
      %v2864 = vunpack.c.l.b16 %v2303
      %v2865 = vunpack.c.l.b16 %v2304
      %v2866 = vunpack.c.l.b16 %v2305
      %v2867 = vunpack.c.l.b16 %v2306
      %v2868 = vunpack.c.l.b16 %v2307
      %v2869 = vunpack.c.l.b16 %v2308
      %v2870 = vunpack.c.l.b16 %v2309
      %v2871 = vunpack.c.l.b16 %v2310
      %v2872 = vpack.c.b16 %v2865, %v2864
      %v2873 = vpack.c.b16 %v2867, %v2866
      %v2874 = vpack.c.b16 %v2869, %v2868
      %v2875 = vpack.c.b16 %v2871, %v2870
      %v2876 = vunpack.c.l.b16 %v2332
      %v2877 = vunpack.c.l.b16 %v2346
      %v2878 = vunpack.c.l.b16 %v2360
      %v2879 = vunpack.c.l.b16 %v2374
      %v2880 = vunpack.c.l.b16 %v2388
      %v2881 = vunpack.c.l.b16 %v2402
      %v2882 = vunpack.c.l.b16 %v2416
      %v2883 = vunpack.c.l.b16 %v2430
      %v2884 = vpack.c.b16 %v2877, %v2876
      %v2885 = vpack.c.b16 %v2879, %v2878
      %v2886 = vpack.c.b16 %v2881, %v2880
      %v2887 = vpack.c.b16 %v2883, %v2882
      %2888 = vrot.lane.b32.xlu0 %v2884, 8
      %v2889 = vpop.permute.xlu0 %2888
      %2890 = vrot.lane.b32.xlu0 %v2885, 8
      %v2891 = vpop.permute.xlu0 %2890
      %2892 = vrot.lane.b32.xlu0 %v2886, 8
      %v2893 = vpop.permute.xlu0 %2892
      %2894 = vrot.lane.b32.xlu0 %v2887, 8
      %v2895 = vpop.permute.xlu0 %2894
      %v2896 = vunpack.c.l.b16 %v2458
      %v2897 = vunpack.c.l.b16 %v2462
      %v2898 = vunpack.c.l.b16 %v2466
      %v2899 = vunpack.c.l.b16 %v2470
      %v2900 = vunpack.c.l.b16 %v2474
      %v2901 = vunpack.c.l.b16 %v2478
      %v2902 = vunpack.c.l.b16 %v2482
      %v2903 = vunpack.c.l.b16 %v2486
      %v2904 = vpack.c.b16 %v2897, %v2896
      %v2905 = vpack.c.b16 %v2899, %v2898
      %v2906 = vpack.c.b16 %v2901, %v2900
      %v2907 = vpack.c.b16 %v2903, %v2902
      %2908 = vrot.lane.b32.xlu0 %v2904, 16
      %v2909 = vpop.permute.xlu0 %2908
      %2910 = vrot.lane.b32.xlu0 %v2905, 16
      %v2911 = vpop.permute.xlu0 %2910
      %2912 = vrot.lane.b32.xlu0 %v2906, 16
      %v2913 = vpop.permute.xlu0 %2912
      %2914 = vrot.lane.b32.xlu0 %v2907, 16
      %v2915 = vpop.permute.xlu0 %2914
      %v2924 = vunpack.c.l.b16 %v2487
      %v2925 = vunpack.c.l.b16 %v2488
      %v2926 = vunpack.c.l.b16 %v2489
      %v2927 = vunpack.c.l.b16 %v2490
      %v2928 = vunpack.c.l.b16 %v2491
      %v2929 = vunpack.c.l.b16 %v2492
      %v2930 = vunpack.c.l.b16 %v2493
      %v2931 = vunpack.c.l.b16 %v2494
      %v2932 = vpack.c.b16 %v2925, %v2924
      %v2933 = vpack.c.b16 %v2927, %v2926
      %v2934 = vpack.c.b16 %v2929, %v2928
      %v2935 = vpack.c.b16 %v2931, %v2930
      %2936 = vrot.lane.b32.xlu0 %v2932, 24
      %v2937 = vpop.permute.xlu0 %2936
      %2938 = vrot.lane.b32.xlu0 %v2933, 24
      %v2939 = vpop.permute.xlu0 %2938
      %2940 = vrot.lane.b32.xlu0 %v2934, 24
      %v2941 = vpop.permute.xlu0 %2940
      %2942 = vrot.lane.b32.xlu0 %v2935, 24
      %v2943 = vpop.permute.xlu0 %2942
      %v2944 = vunpack.c.l.b16 %v2516
      %v2945 = vunpack.c.l.b16 %v2530
      %v2946 = vunpack.c.l.b16 %v2544
      %v2947 = vunpack.c.l.b16 %v2558
      %v2948 = vunpack.c.l.b16 %v2572
      %v2949 = vunpack.c.l.b16 %v2586
      %v2950 = vunpack.c.l.b16 %v2600
      %v2951 = vunpack.c.l.b16 %v2614
      %v2952 = vpack.c.b16 %v2945, %v2944
      %v2953 = vpack.c.b16 %v2947, %v2946
      %v2954 = vpack.c.b16 %v2949, %v2948
      %v2955 = vpack.c.b16 %v2951, %v2950
      %2956 = vrot.lane.b32.xlu0 %v2952, 32
      %v2957 = vpop.permute.xlu0 %2956
      %2958 = vrot.lane.b32.xlu0 %v2953, 32
      %v2959 = vpop.permute.xlu0 %2958
      %2960 = vrot.lane.b32.xlu0 %v2954, 32
      %v2961 = vpop.permute.xlu0 %2960
      %2962 = vrot.lane.b32.xlu0 %v2955, 32
      %v2963 = vpop.permute.xlu0 %2962
      %v2964 = vunpack.c.l.b16 %v2642
      %v2965 = vunpack.c.l.b16 %v2646
      %v2966 = vunpack.c.l.b16 %v2650
      %v2967 = vunpack.c.l.b16 %v2654
      %v2968 = vunpack.c.l.b16 %v2658
      %v2969 = vunpack.c.l.b16 %v2662
      %v2970 = vunpack.c.l.b16 %v2666
      %v2971 = vunpack.c.l.b16 %v2670
      %v2972 = vpack.c.b16 %v2965, %v2964
      %v2973 = vpack.c.b16 %v2967, %v2966
      %v2974 = vpack.c.b16 %v2969, %v2968
      %v2975 = vpack.c.b16 %v2971, %v2970
      %2976 = vrot.lane.b32.xlu0 %v2972, 40
      %v2977 = vpop.permute.xlu0 %2976
      %2978 = vrot.lane.b32.xlu0 %v2973, 40
      %v2979 = vpop.permute.xlu0 %2978
      %2980 = vrot.lane.b32.xlu0 %v2974, 40
      %v2981 = vpop.permute.xlu0 %2980
      %2982 = vrot.lane.b32.xlu0 %v2975, 40
      %v2983 = vpop.permute.xlu0 %2982
      %v2992 = vunpack.c.l.b16 %v2672
      %v2993 = vunpack.c.l.b16 %v2673
      %v2994 = vunpack.c.l.b16 %v2674
      %v2995 = vunpack.c.l.b16 %v2675
      %v2996 = vunpack.c.l.b16 %v2676
      %v2997 = vunpack.c.l.b16 %v2677
      %v2998 = vunpack.c.l.b16 %v2678
      %v2999 = vunpack.c.l.b16 %v2679
      %v3000 = vpack.c.b16 %v2993, %v2992
      %v3001 = vpack.c.b16 %v2995, %v2994
      %v3002 = vpack.c.b16 %v2997, %v2996
      %v3003 = vpack.c.b16 %v2999, %v2998
      %3004 = vrot.lane.b32.xlu0 %v3000, 48
      %v3005 = vpop.permute.xlu0 %3004
      %3006 = vrot.lane.b32.xlu0 %v3001, 48
      %v3007 = vpop.permute.xlu0 %3006
      %3008 = vrot.lane.b32.xlu0 %v3002, 48
      %v3009 = vpop.permute.xlu0 %3008
      %3010 = vrot.lane.b32.xlu0 %v3003, 48
      %v3011 = vpop.permute.xlu0 %3010
      %v3012 = vunpack.c.l.b16 %v2701
      %v3013 = vunpack.c.l.b16 %v2715
      %v3014 = vunpack.c.l.b16 %v2729
      %v3015 = vunpack.c.l.b16 %v2743
      %v3016 = vunpack.c.l.b16 %v2757
      %v3017 = vunpack.c.l.b16 %v2771
      %v3018 = vunpack.c.l.b16 %v2785
      %v3019 = vunpack.c.l.b16 %v2799
      %v3020 = vpack.c.b16 %v3013, %v3012
      %v3021 = vpack.c.b16 %v3015, %v3014
      %v3022 = vpack.c.b16 %v3017, %v3016
      %v3023 = vpack.c.b16 %v3019, %v3018
      %3024 = vrot.lane.b32.xlu0 %v3020, 56
      %v3025 = vpop.permute.xlu0 %3024
      %3026 = vrot.lane.b32.xlu0 %v3021, 56
      %v3027 = vpop.permute.xlu0 %3026
      %3028 = vrot.lane.b32.xlu0 %v3022, 56
      %v3029 = vpop.permute.xlu0 %3028
      %3030 = vrot.lane.b32.xlu0 %v3023, 56
      %v3031 = vpop.permute.xlu0 %3030
      %v3032 = vunpack.c.l.b16 %v2827
      %v3033 = vunpack.c.l.b16 %v2831
      %v3034 = vunpack.c.l.b16 %v2835
      %v3035 = vunpack.c.l.b16 %v2839
      %v3036 = vunpack.c.l.b16 %v2843
      %v3037 = vunpack.c.l.b16 %v2847
      %v3038 = vunpack.c.l.b16 %v2851
      %v3039 = vunpack.c.l.b16 %v2855
      %v3040 = vpack.c.b16 %v3033, %v3032
      %v3041 = vpack.c.b16 %v3035, %v3034
      %v3042 = vpack.c.b16 %v3037, %v3036
      %v3043 = vpack.c.b16 %v3039, %v3038
      %3044 = vrot.lane.b32.xlu0 %v3040, 64
      %v3045 = vpop.permute.xlu0 %3044
      %3046 = vrot.lane.b32.xlu0 %v3041, 64
      %v3047 = vpop.permute.xlu0 %3046
      %3048 = vrot.lane.b32.xlu0 %v3042, 64
      %v3049 = vpop.permute.xlu0 %3048
      %3050 = vrot.lane.b32.xlu0 %v3043, 64
      %v3051 = vpop.permute.xlu0 %3050
      %v3054 = vsel %vm830, %v2872, %v2889
      %v3057 = vsel %vm830, %v2873, %v2891
      %v3060 = vsel %vm830, %v2874, %v2893
      %v3063 = vsel %vm830, %v2875, %v2895
      %v3065 = vsel %vm843, %v3054, %v2909
      %v3067 = vsel %vm843, %v3057, %v2911
      %v3069 = vsel %vm843, %v3060, %v2913
      %v3071 = vsel %vm843, %v3063, %v2915
      %v3073 = vsel %vm852, %v3065, %v2937
      %v3075 = vsel %vm852, %v3067, %v2939
      %v3077 = vsel %vm852, %v3069, %v2941
      %v3079 = vsel %vm852, %v3071, %v2943
      %v3081 = vsel %vm884, %v3073, %v2957
      %v3083 = vsel %vm884, %v3075, %v2959
      %v3085 = vsel %vm884, %v3077, %v2961
      %v3087 = vsel %vm884, %v3079, %v2963
      %v3089 = vsel %vm1956, %v3081, %v2977
      %v3091 = vsel %vm1956, %v3083, %v2979
      %v3093 = vsel %vm1956, %v3085, %v2981
      %v3095 = vsel %vm1956, %v3087, %v2983
      %v3097 = vsel %vm1965, %v3089, %v3005
      %v3099 = vsel %vm1965, %v3091, %v3007
      %v3101 = vsel %vm1965, %v3093, %v3009
      %v3103 = vsel %vm1965, %v3095, %v3011
      %v3105 = vsel %vm1974, %v3097, %v3025
      %v3107 = vsel %vm1974, %v3099, %v3027
      %v3109 = vsel %vm1974, %v3101, %v3029
      %v3111 = vsel %vm1974, %v3103, %v3031
      %v3113 = vsel %vm1983, %v3105, %v3045
      %v3115 = vsel %vm1983, %v3107, %v3047
      %v3117 = vsel %vm1983, %v3109, %v3049
      %v3119 = vsel %vm1983, %v3111, %v3051
      %v3120 = vld [vmem:[%s5] sm:$0xf]
      %v3121 = vld [vmem:[%s5 + $0x4] sm:$0xf]
      %v3122 = vld [vmem:[%s5 + $0x8] sm:$0xf]
      %v3123 = vld [vmem:[%s5 + $0xc] sm:$0xf]
      %v3124 = vld [vmem:[%s5 + $0x10] sm:$0xf]
      %v3125 = vld [vmem:[%s5 + $0x14] sm:$0xf]
      %v3126 = vld [vmem:[%s5 + $0x18] sm:$0xf]
      %v3127 = vld [vmem:[%s5 + $0x1c] sm:$0xf]
      %v3128 = vld [vmem:[%s5 + $0x20] sm:$0xf]
      %v3129 = vld [vmem:[%s1151] sm:$0xf]
      %v3130 = vld [vmem:[%s1151 + $0x4] sm:$0x1]
      %v3131 = vld [vmem:[%s1151 + $0x8] sm:$0xf]
      %v3132 = vld [vmem:[%s1151 + $0xc] sm:$0x1]
      %v3133 = vld [vmem:[%s1151 + $0x10] sm:$0xf]
      %v3134 = vld [vmem:[%s1151 + $0x14] sm:$0x1]
      %v3135 = vld [vmem:[%s1151 + $0x18] sm:$0xf]
      %v3136 = vld [vmem:[%s1151 + $0x1c] sm:$0x1]
      %v3137 = vld [vmem:[%s1151 + $0x20] sm:$0xf]
      %v3138 = vld [vmem:[%s1151 + $0x24] sm:$0x1]
      %v3139 = vld [vmem:[%s1151 + $0x28] sm:$0xf]
      %v3140 = vld [vmem:[%s1151 + $0x2c] sm:$0x1]
      %v3141 = vld [vmem:[%s1151 + $0x30] sm:$0xf]
      %v3142 = vld [vmem:[%s1151 + $0x34] sm:$0x1]
      %v3143 = vld [vmem:[%s1151 + $0x38] sm:$0xf]
      %v3144 = vld [vmem:[%s1151 + $0x3c] sm:$0x1]
      %v3146 = vshrl.u32 %v3129, 16
      %v3148 = vrot.slane %v3146, 4
      %v3149 = vshll.u32 %v3129, 16
      %v3151 = vrot.slane %v3149, 5
      %v3152 = vor.u32 %v3148, %v3151
      %v3153 = vrot.slane %v3152, 4
      %v3155 = vshll.u32 %v3130, 16
      %v3157 = vrot.slane %v3155, 5
      %v3158 = vsel %vm501, %v3153, %v3157
      %v3160 = vshrl.u32 %v3131, 16
      %v3162 = vrot.slane %v3160, 4
      %v3163 = vshll.u32 %v3131, 16
      %v3165 = vrot.slane %v3163, 5
      %v3166 = vor.u32 %v3162, %v3165
      %v3167 = vrot.slane %v3166, 4
      %v3169 = vshll.u32 %v3132, 16
      %v3171 = vrot.slane %v3169, 5
      %v3172 = vsel %vm501, %v3167, %v3171
      %v3174 = vshrl.u32 %v3133, 16
      %v3176 = vrot.slane %v3174, 4
      %v3177 = vshll.u32 %v3133, 16
      %v3179 = vrot.slane %v3177, 5
      %v3180 = vor.u32 %v3176, %v3179
      %v3181 = vrot.slane %v3180, 4
      %v3183 = vshll.u32 %v3134, 16
      %v3185 = vrot.slane %v3183, 5
      %v3186 = vsel %vm501, %v3181, %v3185
      %v3188 = vshrl.u32 %v3135, 16
      %v3190 = vrot.slane %v3188, 4
      %v3191 = vshll.u32 %v3135, 16
      %v3193 = vrot.slane %v3191, 5
      %v3194 = vor.u32 %v3190, %v3193
      %v3195 = vrot.slane %v3194, 4
      %v3197 = vshll.u32 %v3136, 16
      %v3199 = vrot.slane %v3197, 5
      %v3200 = vsel %vm501, %v3195, %v3199
      %v3202 = vshrl.u32 %v3137, 16
      %v3204 = vrot.slane %v3202, 4
      %v3205 = vshll.u32 %v3137, 16
      %v3207 = vrot.slane %v3205, 5
      %v3208 = vor.u32 %v3204, %v3207
      %v3209 = vrot.slane %v3208, 4
      %v3211 = vshll.u32 %v3138, 16
      %v3213 = vrot.slane %v3211, 5
      %v3214 = vsel %vm501, %v3209, %v3213
      %v3216 = vshrl.u32 %v3139, 16
      %v3218 = vrot.slane %v3216, 4
      %v3219 = vshll.u32 %v3139, 16
      %v3221 = vrot.slane %v3219, 5
      %v3222 = vor.u32 %v3218, %v3221
      %v3223 = vrot.slane %v3222, 4
      %v3225 = vshll.u32 %v3140, 16
      %v3227 = vrot.slane %v3225, 5
      %v3228 = vsel %vm501, %v3223, %v3227
      %v3230 = vshrl.u32 %v3141, 16
      %v3232 = vrot.slane %v3230, 4
      %v3233 = vshll.u32 %v3141, 16
      %v3235 = vrot.slane %v3233, 5
      %v3236 = vor.u32 %v3232, %v3235
      %v3237 = vrot.slane %v3236, 4
      %v3239 = vshll.u32 %v3142, 16
      %v3241 = vrot.slane %v3239, 5
      %v3242 = vsel %vm501, %v3237, %v3241
      %v3244 = vshrl.u32 %v3143, 16
      %v3246 = vrot.slane %v3244, 4
      %v3247 = vshll.u32 %v3143, 16
      %v3249 = vrot.slane %v3247, 5
      %v3250 = vor.u32 %v3246, %v3249
      %v3251 = vrot.slane %v3250, 4
      %v3253 = vshll.u32 %v3144, 16
      %v3255 = vrot.slane %v3253, 5
      %v3256 = vsel %vm501, %v3251, %v3255
      %v3265 = vunpack.c.l.bf16 %v3158
      %v3266 = vunpack.c.l.bf16 %v3172
      %v3267 = vunpack.c.l.bf16 %v3186
      %v3268 = vunpack.c.l.bf16 %v3200
      %v3269 = vunpack.c.l.bf16 %v3214
      %v3270 = vunpack.c.l.bf16 %v3228
      %v3271 = vunpack.c.l.bf16 %v3242
      %v3272 = vunpack.c.l.bf16 %v3256
      %v3273 = vld [vmem:[%s6] sm:$0x1]
      %v3275 = vlaneseq
      %v3276 = vshrl.u32 %v3275, 7
      %v3277 = vsub.s32 0, %v3276
      %v3278 = vrot.slane %v3273, %v3277
      %v3289 = vunpack.c.l.b16 %v3120
      %v3290 = vunpack.c.l.b16 %v3121
      %v3291 = vunpack.c.l.b16 %v3122
      %v3292 = vunpack.c.l.b16 %v3123
      %v3293 = vunpack.c.l.b16 %v3124
      %v3294 = vunpack.c.l.b16 %v3125
      %v3295 = vunpack.c.l.b16 %v3126
      %v3296 = vunpack.c.l.b16 %v3127
      %v3297 = vunpack.c.l.b16 %v3128
      %v3298 = vpack.c.b16 %v3290, %v3289
      %v3299 = vpack.c.b16 %v3292, %v3291
      %v3300 = vpack.c.b16 %v3294, %v3293
      %v3301 = vpack.c.b16 %v3296, %v3295
      %v3302 = vpack.c.b16 %v3297, %v3297
      %v3307 = vsel %vm2035, %v3113, 0
      %v3309 = vsel %vm2035, %v3115, 0
      %v3311 = vsel %vm2035, %v3117, 0
      %v3313 = vsel %vm2035, %v3119, 0
      %v3316 = vsel %vm2044, %v3302, 0
      %3318 = vmatprep.subr.bf16.mxu0 0
      %3319 = vmatpush1.bf16.msra.mxu0 %v3298
      %3320 = vmatprep.subr.bf16.mxu0 0
      %3321 = vmatpush1.bf16.msra.mxu0 %v3299
      %3322 = vmatprep.subr.bf16.mxu0 0
      %3323 = vmatpush1.bf16.msra.mxu0 %v3300
      %3324 = vmatprep.subr.bf16.mxu0 0
      %3325 = vmatpush1.bf16.msra.mxu0 %v3301
      %3326 = vmatprep.subr.bf16.mxu0 0
      %3327 = vmatpush1.bf16.msra.mxu0 %v3316
      %3328 = vmatprep.subr.bf16.mxu0 0
      %3329 = vmatpush1.bf16.msra.mxu0 0
      %3330 = vmatprep.subr.bf16.mxu0 0
      %3331 = vmatpush1.bf16.msra.mxu0 0
      %3332 = vmatprep.subr.bf16.mxu0 0
      %3333 = vmatpush1.bf16.msra.mxu0 0
      %3334 = vmatprep.subr.bf16.mxu0 0
      %3335 = vmatpush1.bf16.msra.mxu0 0
      %3336 = vmatprep.subr.bf16.mxu0 0
      %3337 = vmatpush1.bf16.msra.mxu0 0
      %3338 = vmatprep.subr.bf16.mxu0 0
      %3339 = vmatpush1.bf16.msra.mxu0 0
      %3340 = vmatprep.subr.bf16.mxu0 0
      %3341 = vmatpush1.bf16.msra.mxu0 0
      %3342 = vmatprep.subr.bf16.mxu0 0
      %3343 = vmatpush1.bf16.msra.mxu0 0
      %3344 = vmatprep.subr.bf16.mxu0 0
      %3345 = vmatpush1.bf16.msra.mxu0 0
      %3346 = vmatprep.subr.bf16.mxu0 0
      %3347 = vmatpush1.bf16.msra.mxu0 0
      %3348 = vmatprep.subr.bf16.mxu0 0
      %3349 = vmatpush1.bf16.msra.mxu0 0
      %3350 = vmatprep.mubr.bf16.mxu0 0
      %3351 = vmatmul.mubr.bf16.gmra.mrb[0].mxu0 %v3307
      %v3352 = vpop.f32.mrb[0].mxu0
      %v3353 = vadd.f32 %v3278, %v3352
      %v3354 = vpop.f32.mrb[0].mxu0
      %v3355 = vpop.f32.mrb[0].mxu0
      %v3356 = vadd.f32 %v3278, %v3355
      %v3357 = vpop.f32.mrb[0].mxu0
      %3358 = vmatprep.mubr.bf16.mxu0 0
      %3359 = vmatmul.mubr.bf16.gmra.mrb[0].mxu0 %v3309
      %v3360 = vpop.f32.mrb[0].mxu0
      %v3361 = vadd.f32 %v3278, %v3360
      %v3362 = vpop.f32.mrb[0].mxu0
      %v3363 = vpop.f32.mrb[0].mxu0
      %v3364 = vadd.f32 %v3278, %v3363
      %v3365 = vpop.f32.mrb[0].mxu0
      %3366 = vmatprep.mubr.bf16.mxu0 0
      %3367 = vmatmul.mubr.bf16.gmra.mrb[0].mxu0 %v3311
      %v3368 = vpop.f32.mrb[0].mxu0
      %v3369 = vadd.f32 %v3278, %v3368
      %v3370 = vpop.f32.mrb[0].mxu0
      %v3371 = vpop.f32.mrb[0].mxu0
      %v3372 = vadd.f32 %v3278, %v3371
      %v3373 = vpop.f32.mrb[0].mxu0
      %3374 = vmatprep.mubr.bf16.mxu0 0
      %3375 = vmatmul.mubr.bf16.gmra.mrb[0].mxu0 %v3313
      %v3376 = vpop.f32.mrb[0].mxu0
      %v3377 = vadd.f32 %v3278, %v3376
      %v3378 = vpop.f32.mrb[0].mxu0
      %v3379 = vpop.f32.mrb[0].mxu0
      %v3380 = vadd.f32 %v3278, %v3379
      %v3381 = vpop.f32.mrb[0].mxu0
      %3382 = vdwg.mxu0
      %v3383 = vadd.f32 %v3353, %v3265
      %v3384 = vadd.f32 %v3356, %v3266
      %v3385 = vadd.f32 %v3361, %v3267
      %v3386 = vadd.f32 %v3364, %v3268
      %v3387 = vadd.f32 %v3369, %v3269
      %v3388 = vadd.f32 %v3372, %v3270
      %v3389 = vadd.f32 %v3377, %v3271
      %v3390 = vadd.f32 %v3380, %v3272
      %v3391 = vmax.f32 %v3383, 0.0
      %v3392 = vmax.f32 %v3384, 0.0
      %v3393 = vmax.f32 %v3385, 0.0
      %v3394 = vmax.f32 %v3386, 0.0
      %v3395 = vmax.f32 %v3387, 0.0
      %v3396 = vmax.f32 %v3388, 0.0
      %v3397 = vmax.f32 %v3389, 0.0
      %v3398 = vmax.f32 %v3390, 0.0
      %v3399 = vpack.c.bf16 %v3392, %v3391
      %v3400 = vpack.c.bf16 %v3394, %v3393
      %v3401 = vpack.c.bf16 %v3396, %v3395
      %v3402 = vpack.c.bf16 %v3398, %v3397
      %v3407 = vunpack.c.l.b16 %v3399
      %v3408 = vunpack.c.h.b16 %v3399
      %v3409 = vunpack.c.l.b16 %v3400
      %v3410 = vunpack.c.h.b16 %v3400
      %v3411 = vunpack.c.l.b16 %v3401
      %v3412 = vunpack.c.h.b16 %v3401
      %v3413 = vunpack.c.l.b16 %v3402
      %v3414 = vunpack.c.h.b16 %v3402
      %v3415 = vpack.c.b16 %v3407, %v3407
      %v3416 = vpack.c.b16 %v3408, %v3408
      %v3417 = vpack.c.b16 %v3409, %v3409
      %v3418 = vpack.c.b16 %v3410, %v3410
      %v3419 = vpack.c.b16 %v3411, %v3411
      %v3420 = vpack.c.b16 %v3412, %v3412
      %v3421 = vpack.c.b16 %v3413, %v3413
      %v3422 = vpack.c.b16 %v3414, %v3414
      %3431 = vst.msk [vmem:[%s278] sm:$0xf] %vm288, %v3415
      %3432 = vst.msk [vmem:[%s278 + $0x4] sm:$0xf] %vm288, %v3416
      %3433 = vst.msk [vmem:[%s278 + $0x8] sm:$0xf] %vm288, %v3417
      %3434 = vst.msk [vmem:[%s278 + $0xc] sm:$0xf] %vm288, %v3418
      %3435 = vst.msk [vmem:[%s278 + $0x10] sm:$0xf] %vm288, %v3419
      %3436 = vst.msk [vmem:[%s278 + $0x14] sm:$0xf] %vm288, %v3420
      %3437 = vst.msk [vmem:[%s278 + $0x18] sm:$0xf] %vm288, %v3421
      %3438 = vst.msk [vmem:[%s278 + $0x1c] sm:$0xf] %vm288, %v3422
      %p3439 = scmp.lt.s32.totalorder %s18, 1
      %s3440 = scalar_select %p3439, %s18, 1
      %s3441 = smul.addr %s3440, 8
      %s3442 = smul.addr %s3441, 4
      %s3443 = scalar_lea.vmem %s7, %s3442
      // Predicated region
      $region49: #{_unnamed_function_.3} parent=47 // pred_check
        %p3444 = pneg %p188
      $region50: #{_unnamed_function_.3} parent=47 // pred_check_branch
        %3446 = sbr.rel (%p3444) target = $region52
      $region51: #{_unnamed_function_.3} parent=47 // pred_region
        _
      $region52: #{_unnamed_function_.3} parent=47 // pred_fallthru
        _
    $region48: #{_unnamed_function_.3} parent=5 // pred_fallthru
      _
    %p3447 = scmp.le.s32.totalorder 2, %s13
    // Predicated region
    $region53: #{_unnamed_function_.3} parent=5 // pred_check
      %p3448 = pneg %p3447
    $region54: #{_unnamed_function_.3} parent=5 // pred_check_branch
      %3450 = sbr.rel (%p3448) target = $region56
    $region55: #{_unnamed_function_.3} parent=5 // pred_region
      %s3451 = ssub.s32 %s13, 2
      // Predicated region
      $region57: #{_unnamed_function_.3} parent=55 // pred_check
        %p3452 = pneg %p194
      $region58: #{_unnamed_function_.3} parent=55 // pred_check_branch
        %3454 = sbr.rel (%p3452) target = $region60
      $region59: #{_unnamed_function_.3} parent=55 // pred_region
        %p3455 = scmp.lt.s32.totalorder %s19, 1
        %s3456 = scalar_select %p3455, %s19, 1
        %s3457 = smul.addr %s3456, 8
        %s3458 = smul.addr %s3457, 4
        %s3459 = scalar_lea.vmem %s7, %s3458
      $region60: #{_unnamed_function_.3} parent=55 // pred_fallthru
        _
    $region56: #{_unnamed_function_.3} parent=5 // pred_fallthru
      _
  $region6: #{_unnamed_function_.3} parent=0 // loop_footer
    %s17 = sadd.s32 1, %s13
  $region7: #{_unnamed_function_.3} parent=0 // loop_footer_branch
    %12 = sbr.rel target = $region3
  $region8: #{_unnamed_function_.3} parent=0 // loop_exit
    _

</llo_original>
